<compile_context>
chip_gen: v6e
topology: v6e:2x2x1
jax: 0.10.0
libtpu: 0.0.40
codegen_flags: <defaults>
</compile_context>

<pallas_src>
import jax
import jax.numpy as jnp
from jax import lax
from jax.experimental import pallas as pl
from jax.experimental.pallas import tpu as pltpu


# ------------------------------ fused encoder kernel ------------------------------
def _make_encoder_kernel(B, L, D, E, H, kernel_sizes, eps=1e-5):
    n_blocks = len(kernel_sizes)

    def kernel(*refs):
        x_ref, wpre_ref, bpre_ref = refs[0:3]
        block_refs = refs[3:3 + 4 * n_blocks]
        wih_ref, whh_ref, blstm_ref = refs[3 + 4 * n_blocks:6 + 4 * n_blocks]
        o_ref = refs[6 + 4 * n_blocks]

        # ---------------- prenet: Linear + ReLU over the whole (B*L, D) slab ----------------
        xall = jnp.concatenate([x_ref[b] for b in range(B)], axis=0)            # (B*L, D)
        y = jnp.dot(xall, wpre_ref[...], preferred_element_type=jnp.float32)
        y = jnp.maximum(y + bpre_ref[...], 0.0)                                 # (B*L, E)

        # ---------- residual blocks: im2col Conv1d(same) + ReLU + LayerNorm + residual ----------
        for bi, K in enumerate(kernel_sizes):
            w_ref, bconv_ref, g_ref, beta_ref = block_refs[4 * bi:4 * bi + 4]
            pad = (K - 1) // 2
            gamma = g_ref[...]                                                  # (L, E)
            beta = beta_ref[...]                                                # (L, E)

            # Build the im2col matrix for the whole batch: one big MXU matmul per block.
            cols_list = []
            for b in range(B):
                y_b = y[b * L:(b + 1) * L, :]                                   # (L, E)
                zeros = jnp.zeros((pad, E), jnp.float32)
                xpad = jnp.concatenate([zeros, y_b, zeros], axis=0)             # (L+K-1, E)
                cols_list.append(
                    jnp.concatenate([xpad[k:k + L, :] for k in range(K)], axis=-1))  # (L, K*E)
            cols = jnp.concatenate(cols_list, axis=0)                           # (B*L, K*E)

            conv = jnp.dot(cols, w_ref[...], preferred_element_type=jnp.float32)
            conv = jnp.maximum(conv + bconv_ref[...], 0.0)                      # (B*L, E)

            # LayerNorm over the full (E, L) slab of each sample.
            normed = []
            for b in range(B):
                c_b = conv[b * L:(b + 1) * L, :]                                # (L, E)
                mu = jnp.mean(c_b)
                var = jnp.mean((c_b - mu) ** 2)
                normed.append((c_b - mu) * lax.rsqrt(var + eps) * gamma + beta)
            # Dropout is identity in eval mode; residual add.
            y = jnp.concatenate(normed, axis=0) + y                             # (B*L, E)

        # ------------------------------ LSTM (single layer) ------------------------------
        # Input-to-hidden for all samples & timesteps in one matmul.
        gx = jnp.dot(y, wih_ref[...], preferred_element_type=jnp.float32) + blstm_ref[...]
        gxs = [gx[b * L:(b + 1) * L, :] for b in range(B)]                      # each (L, 4H)
        whh = whh_ref[...]                                                      # (H, 4H)

        h = jnp.zeros((B, H), jnp.float32)
        c = jnp.zeros((B, H), jnp.float32)
        outs = []
        for t in range(L):                                                      # static unroll
            g = jnp.concatenate([gxs[b][t:t + 1, :] for b in range(B)], axis=0)  # (B, 4H)
            g = g + jnp.dot(h, whh, preferred_element_type=jnp.float32)
            i = jax.nn.sigmoid(g[:, 0:H])
            f = jax.nn.sigmoid(g[:, H:2 * H])
            gg = jnp.tanh(g[:, 2 * H:3 * H])
            o = jax.nn.sigmoid(g[:, 3 * H:4 * H])
            c = f * c + i * gg
            h = o * jnp.tanh(c)
            outs.append(h)

        # Single bulk store per sample (only HBM write of the whole encoder).
        for b in range(B):
            o_ref[b] = jnp.concatenate([outs[t][b:b + 1, :] for t in range(L)], axis=0)

    return kernel


# ------------------------------------ full encoder ------------------------------------
def encoder_forward(x, w_pre, b_pre, blocks, w_ih, w_hh, b_ih, b_hh):
    B, L, D = x.shape
    E = w_pre.shape[1]
    H = w_hh.shape[1]
    kernel_sizes = [blk[0] for blk in blocks]

    block_args = []
    for (K, w_kee, b_conv, gamma_le, beta_le) in blocks:
        block_args += [w_kee.reshape(K * E, E),          # stacked im2col weight (K*E, E)
                       b_conv.reshape(1, E),
                       gamma_le, beta_le]

    args = ([x, w_pre, b_pre.reshape(1, E)]
            + block_args
            + [w_ih.T, w_hh.T, (b_ih + b_hh).reshape(1, 4 * H)])
    n_in = len(args)

    return pl.pallas_call(
        _make_encoder_kernel(B, L, D, E, H, kernel_sizes),
        out_shape=jax.ShapeDtypeStruct((B, L, H), jnp.float32),
        in_specs=[pl.BlockSpec(memory_space=pltpu.MemorySpace.VMEM)] * n_in,
        out_specs=pl.BlockSpec(memory_space=pltpu.MemorySpace.VMEM),
    )(*args)


# ------------------------------- pure-JAX reference -------------------------------
def encoder_ref(x, w_pre, b_pre, blocks, w_ih, w_hh, b_ih, b_hh):
    y = jnp.maximum(x @ w_pre + b_pre, 0.0)
    B, L, E = y.shape
    for (K, w, b, g, bt) in blocks:
        pad = (K - 1) // 2
        xp = jnp.pad(y, ((0, 0), (pad, pad), (0, 0)))
        conv = sum(jnp.einsum('ble,ef->blf', xp[:, k:k + L, :], w[k]) for k in range(K)) + b
        conv = jnp.maximum(conv, 0.0)
        mu = jnp.mean(conv, axis=(1, 2), keepdims=True)
        var = jnp.mean((conv - mu) ** 2, axis=(1, 2), keepdims=True)
        yn = (conv - mu) / jnp.sqrt(var + 1e-5) * g + bt
        y = yn + y
    H = w_hh.shape[1]
    gx = jnp.einsum('ble,he->blh', y, w_ih) + b_ih + b_hh

    def step(carry, g_t):
        h, c = carry
        gg = g_t + h @ w_hh.T
        i = jax.nn.sigmoid(gg[:, :H])
        f = jax.nn.sigmoid(gg[:, H:2 * H])
        ct = jnp.tanh(gg[:, 2 * H:3 * H])
        o = jax.nn.sigmoid(gg[:, 3 * H:])
        c = f * c + i * ct
        h = o * jnp.tanh(c)
        return (h, c), h

    h0 = jnp.zeros((B, H), jnp.float32)
    c0 = jnp.zeros((B, H), jnp.float32)
    _, hs = lax.scan(step, (h0, c0), jnp.swapaxes(gx, 0, 1))
    return jnp.swapaxes(hs, 0, 1)


if __name__ == "__main__":
    B, L, D, E, H = 2, 16, 12, 32, 16          # batch, seq_len, onehot, embedding, output_channels
    n_blocks = 1
    kernel_sizes = [7, 5, 3] * n_blocks

    keys = iter(jax.random.split(jax.random.PRNGKey(0), 64))
    nk = lambda: next(keys)

    # one-hot phoneme input
    x = jax.nn.one_hot(jax.random.randint(nk(), (B, L), 0, D), D, dtype=jnp.float32)

    # prenet params (already in (D, E) matmul layout == torch weight.T)
    w_pre = jax.random.normal(nk(), (D, E), jnp.float32) * 0.3
    b_pre = jax.random.normal(nk(), (E,), jnp.float32) * 0.1

    # residual blocks: conv weight torch layout (C_out, C_in, K) -> (K, C_in, C_out);
    # LayerNorm weight/bias torch layout (E, L) -> transposed to (L, E)
    blocks = []
    for K in kernel_sizes:
        w_torch = jax.random.normal(nk(), (E, E, K), jnp.float32) * (1.0 / (E * K) ** 0.5)
        b_conv = jax.random.normal(nk(), (E,), jnp.float32) * 0.1
        gamma_t = 1.0 + 0.1 * jax.random.normal(nk(), (E, L), jnp.float32)
        beta_t = 0.1 * jax.random.normal(nk(), (E, L), jnp.float32)
        blocks.append((K, jnp.transpose(w_torch, (2, 1, 0)), b_conv, gamma_t.T, beta_t.T))

    # LSTM params in torch layout: W_ih (4H, E), W_hh (4H, H), gate order [i, f, g, o]
    w_ih = jax.random.normal(nk(), (4 * H, E), jnp.float32) * 0.2
    w_hh = jax.random.normal(nk(), (4 * H, H), jnp.float32) * 0.2
    b_ih = jax.random.normal(nk(), (4 * H,), jnp.float32) * 0.1
    b_hh = jax.random.normal(nk(), (4 * H,), jnp.float32) * 0.1

    out = encoder_forward(x, w_pre, b_pre, blocks, w_ih, w_hh, b_ih, b_hh)
    jax.block_until_ready(out)

    ref = encoder_ref(x, w_pre, b_pre, blocks, w_ih, w_hh, b_ih, b_hh)
    assert out.shape == (B, L, H)
    assert jnp.allclose(out, ref, atol=1e-4, rtol=1e-4), float(jnp.max(jnp.abs(out - ref)))
    print("KERNEL_OK")
</pallas_src>

<mosaic_0001>
module attributes {stable_mosaic.version = 11 : i64} {
  func.func @kernel(%arg0: memref<2x16x12xf32, #tpu.memory_space<vmem>>, %arg1: memref<12x32xf32, #tpu.memory_space<vmem>>, %arg2: memref<1x32xf32, #tpu.memory_space<vmem>>, %arg3: memref<224x32xf32, #tpu.memory_space<vmem>>, %arg4: memref<1x32xf32, #tpu.memory_space<vmem>>, %arg5: memref<16x32xf32, #tpu.memory_space<vmem>>, %arg6: memref<16x32xf32, #tpu.memory_space<vmem>>, %arg7: memref<160x32xf32, #tpu.memory_space<vmem>>, %arg8: memref<1x32xf32, #tpu.memory_space<vmem>>, %arg9: memref<16x32xf32, #tpu.memory_space<vmem>>, %arg10: memref<16x32xf32, #tpu.memory_space<vmem>>, %arg11: memref<96x32xf32, #tpu.memory_space<vmem>>, %arg12: memref<1x32xf32, #tpu.memory_space<vmem>>, %arg13: memref<16x32xf32, #tpu.memory_space<vmem>>, %arg14: memref<16x32xf32, #tpu.memory_space<vmem>>, %arg15: memref<32x64xf32, #tpu.memory_space<vmem>>, %arg16: memref<16x64xf32, #tpu.memory_space<vmem>>, %arg17: memref<1x64xf32, #tpu.memory_space<vmem>>, %arg18: memref<2x16x16xf32, #tpu.memory_space<vmem>>) attributes {dimension_semantics = [], scalar_prefetch = 0 : i64, scratch_operands = 0 : i64, tpu.core_type = #tpu.core_type<tc>} {
    %c0 = arith.constant 0 : index
    %c0_0 = arith.constant 0 : index
    %c0_1 = arith.constant 0 : index
    %0 = vector.load %arg0[%c0, %c0_0, %c0_1] : memref<2x16x12xf32, #tpu.memory_space<vmem>>, vector<1x16x12xf32>
    %1 = vector.shape_cast %0 : vector<1x16x12xf32> to vector<16x12xf32>
    %c1 = arith.constant 1 : index
    %c0_2 = arith.constant 0 : index
    %c0_3 = arith.constant 0 : index
    %2 = vector.load %arg0[%c1, %c0_2, %c0_3] : memref<2x16x12xf32, #tpu.memory_space<vmem>>, vector<1x16x12xf32>
    %3 = vector.shape_cast %2 : vector<1x16x12xf32> to vector<16x12xf32>
    %4 = tpu.concatenate %1, %3 in 0 : vector<16x12xf32>, vector<16x12xf32> -> vector<32x12xf32>
    %c0_4 = arith.constant 0 : index
    %c0_5 = arith.constant 0 : index
    %5 = vector.load %arg1[%c0_4, %c0_5] : memref<12x32xf32, #tpu.memory_space<vmem>>, vector<12x32xf32>
    %cst = arith.constant dense<0.000000e+00> : vector<32x32xf32>
    %6 = tpu.matmul %4, %5, %cst {dimension_numbers = #tpu.dot_dimension_numbers<[1], [0], [0], [1], [0, 0, 1, 1], [], []>} : vector<32x12xf32>, vector<12x32xf32>, vector<32x32xf32> -> vector<32x32xf32>
    %c0_6 = arith.constant 0 : index
    %c0_7 = arith.constant 0 : index
    %7 = vector.load %arg2[%c0_6, %c0_7] : memref<1x32xf32, #tpu.memory_space<vmem>>, vector<1x32xf32>
    %8 = vector.broadcast %7 : vector<1x32xf32> to vector<32x32xf32>
    %9 = arith.addf %6, %8 : vector<32x32xf32>
    %cst_8 = arith.constant 0.000000e+00 : f32
    %10 = vector.broadcast %cst_8 : f32 to vector<32x32xf32>
    %11 = arith.maximumf %9, %10 : vector<32x32xf32>
    %c0_9 = arith.constant 0 : index
    %c0_10 = arith.constant 0 : index
    %12 = vector.load %arg5[%c0_9, %c0_10] : memref<16x32xf32, #tpu.memory_space<vmem>>, vector<16x32xf32>
    %c0_11 = arith.constant 0 : index
    %c0_12 = arith.constant 0 : index
    %13 = vector.load %arg6[%c0_11, %c0_12] : memref<16x32xf32, #tpu.memory_space<vmem>>, vector<16x32xf32>
    %14 = vector.extract_strided_slice %11 {offsets = [0, 0], sizes = [16, 32], strides = [1, 1]} : vector<32x32xf32> to vector<16x32xf32>
    %cst_13 = arith.constant 0.000000e+00 : f32
    %15 = vector.broadcast %cst_13 : f32 to vector<3x32xf32>
    %16 = tpu.concatenate %15, %14, %15 in 0 : vector<3x32xf32>, vector<16x32xf32>, vector<3x32xf32> -> vector<22x32xf32>
    %17 = vector.extract_strided_slice %16 {offsets = [0, 0], sizes = [16, 32], strides = [1, 1]} : vector<22x32xf32> to vector<16x32xf32>
    %18 = vector.extract_strided_slice %16 {offsets = [1, 0], sizes = [16, 32], strides = [1, 1]} : vector<22x32xf32> to vector<16x32xf32>
    %19 = vector.extract_strided_slice %16 {offsets = [2, 0], sizes = [16, 32], strides = [1, 1]} : vector<22x32xf32> to vector<16x32xf32>
    %20 = vector.extract_strided_slice %16 {offsets = [3, 0], sizes = [16, 32], strides = [1, 1]} : vector<22x32xf32> to vector<16x32xf32>
    %21 = vector.extract_strided_slice %16 {offsets = [4, 0], sizes = [16, 32], strides = [1, 1]} : vector<22x32xf32> to vector<16x32xf32>
    %22 = vector.extract_strided_slice %16 {offsets = [5, 0], sizes = [16, 32], strides = [1, 1]} : vector<22x32xf32> to vector<16x32xf32>
    %23 = vector.extract_strided_slice %16 {offsets = [6, 0], sizes = [16, 32], strides = [1, 1]} : vector<22x32xf32> to vector<16x32xf32>
    %24 = tpu.concatenate %17, %18, %19, %20, %21, %22, %23 in 1 : vector<16x32xf32>, vector<16x32xf32>, vector<16x32xf32>, vector<16x32xf32>, vector<16x32xf32>, vector<16x32xf32>, vector<16x32xf32> -> vector<16x224xf32>
    %25 = vector.extract_strided_slice %11 {offsets = [16, 0], sizes = [16, 32], strides = [1, 1]} : vector<32x32xf32> to vector<16x32xf32>
    %cst_14 = arith.constant 0.000000e+00 : f32
    %26 = vector.broadcast %cst_14 : f32 to vector<3x32xf32>
    %27 = tpu.concatenate %26, %25, %26 in 0 : vector<3x32xf32>, vector<16x32xf32>, vector<3x32xf32> -> vector<22x32xf32>
    %28 = vector.extract_strided_slice %27 {offsets = [0, 0], sizes = [16, 32], strides = [1, 1]} : vector<22x32xf32> to vector<16x32xf32>
    %29 = vector.extract_strided_slice %27 {offsets = [1, 0], sizes = [16, 32], strides = [1, 1]} : vector<22x32xf32> to vector<16x32xf32>
    %30 = vector.extract_strided_slice %27 {offsets = [2, 0], sizes = [16, 32], strides = [1, 1]} : vector<22x32xf32> to vector<16x32xf32>
    %31 = vector.extract_strided_slice %27 {offsets = [3, 0], sizes = [16, 32], strides = [1, 1]} : vector<22x32xf32> to vector<16x32xf32>
    %32 = vector.extract_strided_slice %27 {offsets = [4, 0], sizes = [16, 32], strides = [1, 1]} : vector<22x32xf32> to vector<16x32xf32>
    %33 = vector.extract_strided_slice %27 {offsets = [5, 0], sizes = [16, 32], strides = [1, 1]} : vector<22x32xf32> to vector<16x32xf32>
    %34 = vector.extract_strided_slice %27 {offsets = [6, 0], sizes = [16, 32], strides = [1, 1]} : vector<22x32xf32> to vector<16x32xf32>
    %35 = tpu.concatenate %28, %29, %30, %31, %32, %33, %34 in 1 : vector<16x32xf32>, vector<16x32xf32>, vector<16x32xf32>, vector<16x32xf32>, vector<16x32xf32>, vector<16x32xf32>, vector<16x32xf32> -> vector<16x224xf32>
    %36 = tpu.concatenate %24, %35 in 0 : vector<16x224xf32>, vector<16x224xf32> -> vector<32x224xf32>
    %c0_15 = arith.constant 0 : index
    %c0_16 = arith.constant 0 : index
    %37 = vector.load %arg3[%c0_15, %c0_16] : memref<224x32xf32, #tpu.memory_space<vmem>>, vector<224x32xf32>
    %cst_17 = arith.constant dense<0.000000e+00> : vector<32x32xf32>
    %38 = tpu.matmul %36, %37, %cst_17 {dimension_numbers = #tpu.dot_dimension_numbers<[1], [0], [0], [1], [0, 0, 1, 1], [], []>} : vector<32x224xf32>, vector<224x32xf32>, vector<32x32xf32> -> vector<32x32xf32>
    %c0_18 = arith.constant 0 : index
    %c0_19 = arith.constant 0 : index
    %39 = vector.load %arg4[%c0_18, %c0_19] : memref<1x32xf32, #tpu.memory_space<vmem>>, vector<1x32xf32>
    %40 = vector.broadcast %39 : vector<1x32xf32> to vector<32x32xf32>
    %41 = arith.addf %38, %40 : vector<32x32xf32>
    %cst_20 = arith.constant 0.000000e+00 : f32
    %42 = vector.broadcast %cst_20 : f32 to vector<32x32xf32>
    %43 = arith.maximumf %41, %42 : vector<32x32xf32>
    %44 = vector.extract_strided_slice %43 {offsets = [0, 0], sizes = [16, 32], strides = [1, 1]} : vector<32x32xf32> to vector<16x32xf32>
    %45 = vector.shape_cast %44 : vector<16x32xf32> to vector<1x16x32xf32>
    %cst_21 = arith.constant dense<0.000000e+00> : vector<1xf32>
    %46 = vector.multi_reduction <add>, %45, %cst_21 [1, 2] : vector<1x16x32xf32> to vector<1xf32>
    %47 = vector.shape_cast %46 : vector<1xf32> to vector<1x1x1xf32>
    %48 = vector.extract %47[0, 0, 0] : f32 from vector<1x1x1xf32>
    %cst_22 = arith.constant 5.120000e+02 : f32
    %49 = arith.divf %48, %cst_22 : f32
    %50 = vector.broadcast %49 : f32 to vector<16x32xf32>
    %51 = arith.subf %44, %50 : vector<16x32xf32>
    %52 = arith.mulf %51, %51 : vector<16x32xf32>
    %53 = vector.shape_cast %52 : vector<16x32xf32> to vector<1x16x32xf32>
    %cst_23 = arith.constant dense<0.000000e+00> : vector<1xf32>
    %54 = vector.multi_reduction <add>, %53, %cst_23 [1, 2] : vector<1x16x32xf32> to vector<1xf32>
    %55 = vector.shape_cast %54 : vector<1xf32> to vector<1x1x1xf32>
    %56 = vector.extract %55[0, 0, 0] : f32 from vector<1x1x1xf32>
    %cst_24 = arith.constant 5.120000e+02 : f32
    %57 = arith.divf %56, %cst_24 : f32
    %58 = vector.broadcast %49 : f32 to vector<16x32xf32>
    %59 = arith.subf %44, %58 : vector<16x32xf32>
    %cst_25 = arith.constant 9.99999974E-6 : f32
    %60 = arith.addf %57, %cst_25 : f32
    %61 = math.rsqrt %60 : f32
    %62 = vector.broadcast %61 : f32 to vector<16x32xf32>
    %63 = arith.mulf %59, %62 : vector<16x32xf32>
    %64 = arith.mulf %63, %12 : vector<16x32xf32>
    %65 = arith.addf %64, %13 : vector<16x32xf32>
    %66 = vector.extract_strided_slice %43 {offsets = [16, 0], sizes = [16, 32], strides = [1, 1]} : vector<32x32xf32> to vector<16x32xf32>
    %67 = vector.shape_cast %66 : vector<16x32xf32> to vector<1x16x32xf32>
    %cst_26 = arith.constant dense<0.000000e+00> : vector<1xf32>
    %68 = vector.multi_reduction <add>, %67, %cst_26 [1, 2] : vector<1x16x32xf32> to vector<1xf32>
    %69 = vector.shape_cast %68 : vector<1xf32> to vector<1x1x1xf32>
    %70 = vector.extract %69[0, 0, 0] : f32 from vector<1x1x1xf32>
    %cst_27 = arith.constant 5.120000e+02 : f32
    %71 = arith.divf %70, %cst_27 : f32
    %72 = vector.broadcast %71 : f32 to vector<16x32xf32>
    %73 = arith.subf %66, %72 : vector<16x32xf32>
    %74 = arith.mulf %73, %73 : vector<16x32xf32>
    %75 = vector.shape_cast %74 : vector<16x32xf32> to vector<1x16x32xf32>
    %cst_28 = arith.constant dense<0.000000e+00> : vector<1xf32>
    %76 = vector.multi_reduction <add>, %75, %cst_28 [1, 2] : vector<1x16x32xf32> to vector<1xf32>
    %77 = vector.shape_cast %76 : vector<1xf32> to vector<1x1x1xf32>
    %78 = vector.extract %77[0, 0, 0] : f32 from vector<1x1x1xf32>
    %cst_29 = arith.constant 5.120000e+02 : f32
    %79 = arith.divf %78, %cst_29 : f32
    %80 = vector.broadcast %71 : f32 to vector<16x32xf32>
    %81 = arith.subf %66, %80 : vector<16x32xf32>
    %cst_30 = arith.constant 9.99999974E-6 : f32
    %82 = arith.addf %79, %cst_30 : f32
    %83 = math.rsqrt %82 : f32
    %84 = vector.broadcast %83 : f32 to vector<16x32xf32>
    %85 = arith.mulf %81, %84 : vector<16x32xf32>
    %86 = arith.mulf %85, %12 : vector<16x32xf32>
    %87 = arith.addf %86, %13 : vector<16x32xf32>
    %88 = tpu.concatenate %65, %87 in 0 : vector<16x32xf32>, vector<16x32xf32> -> vector<32x32xf32>
    %89 = arith.addf %88, %11 : vector<32x32xf32>
    %c0_31 = arith.constant 0 : index
    %c0_32 = arith.constant 0 : index
    %90 = vector.load %arg9[%c0_31, %c0_32] : memref<16x32xf32, #tpu.memory_space<vmem>>, vector<16x32xf32>
    %c0_33 = arith.constant 0 : index
    %c0_34 = arith.constant 0 : index
    %91 = vector.load %arg10[%c0_33, %c0_34] : memref<16x32xf32, #tpu.memory_space<vmem>>, vector<16x32xf32>
    %92 = vector.extract_strided_slice %89 {offsets = [0, 0], sizes = [16, 32], strides = [1, 1]} : vector<32x32xf32> to vector<16x32xf32>
    %cst_35 = arith.constant 0.000000e+00 : f32
    %93 = vector.broadcast %cst_35 : f32 to vector<2x32xf32>
    %94 = tpu.concatenate %93, %92, %93 in 0 : vector<2x32xf32>, vector<16x32xf32>, vector<2x32xf32> -> vector<20x32xf32>
    %95 = vector.extract_strided_slice %94 {offsets = [0, 0], sizes = [16, 32], strides = [1, 1]} : vector<20x32xf32> to vector<16x32xf32>
    %96 = vector.extract_strided_slice %94 {offsets = [1, 0], sizes = [16, 32], strides = [1, 1]} : vector<20x32xf32> to vector<16x32xf32>
    %97 = vector.extract_strided_slice %94 {offsets = [2, 0], sizes = [16, 32], strides = [1, 1]} : vector<20x32xf32> to vector<16x32xf32>
    %98 = vector.extract_strided_slice %94 {offsets = [3, 0], sizes = [16, 32], strides = [1, 1]} : vector<20x32xf32> to vector<16x32xf32>
    %99 = vector.extract_strided_slice %94 {offsets = [4, 0], sizes = [16, 32], strides = [1, 1]} : vector<20x32xf32> to vector<16x32xf32>
    %100 = tpu.concatenate %95, %96, %97, %98, %99 in 1 : vector<16x32xf32>, vector<16x32xf32>, vector<16x32xf32>, vector<16x32xf32>, vector<16x32xf32> -> vector<16x160xf32>
    %101 = vector.extract_strided_slice %89 {offsets = [16, 0], sizes = [16, 32], strides = [1, 1]} : vector<32x32xf32> to vector<16x32xf32>
    %cst_36 = arith.constant 0.000000e+00 : f32
    %102 = vector.broadcast %cst_36 : f32 to vector<2x32xf32>
    %103 = tpu.concatenate %102, %101, %102 in 0 : vector<2x32xf32>, vector<16x32xf32>, vector<2x32xf32> -> vector<20x32xf32>
    %104 = vector.extract_strided_slice %103 {offsets = [0, 0], sizes = [16, 32], strides = [1, 1]} : vector<20x32xf32> to vector<16x32xf32>
    %105 = vector.extract_strided_slice %103 {offsets = [1, 0], sizes = [16, 32], strides = [1, 1]} : vector<20x32xf32> to vector<16x32xf32>
    %106 = vector.extract_strided_slice %103 {offsets = [2, 0], sizes = [16, 32], strides = [1, 1]} : vector<20x32xf32> to vector<16x32xf32>
    %107 = vector.extract_strided_slice %103 {offsets = [3, 0], sizes = [16, 32], strides = [1, 1]} : vector<20x32xf32> to vector<16x32xf32>
    %108 = vector.extract_strided_slice %103 {offsets = [4, 0], sizes = [16, 32], strides = [1, 1]} : vector<20x32xf32> to vector<16x32xf32>
    %109 = tpu.concatenate %104, %105, %106, %107, %108 in 1 : vector<16x32xf32>, vector<16x32xf32>, vector<16x32xf32>, vector<16x32xf32>, vector<16x32xf32> -> vector<16x160xf32>
    %110 = tpu.concatenate %100, %109 in 0 : vector<16x160xf32>, vector<16x160xf32> -> vector<32x160xf32>
    %c0_37 = arith.constant 0 : index
    %c0_38 = arith.constant 0 : index
    %111 = vector.load %arg7[%c0_37, %c0_38] : memref<160x32xf32, #tpu.memory_space<vmem>>, vector<160x32xf32>
    %cst_39 = arith.constant dense<0.000000e+00> : vector<32x32xf32>
    %112 = tpu.matmul %110, %111, %cst_39 {dimension_numbers = #tpu.dot_dimension_numbers<[1], [0], [0], [1], [0, 0, 1, 1], [], []>} : vector<32x160xf32>, vector<160x32xf32>, vector<32x32xf32> -> vector<32x32xf32>
    %c0_40 = arith.constant 0 : index
    %c0_41 = arith.constant 0 : index
    %113 = vector.load %arg8[%c0_40, %c0_41] : memref<1x32xf32, #tpu.memory_space<vmem>>, vector<1x32xf32>
    %114 = vector.broadcast %113 : vector<1x32xf32> to vector<32x32xf32>
    %115 = arith.addf %112, %114 : vector<32x32xf32>
    %cst_42 = arith.constant 0.000000e+00 : f32
    %116 = vector.broadcast %cst_42 : f32 to vector<32x32xf32>
    %117 = arith.maximumf %115, %116 : vector<32x32xf32>
    %118 = vector.extract_strided_slice %117 {offsets = [0, 0], sizes = [16, 32], strides = [1, 1]} : vector<32x32xf32> to vector<16x32xf32>
    %119 = vector.shape_cast %118 : vector<16x32xf32> to vector<1x16x32xf32>
    %cst_43 = arith.constant dense<0.000000e+00> : vector<1xf32>
    %120 = vector.multi_reduction <add>, %119, %cst_43 [1, 2] : vector<1x16x32xf32> to vector<1xf32>
    %121 = vector.shape_cast %120 : vector<1xf32> to vector<1x1x1xf32>
    %122 = vector.extract %121[0, 0, 0] : f32 from vector<1x1x1xf32>
    %cst_44 = arith.constant 5.120000e+02 : f32
    %123 = arith.divf %122, %cst_44 : f32
    %124 = vector.broadcast %123 : f32 to vector<16x32xf32>
    %125 = arith.subf %118, %124 : vector<16x32xf32>
    %126 = arith.mulf %125, %125 : vector<16x32xf32>
    %127 = vector.shape_cast %126 : vector<16x32xf32> to vector<1x16x32xf32>
    %cst_45 = arith.constant dense<0.000000e+00> : vector<1xf32>
    %128 = vector.multi_reduction <add>, %127, %cst_45 [1, 2] : vector<1x16x32xf32> to vector<1xf32>
    %129 = vector.shape_cast %128 : vector<1xf32> to vector<1x1x1xf32>
    %130 = vector.extract %129[0, 0, 0] : f32 from vector<1x1x1xf32>
    %cst_46 = arith.constant 5.120000e+02 : f32
    %131 = arith.divf %130, %cst_46 : f32
    %132 = vector.broadcast %123 : f32 to vector<16x32xf32>
    %133 = arith.subf %118, %132 : vector<16x32xf32>
    %cst_47 = arith.constant 9.99999974E-6 : f32
    %134 = arith.addf %131, %cst_47 : f32
    %135 = math.rsqrt %134 : f32
    %136 = vector.broadcast %135 : f32 to vector<16x32xf32>
    %137 = arith.mulf %133, %136 : vector<16x32xf32>
    %138 = arith.mulf %137, %90 : vector<16x32xf32>
    %139 = arith.addf %138, %91 : vector<16x32xf32>
    %140 = vector.extract_strided_slice %117 {offsets = [16, 0], sizes = [16, 32], strides = [1, 1]} : vector<32x32xf32> to vector<16x32xf32>
    %141 = vector.shape_cast %140 : vector<16x32xf32> to vector<1x16x32xf32>
    %cst_48 = arith.constant dense<0.000000e+00> : vector<1xf32>
    %142 = vector.multi_reduction <add>, %141, %cst_48 [1, 2] : vector<1x16x32xf32> to vector<1xf32>
    %143 = vector.shape_cast %142 : vector<1xf32> to vector<1x1x1xf32>
    %144 = vector.extract %143[0, 0, 0] : f32 from vector<1x1x1xf32>
    %cst_49 = arith.constant 5.120000e+02 : f32
    %145 = arith.divf %144, %cst_49 : f32
    %146 = vector.broadcast %145 : f32 to vector<16x32xf32>
    %147 = arith.subf %140, %146 : vector<16x32xf32>
    %148 = arith.mulf %147, %147 : vector<16x32xf32>
    %149 = vector.shape_cast %148 : vector<16x32xf32> to vector<1x16x32xf32>
    %cst_50 = arith.constant dense<0.000000e+00> : vector<1xf32>
    %150 = vector.multi_reduction <add>, %149, %cst_50 [1, 2] : vector<1x16x32xf32> to vector<1xf32>
    %151 = vector.shape_cast %150 : vector<1xf32> to vector<1x1x1xf32>
    %152 = vector.extract %151[0, 0, 0] : f32 from vector<1x1x1xf32>
    %cst_51 = arith.constant 5.120000e+02 : f32
    %153 = arith.divf %152, %cst_51 : f32
    %154 = vector.broadcast %145 : f32 to vector<16x32xf32>
    %155 = arith.subf %140, %154 : vector<16x32xf32>
    %cst_52 = arith.constant 9.99999974E-6 : f32
    %156 = arith.addf %153, %cst_52 : f32
    %157 = math.rsqrt %156 : f32
    %158 = vector.broadcast %157 : f32 to vector<16x32xf32>
    %159 = arith.mulf %155, %158 : vector<16x32xf32>
    %160 = arith.mulf %159, %90 : vector<16x32xf32>
    %161 = arith.addf %160, %91 : vector<16x32xf32>
    %162 = tpu.concatenate %139, %161 in 0 : vector<16x32xf32>, vector<16x32xf32> -> vector<32x32xf32>
    %163 = arith.addf %162, %89 : vector<32x32xf32>
    %c0_53 = arith.constant 0 : index
    %c0_54 = arith.constant 0 : index
    %164 = vector.load %arg13[%c0_53, %c0_54] : memref<16x32xf32, #tpu.memory_space<vmem>>, vector<16x32xf32>
    %c0_55 = arith.constant 0 : index
    %c0_56 = arith.constant 0 : index
    %165 = vector.load %arg14[%c0_55, %c0_56] : memref<16x32xf32, #tpu.memory_space<vmem>>, vector<16x32xf32>
    %166 = vector.extract_strided_slice %163 {offsets = [0, 0], sizes = [16, 32], strides = [1, 1]} : vector<32x32xf32> to vector<16x32xf32>
    %cst_57 = arith.constant 0.000000e+00 : f32
    %167 = vector.broadcast %cst_57 : f32 to vector<1x32xf32>
    %168 = tpu.concatenate %167, %166, %167 in 0 : vector<1x32xf32>, vector<16x32xf32>, vector<1x32xf32> -> vector<18x32xf32>
    %169 = vector.extract_strided_slice %168 {offsets = [0, 0], sizes = [16, 32], strides = [1, 1]} : vector<18x32xf32> to vector<16x32xf32>
    %170 = vector.extract_strided_slice %168 {offsets = [1, 0], sizes = [16, 32], strides = [1, 1]} : vector<18x32xf32> to vector<16x32xf32>
    %171 = vector.extract_strided_slice %168 {offsets = [2, 0], sizes = [16, 32], strides = [1, 1]} : vector<18x32xf32> to vector<16x32xf32>
    %172 = tpu.concatenate %169, %170, %171 in 1 : vector<16x32xf32>, vector<16x32xf32>, vector<16x32xf32> -> vector<16x96xf32>
    %173 = vector.extract_strided_slice %163 {offsets = [16, 0], sizes = [16, 32], strides = [1, 1]} : vector<32x32xf32> to vector<16x32xf32>
    %cst_58 = arith.constant 0.000000e+00 : f32
    %174 = vector.broadcast %cst_58 : f32 to vector<1x32xf32>
    %175 = tpu.concatenate %174, %173, %174 in 0 : vector<1x32xf32>, vector<16x32xf32>, vector<1x32xf32> -> vector<18x32xf32>
    %176 = vector.extract_strided_slice %175 {offsets = [0, 0], sizes = [16, 32], strides = [1, 1]} : vector<18x32xf32> to vector<16x32xf32>
    %177 = vector.extract_strided_slice %175 {offsets = [1, 0], sizes = [16, 32], strides = [1, 1]} : vector<18x32xf32> to vector<16x32xf32>
    %178 = vector.extract_strided_slice %175 {offsets = [2, 0], sizes = [16, 32], strides = [1, 1]} : vector<18x32xf32> to vector<16x32xf32>
    %179 = tpu.concatenate %176, %177, %178 in 1 : vector<16x32xf32>, vector<16x32xf32>, vector<16x32xf32> -> vector<16x96xf32>
    %180 = tpu.concatenate %172, %179 in 0 : vector<16x96xf32>, vector<16x96xf32> -> vector<32x96xf32>
    %c0_59 = arith.constant 0 : index
    %c0_60 = arith.constant 0 : index
    %181 = vector.load %arg11[%c0_59, %c0_60] : memref<96x32xf32, #tpu.memory_space<vmem>>, vector<96x32xf32>
    %cst_61 = arith.constant dense<0.000000e+00> : vector<32x32xf32>
    %182 = tpu.matmul %180, %181, %cst_61 {dimension_numbers = #tpu.dot_dimension_numbers<[1], [0], [0], [1], [0, 0, 1, 1], [], []>} : vector<32x96xf32>, vector<96x32xf32>, vector<32x32xf32> -> vector<32x32xf32>
    %c0_62 = arith.constant 0 : index
    %c0_63 = arith.constant 0 : index
    %183 = vector.load %arg12[%c0_62, %c0_63] : memref<1x32xf32, #tpu.memory_space<vmem>>, vector<1x32xf32>
    %184 = vector.broadcast %183 : vector<1x32xf32> to vector<32x32xf32>
    %185 = arith.addf %182, %184 : vector<32x32xf32>
    %cst_64 = arith.constant 0.000000e+00 : f32
    %186 = vector.broadcast %cst_64 : f32 to vector<32x32xf32>
    %187 = arith.maximumf %185, %186 : vector<32x32xf32>
    %188 = vector.extract_strided_slice %187 {offsets = [0, 0], sizes = [16, 32], strides = [1, 1]} : vector<32x32xf32> to vector<16x32xf32>
    %189 = vector.shape_cast %188 : vector<16x32xf32> to vector<1x16x32xf32>
    %cst_65 = arith.constant dense<0.000000e+00> : vector<1xf32>
    %190 = vector.multi_reduction <add>, %189, %cst_65 [1, 2] : vector<1x16x32xf32> to vector<1xf32>
    %191 = vector.shape_cast %190 : vector<1xf32> to vector<1x1x1xf32>
    %192 = vector.extract %191[0, 0, 0] : f32 from vector<1x1x1xf32>
    %cst_66 = arith.constant 5.120000e+02 : f32
    %193 = arith.divf %192, %cst_66 : f32
    %194 = vector.broadcast %193 : f32 to vector<16x32xf32>
    %195 = arith.subf %188, %194 : vector<16x32xf32>
    %196 = arith.mulf %195, %195 : vector<16x32xf32>
    %197 = vector.shape_cast %196 : vector<16x32xf32> to vector<1x16x32xf32>
    %cst_67 = arith.constant dense<0.000000e+00> : vector<1xf32>
    %198 = vector.multi_reduction <add>, %197, %cst_67 [1, 2] : vector<1x16x32xf32> to vector<1xf32>
    %199 = vector.shape_cast %198 : vector<1xf32> to vector<1x1x1xf32>
    %200 = vector.extract %199[0, 0, 0] : f32 from vector<1x1x1xf32>
    %cst_68 = arith.constant 5.120000e+02 : f32
    %201 = arith.divf %200, %cst_68 : f32
    %202 = vector.broadcast %193 : f32 to vector<16x32xf32>
    %203 = arith.subf %188, %202 : vector<16x32xf32>
    %cst_69 = arith.constant 9.99999974E-6 : f32
    %204 = arith.addf %201, %cst_69 : f32
    %205 = math.rsqrt %204 : f32
    %206 = vector.broadcast %205 : f32 to vector<16x32xf32>
    %207 = arith.mulf %203, %206 : vector<16x32xf32>
    %208 = arith.mulf %207, %164 : vector<16x32xf32>
    %209 = arith.addf %208, %165 : vector<16x32xf32>
    %210 = vector.extract_strided_slice %187 {offsets = [16, 0], sizes = [16, 32], strides = [1, 1]} : vector<32x32xf32> to vector<16x32xf32>
    %211 = vector.shape_cast %210 : vector<16x32xf32> to vector<1x16x32xf32>
    %cst_70 = arith.constant dense<0.000000e+00> : vector<1xf32>
    %212 = vector.multi_reduction <add>, %211, %cst_70 [1, 2] : vector<1x16x32xf32> to vector<1xf32>
    %213 = vector.shape_cast %212 : vector<1xf32> to vector<1x1x1xf32>
    %214 = vector.extract %213[0, 0, 0] : f32 from vector<1x1x1xf32>
    %cst_71 = arith.constant 5.120000e+02 : f32
    %215 = arith.divf %214, %cst_71 : f32
    %216 = vector.broadcast %215 : f32 to vector<16x32xf32>
    %217 = arith.subf %210, %216 : vector<16x32xf32>
    %218 = arith.mulf %217, %217 : vector<16x32xf32>
    %219 = vector.shape_cast %218 : vector<16x32xf32> to vector<1x16x32xf32>
    %cst_72 = arith.constant dense<0.000000e+00> : vector<1xf32>
    %220 = vector.multi_reduction <add>, %219, %cst_72 [1, 2] : vector<1x16x32xf32> to vector<1xf32>
    %221 = vector.shape_cast %220 : vector<1xf32> to vector<1x1x1xf32>
    %222 = vector.extract %221[0, 0, 0] : f32 from vector<1x1x1xf32>
    %cst_73 = arith.constant 5.120000e+02 : f32
    %223 = arith.divf %222, %cst_73 : f32
    %224 = vector.broadcast %215 : f32 to vector<16x32xf32>
    %225 = arith.subf %210, %224 : vector<16x32xf32>
    %cst_74 = arith.constant 9.99999974E-6 : f32
    %226 = arith.addf %223, %cst_74 : f32
    %227 = math.rsqrt %226 : f32
    %228 = vector.broadcast %227 : f32 to vector<16x32xf32>
    %229 = arith.mulf %225, %228 : vector<16x32xf32>
    %230 = arith.mulf %229, %164 : vector<16x32xf32>
    %231 = arith.addf %230, %165 : vector<16x32xf32>
    %232 = tpu.concatenate %209, %231 in 0 : vector<16x32xf32>, vector<16x32xf32> -> vector<32x32xf32>
    %233 = arith.addf %232, %163 : vector<32x32xf32>
    %c0_75 = arith.constant 0 : index
    %c0_76 = arith.constant 0 : index
    %234 = vector.load %arg15[%c0_75, %c0_76] : memref<32x64xf32, #tpu.memory_space<vmem>>, vector<32x64xf32>
    %cst_77 = arith.constant dense<0.000000e+00> : vector<32x64xf32>
    %235 = tpu.matmul %233, %234, %cst_77 {dimension_numbers = #tpu.dot_dimension_numbers<[1], [0], [0], [1], [0, 0, 1, 1], [], []>} : vector<32x32xf32>, vector<32x64xf32>, vector<32x64xf32> -> vector<32x64xf32>
    %c0_78 = arith.constant 0 : index
    %c0_79 = arith.constant 0 : index
    %236 = vector.load %arg17[%c0_78, %c0_79] : memref<1x64xf32, #tpu.memory_space<vmem>>, vector<1x64xf32>
    %237 = vector.broadcast %236 : vector<1x64xf32> to vector<32x64xf32>
    %238 = arith.addf %235, %237 : vector<32x64xf32>
    %239 = vector.extract_strided_slice %238 {offsets = [0, 0], sizes = [16, 64], strides = [1, 1]} : vector<32x64xf32> to vector<16x64xf32>
    %240 = vector.extract_strided_slice %238 {offsets = [16, 0], sizes = [16, 64], strides = [1, 1]} : vector<32x64xf32> to vector<16x64xf32>
    %c0_80 = arith.constant 0 : index
    %c0_81 = arith.constant 0 : index
    %241 = vector.load %arg16[%c0_80, %c0_81] : memref<16x64xf32, #tpu.memory_space<vmem>>, vector<16x64xf32>
    %cst_82 = arith.constant 0.000000e+00 : f32
    %242 = vector.broadcast %cst_82 : f32 to vector<2x16xf32>
    %cst_83 = arith.constant 0.000000e+00 : f32
    %243 = vector.broadcast %cst_83 : f32 to vector<2x16xf32>
    %244 = vector.extract_strided_slice %239 {offsets = [0, 0], sizes = [1, 64], strides = [1, 1]} : vector<16x64xf32> to vector<1x64xf32>
    %245 = vector.extract_strided_slice %240 {offsets = [0, 0], sizes = [1, 64], strides = [1, 1]} : vector<16x64xf32> to vector<1x64xf32>
    %246 = tpu.concatenate %244, %245 in 0 : vector<1x64xf32>, vector<1x64xf32> -> vector<2x64xf32>
    %cst_84 = arith.constant dense<0.000000e+00> : vector<2x64xf32>
    %247 = tpu.matmul %242, %241, %cst_84 {dimension_numbers = #tpu.dot_dimension_numbers<[1], [0], [0], [1], [0, 0, 1, 1], [], []>} : vector<2x16xf32>, vector<16x64xf32>, vector<2x64xf32> -> vector<2x64xf32>
    %248 = arith.addf %246, %247 : vector<2x64xf32>
    %249 = vector.extract_strided_slice %248 {offsets = [0, 0], sizes = [2, 16], strides = [1, 1]} : vector<2x64xf32> to vector<2x16xf32>
    %250 = arith.negf %249 : vector<2x16xf32>
    %251 = math.exp %250 : vector<2x16xf32>
    %cst_85 = arith.constant 1.000000e+00 : f32
    %252 = vector.broadcast %cst_85 : f32 to vector<2x16xf32>
    %253 = arith.addf %252, %251 : vector<2x16xf32>
    %254 = arith.divf %252, %253 : vector<2x16xf32>
    %255 = vector.extract_strided_slice %248 {offsets = [0, 16], sizes = [2, 16], strides = [1, 1]} : vector<2x64xf32> to vector<2x16xf32>
    %256 = arith.negf %255 : vector<2x16xf32>
    %257 = math.exp %256 : vector<2x16xf32>
    %cst_86 = arith.constant 1.000000e+00 : f32
    %258 = vector.broadcast %cst_86 : f32 to vector<2x16xf32>
    %259 = arith.addf %258, %257 : vector<2x16xf32>
    %260 = arith.divf %258, %259 : vector<2x16xf32>
    %261 = vector.extract_strided_slice %248 {offsets = [0, 32], sizes = [2, 16], strides = [1, 1]} : vector<2x64xf32> to vector<2x16xf32>
    %262 = math.tanh %261 : vector<2x16xf32>
    %263 = vector.extract_strided_slice %248 {offsets = [0, 48], sizes = [2, 16], strides = [1, 1]} : vector<2x64xf32> to vector<2x16xf32>
    %264 = arith.negf %263 : vector<2x16xf32>
    %265 = math.exp %264 : vector<2x16xf32>
    %cst_87 = arith.constant 1.000000e+00 : f32
    %266 = vector.broadcast %cst_87 : f32 to vector<2x16xf32>
    %267 = arith.addf %266, %265 : vector<2x16xf32>
    %268 = arith.divf %266, %267 : vector<2x16xf32>
    %269 = arith.mulf %260, %243 : vector<2x16xf32>
    %270 = arith.mulf %254, %262 : vector<2x16xf32>
    %271 = arith.addf %269, %270 : vector<2x16xf32>
    %272 = math.tanh %271 : vector<2x16xf32>
    %273 = arith.mulf %268, %272 : vector<2x16xf32>
    %274 = vector.extract_strided_slice %239 {offsets = [1, 0], sizes = [1, 64], strides = [1, 1]} : vector<16x64xf32> to vector<1x64xf32>
    %275 = vector.extract_strided_slice %240 {offsets = [1, 0], sizes = [1, 64], strides = [1, 1]} : vector<16x64xf32> to vector<1x64xf32>
    %276 = tpu.concatenate %274, %275 in 0 : vector<1x64xf32>, vector<1x64xf32> -> vector<2x64xf32>
    %cst_88 = arith.constant dense<0.000000e+00> : vector<2x64xf32>
    %277 = tpu.matmul %273, %241, %cst_88 {dimension_numbers = #tpu.dot_dimension_numbers<[1], [0], [0], [1], [0, 0, 1, 1], [], []>} : vector<2x16xf32>, vector<16x64xf32>, vector<2x64xf32> -> vector<2x64xf32>
    %278 = arith.addf %276, %277 : vector<2x64xf32>
    %279 = vector.extract_strided_slice %278 {offsets = [0, 0], sizes = [2, 16], strides = [1, 1]} : vector<2x64xf32> to vector<2x16xf32>
    %280 = arith.negf %279 : vector<2x16xf32>
    %281 = math.exp %280 : vector<2x16xf32>
    %cst_89 = arith.constant 1.000000e+00 : f32
    %282 = vector.broadcast %cst_89 : f32 to vector<2x16xf32>
    %283 = arith.addf %282, %281 : vector<2x16xf32>
    %284 = arith.divf %282, %283 : vector<2x16xf32>
    %285 = vector.extract_strided_slice %278 {offsets = [0, 16], sizes = [2, 16], strides = [1, 1]} : vector<2x64xf32> to vector<2x16xf32>
    %286 = arith.negf %285 : vector<2x16xf32>
    %287 = math.exp %286 : vector<2x16xf32>
    %cst_90 = arith.constant 1.000000e+00 : f32
    %288 = vector.broadcast %cst_90 : f32 to vector<2x16xf32>
    %289 = arith.addf %288, %287 : vector<2x16xf32>
    %290 = arith.divf %288, %289 : vector<2x16xf32>
    %291 = vector.extract_strided_slice %278 {offsets = [0, 32], sizes = [2, 16], strides = [1, 1]} : vector<2x64xf32> to vector<2x16xf32>
    %292 = math.tanh %291 : vector<2x16xf32>
    %293 = vector.extract_strided_slice %278 {offsets = [0, 48], sizes = [2, 16], strides = [1, 1]} : vector<2x64xf32> to vector<2x16xf32>
    %294 = arith.negf %293 : vector<2x16xf32>
    %295 = math.exp %294 : vector<2x16xf32>
    %cst_91 = arith.constant 1.000000e+00 : f32
    %296 = vector.broadcast %cst_91 : f32 to vector<2x16xf32>
    %297 = arith.addf %296, %295 : vector<2x16xf32>
    %298 = arith.divf %296, %297 : vector<2x16xf32>
    %299 = arith.mulf %290, %271 : vector<2x16xf32>
    %300 = arith.mulf %284, %292 : vector<2x16xf32>
    %301 = arith.addf %299, %300 : vector<2x16xf32>
    %302 = math.tanh %301 : vector<2x16xf32>
    %303 = arith.mulf %298, %302 : vector<2x16xf32>
    %304 = vector.extract_strided_slice %239 {offsets = [2, 0], sizes = [1, 64], strides = [1, 1]} : vector<16x64xf32> to vector<1x64xf32>
    %305 = vector.extract_strided_slice %240 {offsets = [2, 0], sizes = [1, 64], strides = [1, 1]} : vector<16x64xf32> to vector<1x64xf32>
    %306 = tpu.concatenate %304, %305 in 0 : vector<1x64xf32>, vector<1x64xf32> -> vector<2x64xf32>
    %cst_92 = arith.constant dense<0.000000e+00> : vector<2x64xf32>
    %307 = tpu.matmul %303, %241, %cst_92 {dimension_numbers = #tpu.dot_dimension_numbers<[1], [0], [0], [1], [0, 0, 1, 1], [], []>} : vector<2x16xf32>, vector<16x64xf32>, vector<2x64xf32> -> vector<2x64xf32>
    %308 = arith.addf %306, %307 : vector<2x64xf32>
    %309 = vector.extract_strided_slice %308 {offsets = [0, 0], sizes = [2, 16], strides = [1, 1]} : vector<2x64xf32> to vector<2x16xf32>
    %310 = arith.negf %309 : vector<2x16xf32>
    %311 = math.exp %310 : vector<2x16xf32>
    %cst_93 = arith.constant 1.000000e+00 : f32
    %312 = vector.broadcast %cst_93 : f32 to vector<2x16xf32>
    %313 = arith.addf %312, %311 : vector<2x16xf32>
    %314 = arith.divf %312, %313 : vector<2x16xf32>
    %315 = vector.extract_strided_slice %308 {offsets = [0, 16], sizes = [2, 16], strides = [1, 1]} : vector<2x64xf32> to vector<2x16xf32>
    %316 = arith.negf %315 : vector<2x16xf32>
    %317 = math.exp %316 : vector<2x16xf32>
    %cst_94 = arith.constant 1.000000e+00 : f32
    %318 = vector.broadcast %cst_94 : f32 to vector<2x16xf32>
    %319 = arith.addf %318, %317 : vector<2x16xf32>
    %320 = arith.divf %318, %319 : vector<2x16xf32>
    %321 = vector.extract_strided_slice %308 {offsets = [0, 32], sizes = [2, 16], strides = [1, 1]} : vector<2x64xf32> to vector<2x16xf32>
    %322 = math.tanh %321 : vector<2x16xf32>
    %323 = vector.extract_strided_slice %308 {offsets = [0, 48], sizes = [2, 16], strides = [1, 1]} : vector<2x64xf32> to vector<2x16xf32>
    %324 = arith.negf %323 : vector<2x16xf32>
    %325 = math.exp %324 : vector<2x16xf32>
    %cst_95 = arith.constant 1.000000e+00 : f32
    %326 = vector.broadcast %cst_95 : f32 to vector<2x16xf32>
    %327 = arith.addf %326, %325 : vector<2x16xf32>
    %328 = arith.divf %326, %327 : vector<2x16xf32>
    %329 = arith.mulf %320, %301 : vector<2x16xf32>
    %330 = arith.mulf %314, %322 : vector<2x16xf32>
    %331 = arith.addf %329, %330 : vector<2x16xf32>
    %332 = math.tanh %331 : vector<2x16xf32>
    %333 = arith.mulf %328, %332 : vector<2x16xf32>
    %334 = vector.extract_strided_slice %239 {offsets = [3, 0], sizes = [1, 64], strides = [1, 1]} : vector<16x64xf32> to vector<1x64xf32>
    %335 = vector.extract_strided_slice %240 {offsets = [3, 0], sizes = [1, 64], strides = [1, 1]} : vector<16x64xf32> to vector<1x64xf32>
    %336 = tpu.concatenate %334, %335 in 0 : vector<1x64xf32>, vector<1x64xf32> -> vector<2x64xf32>
    %cst_96 = arith.constant dense<0.000000e+00> : vector<2x64xf32>
    %337 = tpu.matmul %333, %241, %cst_96 {dimension_numbers = #tpu.dot_dimension_numbers<[1], [0], [0], [1], [0, 0, 1, 1], [], []>} : vector<2x16xf32>, vector<16x64xf32>, vector<2x64xf32> -> vector<2x64xf32>
    %338 = arith.addf %336, %337 : vector<2x64xf32>
    %339 = vector.extract_strided_slice %338 {offsets = [0, 0], sizes = [2, 16], strides = [1, 1]} : vector<2x64xf32> to vector<2x16xf32>
    %340 = arith.negf %339 : vector<2x16xf32>
    %341 = math.exp %340 : vector<2x16xf32>
    %cst_97 = arith.constant 1.000000e+00 : f32
    %342 = vector.broadcast %cst_97 : f32 to vector<2x16xf32>
    %343 = arith.addf %342, %341 : vector<2x16xf32>
    %344 = arith.divf %342, %343 : vector<2x16xf32>
    %345 = vector.extract_strided_slice %338 {offsets = [0, 16], sizes = [2, 16], strides = [1, 1]} : vector<2x64xf32> to vector<2x16xf32>
    %346 = arith.negf %345 : vector<2x16xf32>
    %347 = math.exp %346 : vector<2x16xf32>
    %cst_98 = arith.constant 1.000000e+00 : f32
    %348 = vector.broadcast %cst_98 : f32 to vector<2x16xf32>
    %349 = arith.addf %348, %347 : vector<2x16xf32>
    %350 = arith.divf %348, %349 : vector<2x16xf32>
    %351 = vector.extract_strided_slice %338 {offsets = [0, 32], sizes = [2, 16], strides = [1, 1]} : vector<2x64xf32> to vector<2x16xf32>
    %352 = math.tanh %351 : vector<2x16xf32>
    %353 = vector.extract_strided_slice %338 {offsets = [0, 48], sizes = [2, 16], strides = [1, 1]} : vector<2x64xf32> to vector<2x16xf32>
    %354 = arith.negf %353 : vector<2x16xf32>
    %355 = math.exp %354 : vector<2x16xf32>
    %cst_99 = arith.constant 1.000000e+00 : f32
    %356 = vector.broadcast %cst_99 : f32 to vector<2x16xf32>
    %357 = arith.addf %356, %355 : vector<2x16xf32>
    %358 = arith.divf %356, %357 : vector<2x16xf32>
    %359 = arith.mulf %350, %331 : vector<2x16xf32>
    %360 = arith.mulf %344, %352 : vector<2x16xf32>
    %361 = arith.addf %359, %360 : vector<2x16xf32>
    %362 = math.tanh %361 : vector<2x16xf32>
    %363 = arith.mulf %358, %362 : vector<2x16xf32>
    %364 = vector.extract_strided_slice %239 {offsets = [4, 0], sizes = [1, 64], strides = [1, 1]} : vector<16x64xf32> to vector<1x64xf32>
    %365 = vector.extract_strided_slice %240 {offsets = [4, 0], sizes = [1, 64], strides = [1, 1]} : vector<16x64xf32> to vector<1x64xf32>
    %366 = tpu.concatenate %364, %365 in 0 : vector<1x64xf32>, vector<1x64xf32> -> vector<2x64xf32>
    %cst_100 = arith.constant dense<0.000000e+00> : vector<2x64xf32>
    %367 = tpu.matmul %363, %241, %cst_100 {dimension_numbers = #tpu.dot_dimension_numbers<[1], [0], [0], [1], [0, 0, 1, 1], [], []>} : vector<2x16xf32>, vector<16x64xf32>, vector<2x64xf32> -> vector<2x64xf32>
    %368 = arith.addf %366, %367 : vector<2x64xf32>
    %369 = vector.extract_strided_slice %368 {offsets = [0, 0], sizes = [2, 16], strides = [1, 1]} : vector<2x64xf32> to vector<2x16xf32>
    %370 = arith.negf %369 : vector<2x16xf32>
    %371 = math.exp %370 : vector<2x16xf32>
    %cst_101 = arith.constant 1.000000e+00 : f32
    %372 = vector.broadcast %cst_101 : f32 to vector<2x16xf32>
    %373 = arith.addf %372, %371 : vector<2x16xf32>
    %374 = arith.divf %372, %373 : vector<2x16xf32>
    %375 = vector.extract_strided_slice %368 {offsets = [0, 16], sizes = [2, 16], strides = [1, 1]} : vector<2x64xf32> to vector<2x16xf32>
    %376 = arith.negf %375 : vector<2x16xf32>
    %377 = math.exp %376 : vector<2x16xf32>
    %cst_102 = arith.constant 1.000000e+00 : f32
    %378 = vector.broadcast %cst_102 : f32 to vector<2x16xf32>
    %379 = arith.addf %378, %377 : vector<2x16xf32>
    %380 = arith.divf %378, %379 : vector<2x16xf32>
    %381 = vector.extract_strided_slice %368 {offsets = [0, 32], sizes = [2, 16], strides = [1, 1]} : vector<2x64xf32> to vector<2x16xf32>
    %382 = math.tanh %381 : vector<2x16xf32>
    %383 = vector.extract_strided_slice %368 {offsets = [0, 48], sizes = [2, 16], strides = [1, 1]} : vector<2x64xf32> to vector<2x16xf32>
    %384 = arith.negf %383 : vector<2x16xf32>
    %385 = math.exp %384 : vector<2x16xf32>
    %cst_103 = arith.constant 1.000000e+00 : f32
    %386 = vector.broadcast %cst_103 : f32 to vector<2x16xf32>
    %387 = arith.addf %386, %385 : vector<2x16xf32>
    %388 = arith.divf %386, %387 : vector<2x16xf32>
    %389 = arith.mulf %380, %361 : vector<2x16xf32>
    %390 = arith.mulf %374, %382 : vector<2x16xf32>
    %391 = arith.addf %389, %390 : vector<2x16xf32>
    %392 = math.tanh %391 : vector<2x16xf32>
    %393 = arith.mulf %388, %392 : vector<2x16xf32>
    %394 = vector.extract_strided_slice %239 {offsets = [5, 0], sizes = [1, 64], strides = [1, 1]} : vector<16x64xf32> to vector<1x64xf32>
    %395 = vector.extract_strided_slice %240 {offsets = [5, 0], sizes = [1, 64], strides = [1, 1]} : vector<16x64xf32> to vector<1x64xf32>
    %396 = tpu.concatenate %394, %395 in 0 : vector<1x64xf32>, vector<1x64xf32> -> vector<2x64xf32>
    %cst_104 = arith.constant dense<0.000000e+00> : vector<2x64xf32>
    %397 = tpu.matmul %393, %241, %cst_104 {dimension_numbers = #tpu.dot_dimension_numbers<[1], [0], [0], [1], [0, 0, 1, 1], [], []>} : vector<2x16xf32>, vector<16x64xf32>, vector<2x64xf32> -> vector<2x64xf32>
    %398 = arith.addf %396, %397 : vector<2x64xf32>
    %399 = vector.extract_strided_slice %398 {offsets = [0, 0], sizes = [2, 16], strides = [1, 1]} : vector<2x64xf32> to vector<2x16xf32>
    %400 = arith.negf %399 : vector<2x16xf32>
    %401 = math.exp %400 : vector<2x16xf32>
    %cst_105 = arith.constant 1.000000e+00 : f32
    %402 = vector.broadcast %cst_105 : f32 to vector<2x16xf32>
    %403 = arith.addf %402, %401 : vector<2x16xf32>
    %404 = arith.divf %402, %403 : vector<2x16xf32>
    %405 = vector.extract_strided_slice %398 {offsets = [0, 16], sizes = [2, 16], strides = [1, 1]} : vector<2x64xf32> to vector<2x16xf32>
    %406 = arith.negf %405 : vector<2x16xf32>
    %407 = math.exp %406 : vector<2x16xf32>
    %cst_106 = arith.constant 1.000000e+00 : f32
    %408 = vector.broadcast %cst_106 : f32 to vector<2x16xf32>
    %409 = arith.addf %408, %407 : vector<2x16xf32>
    %410 = arith.divf %408, %409 : vector<2x16xf32>
    %411 = vector.extract_strided_slice %398 {offsets = [0, 32], sizes = [2, 16], strides = [1, 1]} : vector<2x64xf32> to vector<2x16xf32>
    %412 = math.tanh %411 : vector<2x16xf32>
    %413 = vector.extract_strided_slice %398 {offsets = [0, 48], sizes = [2, 16], strides = [1, 1]} : vector<2x64xf32> to vector<2x16xf32>
    %414 = arith.negf %413 : vector<2x16xf32>
    %415 = math.exp %414 : vector<2x16xf32>
    %cst_107 = arith.constant 1.000000e+00 : f32
    %416 = vector.broadcast %cst_107 : f32 to vector<2x16xf32>
    %417 = arith.addf %416, %415 : vector<2x16xf32>
    %418 = arith.divf %416, %417 : vector<2x16xf32>
    %419 = arith.mulf %410, %391 : vector<2x16xf32>
    %420 = arith.mulf %404, %412 : vector<2x16xf32>
    %421 = arith.addf %419, %420 : vector<2x16xf32>
    %422 = math.tanh %421 : vector<2x16xf32>
    %423 = arith.mulf %418, %422 : vector<2x16xf32>
    %424 = vector.extract_strided_slice %239 {offsets = [6, 0], sizes = [1, 64], strides = [1, 1]} : vector<16x64xf32> to vector<1x64xf32>
    %425 = vector.extract_strided_slice %240 {offsets = [6, 0], sizes = [1, 64], strides = [1, 1]} : vector<16x64xf32> to vector<1x64xf32>
    %426 = tpu.concatenate %424, %425 in 0 : vector<1x64xf32>, vector<1x64xf32> -> vector<2x64xf32>
    %cst_108 = arith.constant dense<0.000000e+00> : vector<2x64xf32>
    %427 = tpu.matmul %423, %241, %cst_108 {dimension_numbers = #tpu.dot_dimension_numbers<[1], [0], [0], [1], [0, 0, 1, 1], [], []>} : vector<2x16xf32>, vector<16x64xf32>, vector<2x64xf32> -> vector<2x64xf32>
    %428 = arith.addf %426, %427 : vector<2x64xf32>
    %429 = vector.extract_strided_slice %428 {offsets = [0, 0], sizes = [2, 16], strides = [1, 1]} : vector<2x64xf32> to vector<2x16xf32>
    %430 = arith.negf %429 : vector<2x16xf32>
    %431 = math.exp %430 : vector<2x16xf32>
    %cst_109 = arith.constant 1.000000e+00 : f32
    %432 = vector.broadcast %cst_109 : f32 to vector<2x16xf32>
    %433 = arith.addf %432, %431 : vector<2x16xf32>
    %434 = arith.divf %432, %433 : vector<2x16xf32>
    %435 = vector.extract_strided_slice %428 {offsets = [0, 16], sizes = [2, 16], strides = [1, 1]} : vector<2x64xf32> to vector<2x16xf32>
    %436 = arith.negf %435 : vector<2x16xf32>
    %437 = math.exp %436 : vector<2x16xf32>
    %cst_110 = arith.constant 1.000000e+00 : f32
    %438 = vector.broadcast %cst_110 : f32 to vector<2x16xf32>
    %439 = arith.addf %438, %437 : vector<2x16xf32>
    %440 = arith.divf %438, %439 : vector<2x16xf32>
    %441 = vector.extract_strided_slice %428 {offsets = [0, 32], sizes = [2, 16], strides = [1, 1]} : vector<2x64xf32> to vector<2x16xf32>
    %442 = math.tanh %441 : vector<2x16xf32>
    %443 = vector.extract_strided_slice %428 {offsets = [0, 48], sizes = [2, 16], strides = [1, 1]} : vector<2x64xf32> to vector<2x16xf32>
    %444 = arith.negf %443 : vector<2x16xf32>
    %445 = math.exp %444 : vector<2x16xf32>
    %cst_111 = arith.constant 1.000000e+00 : f32
    %446 = vector.broadcast %cst_111 : f32 to vector<2x16xf32>
    %447 = arith.addf %446, %445 : vector<2x16xf32>
    %448 = arith.divf %446, %447 : vector<2x16xf32>
    %449 = arith.mulf %440, %421 : vector<2x16xf32>
    %450 = arith.mulf %434, %442 : vector<2x16xf32>
    %451 = arith.addf %449, %450 : vector<2x16xf32>
    %452 = math.tanh %451 : vector<2x16xf32>
    %453 = arith.mulf %448, %452 : vector<2x16xf32>
    %454 = vector.extract_strided_slice %239 {offsets = [7, 0], sizes = [1, 64], strides = [1, 1]} : vector<16x64xf32> to vector<1x64xf32>
    %455 = vector.extract_strided_slice %240 {offsets = [7, 0], sizes = [1, 64], strides = [1, 1]} : vector<16x64xf32> to vector<1x64xf32>
    %456 = tpu.concatenate %454, %455 in 0 : vector<1x64xf32>, vector<1x64xf32> -> vector<2x64xf32>
    %cst_112 = arith.constant dense<0.000000e+00> : vector<2x64xf32>
    %457 = tpu.matmul %453, %241, %cst_112 {dimension_numbers = #tpu.dot_dimension_numbers<[1], [0], [0], [1], [0, 0, 1, 1], [], []>} : vector<2x16xf32>, vector<16x64xf32>, vector<2x64xf32> -> vector<2x64xf32>
    %458 = arith.addf %456, %457 : vector<2x64xf32>
    %459 = vector.extract_strided_slice %458 {offsets = [0, 0], sizes = [2, 16], strides = [1, 1]} : vector<2x64xf32> to vector<2x16xf32>
    %460 = arith.negf %459 : vector<2x16xf32>
    %461 = math.exp %460 : vector<2x16xf32>
    %cst_113 = arith.constant 1.000000e+00 : f32
    %462 = vector.broadcast %cst_113 : f32 to vector<2x16xf32>
    %463 = arith.addf %462, %461 : vector<2x16xf32>
    %464 = arith.divf %462, %463 : vector<2x16xf32>
    %465 = vector.extract_strided_slice %458 {offsets = [0, 16], sizes = [2, 16], strides = [1, 1]} : vector<2x64xf32> to vector<2x16xf32>
    %466 = arith.negf %465 : vector<2x16xf32>
    %467 = math.exp %466 : vector<2x16xf32>
    %cst_114 = arith.constant 1.000000e+00 : f32
    %468 = vector.broadcast %cst_114 : f32 to vector<2x16xf32>
    %469 = arith.addf %468, %467 : vector<2x16xf32>
    %470 = arith.divf %468, %469 : vector<2x16xf32>
    %471 = vector.extract_strided_slice %458 {offsets = [0, 32], sizes = [2, 16], strides = [1, 1]} : vector<2x64xf32> to vector<2x16xf32>
    %472 = math.tanh %471 : vector<2x16xf32>
    %473 = vector.extract_strided_slice %458 {offsets = [0, 48], sizes = [2, 16], strides = [1, 1]} : vector<2x64xf32> to vector<2x16xf32>
    %474 = arith.negf %473 : vector<2x16xf32>
    %475 = math.exp %474 : vector<2x16xf32>
    %cst_115 = arith.constant 1.000000e+00 : f32
    %476 = vector.broadcast %cst_115 : f32 to vector<2x16xf32>
    %477 = arith.addf %476, %475 : vector<2x16xf32>
    %478 = arith.divf %476, %477 : vector<2x16xf32>
    %479 = arith.mulf %470, %451 : vector<2x16xf32>
    %480 = arith.mulf %464, %472 : vector<2x16xf32>
    %481 = arith.addf %479, %480 : vector<2x16xf32>
    %482 = math.tanh %481 : vector<2x16xf32>
    %483 = arith.mulf %478, %482 : vector<2x16xf32>
    %484 = vector.extract_strided_slice %239 {offsets = [8, 0], sizes = [1, 64], strides = [1, 1]} : vector<16x64xf32> to vector<1x64xf32>
    %485 = vector.extract_strided_slice %240 {offsets = [8, 0], sizes = [1, 64], strides = [1, 1]} : vector<16x64xf32> to vector<1x64xf32>
    %486 = tpu.concatenate %484, %485 in 0 : vector<1x64xf32>, vector<1x64xf32> -> vector<2x64xf32>
    %cst_116 = arith.constant dense<0.000000e+00> : vector<2x64xf32>
    %487 = tpu.matmul %483, %241, %cst_116 {dimension_numbers = #tpu.dot_dimension_numbers<[1], [0], [0], [1], [0, 0, 1, 1], [], []>} : vector<2x16xf32>, vector<16x64xf32>, vector<2x64xf32> -> vector<2x64xf32>
    %488 = arith.addf %486, %487 : vector<2x64xf32>
    %489 = vector.extract_strided_slice %488 {offsets = [0, 0], sizes = [2, 16], strides = [1, 1]} : vector<2x64xf32> to vector<2x16xf32>
    %490 = arith.negf %489 : vector<2x16xf32>
    %491 = math.exp %490 : vector<2x16xf32>
    %cst_117 = arith.constant 1.000000e+00 : f32
    %492 = vector.broadcast %cst_117 : f32 to vector<2x16xf32>
    %493 = arith.addf %492, %491 : vector<2x16xf32>
    %494 = arith.divf %492, %493 : vector<2x16xf32>
    %495 = vector.extract_strided_slice %488 {offsets = [0, 16], sizes = [2, 16], strides = [1, 1]} : vector<2x64xf32> to vector<2x16xf32>
    %496 = arith.negf %495 : vector<2x16xf32>
    %497 = math.exp %496 : vector<2x16xf32>
    %cst_118 = arith.constant 1.000000e+00 : f32
    %498 = vector.broadcast %cst_118 : f32 to vector<2x16xf32>
    %499 = arith.addf %498, %497 : vector<2x16xf32>
    %500 = arith.divf %498, %499 : vector<2x16xf32>
    %501 = vector.extract_strided_slice %488 {offsets = [0, 32], sizes = [2, 16], strides = [1, 1]} : vector<2x64xf32> to vector<2x16xf32>
    %502 = math.tanh %501 : vector<2x16xf32>
    %503 = vector.extract_strided_slice %488 {offsets = [0, 48], sizes = [2, 16], strides = [1, 1]} : vector<2x64xf32> to vector<2x16xf32>
    %504 = arith.negf %503 : vector<2x16xf32>
    %505 = math.exp %504 : vector<2x16xf32>
    %cst_119 = arith.constant 1.000000e+00 : f32
    %506 = vector.broadcast %cst_119 : f32 to vector<2x16xf32>
    %507 = arith.addf %506, %505 : vector<2x16xf32>
    %508 = arith.divf %506, %507 : vector<2x16xf32>
    %509 = arith.mulf %500, %481 : vector<2x16xf32>
    %510 = arith.mulf %494, %502 : vector<2x16xf32>
    %511 = arith.addf %509, %510 : vector<2x16xf32>
    %512 = math.tanh %511 : vector<2x16xf32>
    %513 = arith.mulf %508, %512 : vector<2x16xf32>
    %514 = vector.extract_strided_slice %239 {offsets = [9, 0], sizes = [1, 64], strides = [1, 1]} : vector<16x64xf32> to vector<1x64xf32>
    %515 = vector.extract_strided_slice %240 {offsets = [9, 0], sizes = [1, 64], strides = [1, 1]} : vector<16x64xf32> to vector<1x64xf32>
    %516 = tpu.concatenate %514, %515 in 0 : vector<1x64xf32>, vector<1x64xf32> -> vector<2x64xf32>
    %cst_120 = arith.constant dense<0.000000e+00> : vector<2x64xf32>
    %517 = tpu.matmul %513, %241, %cst_120 {dimension_numbers = #tpu.dot_dimension_numbers<[1], [0], [0], [1], [0, 0, 1, 1], [], []>} : vector<2x16xf32>, vector<16x64xf32>, vector<2x64xf32> -> vector<2x64xf32>
    %518 = arith.addf %516, %517 : vector<2x64xf32>
    %519 = vector.extract_strided_slice %518 {offsets = [0, 0], sizes = [2, 16], strides = [1, 1]} : vector<2x64xf32> to vector<2x16xf32>
    %520 = arith.negf %519 : vector<2x16xf32>
    %521 = math.exp %520 : vector<2x16xf32>
    %cst_121 = arith.constant 1.000000e+00 : f32
    %522 = vector.broadcast %cst_121 : f32 to vector<2x16xf32>
    %523 = arith.addf %522, %521 : vector<2x16xf32>
    %524 = arith.divf %522, %523 : vector<2x16xf32>
    %525 = vector.extract_strided_slice %518 {offsets = [0, 16], sizes = [2, 16], strides = [1, 1]} : vector<2x64xf32> to vector<2x16xf32>
    %526 = arith.negf %525 : vector<2x16xf32>
    %527 = math.exp %526 : vector<2x16xf32>
    %cst_122 = arith.constant 1.000000e+00 : f32
    %528 = vector.broadcast %cst_122 : f32 to vector<2x16xf32>
    %529 = arith.addf %528, %527 : vector<2x16xf32>
    %530 = arith.divf %528, %529 : vector<2x16xf32>
    %531 = vector.extract_strided_slice %518 {offsets = [0, 32], sizes = [2, 16], strides = [1, 1]} : vector<2x64xf32> to vector<2x16xf32>
    %532 = math.tanh %531 : vector<2x16xf32>
    %533 = vector.extract_strided_slice %518 {offsets = [0, 48], sizes = [2, 16], strides = [1, 1]} : vector<2x64xf32> to vector<2x16xf32>
    %534 = arith.negf %533 : vector<2x16xf32>
    %535 = math.exp %534 : vector<2x16xf32>
    %cst_123 = arith.constant 1.000000e+00 : f32
    %536 = vector.broadcast %cst_123 : f32 to vector<2x16xf32>
    %537 = arith.addf %536, %535 : vector<2x16xf32>
    %538 = arith.divf %536, %537 : vector<2x16xf32>
    %539 = arith.mulf %530, %511 : vector<2x16xf32>
    %540 = arith.mulf %524, %532 : vector<2x16xf32>
    %541 = arith.addf %539, %540 : vector<2x16xf32>
    %542 = math.tanh %541 : vector<2x16xf32>
    %543 = arith.mulf %538, %542 : vector<2x16xf32>
    %544 = vector.extract_strided_slice %239 {offsets = [10, 0], sizes = [1, 64], strides = [1, 1]} : vector<16x64xf32> to vector<1x64xf32>
    %545 = vector.extract_strided_slice %240 {offsets = [10, 0], sizes = [1, 64], strides = [1, 1]} : vector<16x64xf32> to vector<1x64xf32>
    %546 = tpu.concatenate %544, %545 in 0 : vector<1x64xf32>, vector<1x64xf32> -> vector<2x64xf32>
    %cst_124 = arith.constant dense<0.000000e+00> : vector<2x64xf32>
    %547 = tpu.matmul %543, %241, %cst_124 {dimension_numbers = #tpu.dot_dimension_numbers<[1], [0], [0], [1], [0, 0, 1, 1], [], []>} : vector<2x16xf32>, vector<16x64xf32>, vector<2x64xf32> -> vector<2x64xf32>
    %548 = arith.addf %546, %547 : vector<2x64xf32>
    %549 = vector.extract_strided_slice %548 {offsets = [0, 0], sizes = [2, 16], strides = [1, 1]} : vector<2x64xf32> to vector<2x16xf32>
    %550 = arith.negf %549 : vector<2x16xf32>
    %551 = math.exp %550 : vector<2x16xf32>
    %cst_125 = arith.constant 1.000000e+00 : f32
    %552 = vector.broadcast %cst_125 : f32 to vector<2x16xf32>
    %553 = arith.addf %552, %551 : vector<2x16xf32>
    %554 = arith.divf %552, %553 : vector<2x16xf32>
    %555 = vector.extract_strided_slice %548 {offsets = [0, 16], sizes = [2, 16], strides = [1, 1]} : vector<2x64xf32> to vector<2x16xf32>
    %556 = arith.negf %555 : vector<2x16xf32>
    %557 = math.exp %556 : vector<2x16xf32>
    %cst_126 = arith.constant 1.000000e+00 : f32
    %558 = vector.broadcast %cst_126 : f32 to vector<2x16xf32>
    %559 = arith.addf %558, %557 : vector<2x16xf32>
    %560 = arith.divf %558, %559 : vector<2x16xf32>
    %561 = vector.extract_strided_slice %548 {offsets = [0, 32], sizes = [2, 16], strides = [1, 1]} : vector<2x64xf32> to vector<2x16xf32>
    %562 = math.tanh %561 : vector<2x16xf32>
    %563 = vector.extract_strided_slice %548 {offsets = [0, 48], sizes = [2, 16], strides = [1, 1]} : vector<2x64xf32> to vector<2x16xf32>
    %564 = arith.negf %563 : vector<2x16xf32>
    %565 = math.exp %564 : vector<2x16xf32>
    %cst_127 = arith.constant 1.000000e+00 : f32
    %566 = vector.broadcast %cst_127 : f32 to vector<2x16xf32>
    %567 = arith.addf %566, %565 : vector<2x16xf32>
    %568 = arith.divf %566, %567 : vector<2x16xf32>
    %569 = arith.mulf %560, %541 : vector<2x16xf32>
    %570 = arith.mulf %554, %562 : vector<2x16xf32>
    %571 = arith.addf %569, %570 : vector<2x16xf32>
    %572 = math.tanh %571 : vector<2x16xf32>
    %573 = arith.mulf %568, %572 : vector<2x16xf32>
    %574 = vector.extract_strided_slice %239 {offsets = [11, 0], sizes = [1, 64], strides = [1, 1]} : vector<16x64xf32> to vector<1x64xf32>
    %575 = vector.extract_strided_slice %240 {offsets = [11, 0], sizes = [1, 64], strides = [1, 1]} : vector<16x64xf32> to vector<1x64xf32>
    %576 = tpu.concatenate %574, %575 in 0 : vector<1x64xf32>, vector<1x64xf32> -> vector<2x64xf32>
    %cst_128 = arith.constant dense<0.000000e+00> : vector<2x64xf32>
    %577 = tpu.matmul %573, %241, %cst_128 {dimension_numbers = #tpu.dot_dimension_numbers<[1], [0], [0], [1], [0, 0, 1, 1], [], []>} : vector<2x16xf32>, vector<16x64xf32>, vector<2x64xf32> -> vector<2x64xf32>
    %578 = arith.addf %576, %577 : vector<2x64xf32>
    %579 = vector.extract_strided_slice %578 {offsets = [0, 0], sizes = [2, 16], strides = [1, 1]} : vector<2x64xf32> to vector<2x16xf32>
    %580 = arith.negf %579 : vector<2x16xf32>
    %581 = math.exp %580 : vector<2x16xf32>
    %cst_129 = arith.constant 1.000000e+00 : f32
    %582 = vector.broadcast %cst_129 : f32 to vector<2x16xf32>
    %583 = arith.addf %582, %581 : vector<2x16xf32>
    %584 = arith.divf %582, %583 : vector<2x16xf32>
    %585 = vector.extract_strided_slice %578 {offsets = [0, 16], sizes = [2, 16], strides = [1, 1]} : vector<2x64xf32> to vector<2x16xf32>
    %586 = arith.negf %585 : vector<2x16xf32>
    %587 = math.exp %586 : vector<2x16xf32>
    %cst_130 = arith.constant 1.000000e+00 : f32
    %588 = vector.broadcast %cst_130 : f32 to vector<2x16xf32>
    %589 = arith.addf %588, %587 : vector<2x16xf32>
    %590 = arith.divf %588, %589 : vector<2x16xf32>
    %591 = vector.extract_strided_slice %578 {offsets = [0, 32], sizes = [2, 16], strides = [1, 1]} : vector<2x64xf32> to vector<2x16xf32>
    %592 = math.tanh %591 : vector<2x16xf32>
    %593 = vector.extract_strided_slice %578 {offsets = [0, 48], sizes = [2, 16], strides = [1, 1]} : vector<2x64xf32> to vector<2x16xf32>
    %594 = arith.negf %593 : vector<2x16xf32>
    %595 = math.exp %594 : vector<2x16xf32>
    %cst_131 = arith.constant 1.000000e+00 : f32
    %596 = vector.broadcast %cst_131 : f32 to vector<2x16xf32>
    %597 = arith.addf %596, %595 : vector<2x16xf32>
    %598 = arith.divf %596, %597 : vector<2x16xf32>
    %599 = arith.mulf %590, %571 : vector<2x16xf32>
    %600 = arith.mulf %584, %592 : vector<2x16xf32>
    %601 = arith.addf %599, %600 : vector<2x16xf32>
    %602 = math.tanh %601 : vector<2x16xf32>
    %603 = arith.mulf %598, %602 : vector<2x16xf32>
    %604 = vector.extract_strided_slice %239 {offsets = [12, 0], sizes = [1, 64], strides = [1, 1]} : vector<16x64xf32> to vector<1x64xf32>
    %605 = vector.extract_strided_slice %240 {offsets = [12, 0], sizes = [1, 64], strides = [1, 1]} : vector<16x64xf32> to vector<1x64xf32>
    %606 = tpu.concatenate %604, %605 in 0 : vector<1x64xf32>, vector<1x64xf32> -> vector<2x64xf32>
    %cst_132 = arith.constant dense<0.000000e+00> : vector<2x64xf32>
    %607 = tpu.matmul %603, %241, %cst_132 {dimension_numbers = #tpu.dot_dimension_numbers<[1], [0], [0], [1], [0, 0, 1, 1], [], []>} : vector<2x16xf32>, vector<16x64xf32>, vector<2x64xf32> -> vector<2x64xf32>
    %608 = arith.addf %606, %607 : vector<2x64xf32>
    %609 = vector.extract_strided_slice %608 {offsets = [0, 0], sizes = [2, 16], strides = [1, 1]} : vector<2x64xf32> to vector<2x16xf32>
    %610 = arith.negf %609 : vector<2x16xf32>
    %611 = math.exp %610 : vector<2x16xf32>
    %cst_133 = arith.constant 1.000000e+00 : f32
    %612 = vector.broadcast %cst_133 : f32 to vector<2x16xf32>
    %613 = arith.addf %612, %611 : vector<2x16xf32>
    %614 = arith.divf %612, %613 : vector<2x16xf32>
    %615 = vector.extract_strided_slice %608 {offsets = [0, 16], sizes = [2, 16], strides = [1, 1]} : vector<2x64xf32> to vector<2x16xf32>
    %616 = arith.negf %615 : vector<2x16xf32>
    %617 = math.exp %616 : vector<2x16xf32>
    %cst_134 = arith.constant 1.000000e+00 : f32
    %618 = vector.broadcast %cst_134 : f32 to vector<2x16xf32>
    %619 = arith.addf %618, %617 : vector<2x16xf32>
    %620 = arith.divf %618, %619 : vector<2x16xf32>
    %621 = vector.extract_strided_slice %608 {offsets = [0, 32], sizes = [2, 16], strides = [1, 1]} : vector<2x64xf32> to vector<2x16xf32>
    %622 = math.tanh %621 : vector<2x16xf32>
    %623 = vector.extract_strided_slice %608 {offsets = [0, 48], sizes = [2, 16], strides = [1, 1]} : vector<2x64xf32> to vector<2x16xf32>
    %624 = arith.negf %623 : vector<2x16xf32>
    %625 = math.exp %624 : vector<2x16xf32>
    %cst_135 = arith.constant 1.000000e+00 : f32
    %626 = vector.broadcast %cst_135 : f32 to vector<2x16xf32>
    %627 = arith.addf %626, %625 : vector<2x16xf32>
    %628 = arith.divf %626, %627 : vector<2x16xf32>
    %629 = arith.mulf %620, %601 : vector<2x16xf32>
    %630 = arith.mulf %614, %622 : vector<2x16xf32>
    %631 = arith.addf %629, %630 : vector<2x16xf32>
    %632 = math.tanh %631 : vector<2x16xf32>
    %633 = arith.mulf %628, %632 : vector<2x16xf32>
    %634 = vector.extract_strided_slice %239 {offsets = [13, 0], sizes = [1, 64], strides = [1, 1]} : vector<16x64xf32> to vector<1x64xf32>
    %635 = vector.extract_strided_slice %240 {offsets = [13, 0], sizes = [1, 64], strides = [1, 1]} : vector<16x64xf32> to vector<1x64xf32>
    %636 = tpu.concatenate %634, %635 in 0 : vector<1x64xf32>, vector<1x64xf32> -> vector<2x64xf32>
    %cst_136 = arith.constant dense<0.000000e+00> : vector<2x64xf32>
    %637 = tpu.matmul %633, %241, %cst_136 {dimension_numbers = #tpu.dot_dimension_numbers<[1], [0], [0], [1], [0, 0, 1, 1], [], []>} : vector<2x16xf32>, vector<16x64xf32>, vector<2x64xf32> -> vector<2x64xf32>
    %638 = arith.addf %636, %637 : vector<2x64xf32>
    %639 = vector.extract_strided_slice %638 {offsets = [0, 0], sizes = [2, 16], strides = [1, 1]} : vector<2x64xf32> to vector<2x16xf32>
    %640 = arith.negf %639 : vector<2x16xf32>
    %641 = math.exp %640 : vector<2x16xf32>
    %cst_137 = arith.constant 1.000000e+00 : f32
    %642 = vector.broadcast %cst_137 : f32 to vector<2x16xf32>
    %643 = arith.addf %642, %641 : vector<2x16xf32>
    %644 = arith.divf %642, %643 : vector<2x16xf32>
    %645 = vector.extract_strided_slice %638 {offsets = [0, 16], sizes = [2, 16], strides = [1, 1]} : vector<2x64xf32> to vector<2x16xf32>
    %646 = arith.negf %645 : vector<2x16xf32>
    %647 = math.exp %646 : vector<2x16xf32>
    %cst_138 = arith.constant 1.000000e+00 : f32
    %648 = vector.broadcast %cst_138 : f32 to vector<2x16xf32>
    %649 = arith.addf %648, %647 : vector<2x16xf32>
    %650 = arith.divf %648, %649 : vector<2x16xf32>
    %651 = vector.extract_strided_slice %638 {offsets = [0, 32], sizes = [2, 16], strides = [1, 1]} : vector<2x64xf32> to vector<2x16xf32>
    %652 = math.tanh %651 : vector<2x16xf32>
    %653 = vector.extract_strided_slice %638 {offsets = [0, 48], sizes = [2, 16], strides = [1, 1]} : vector<2x64xf32> to vector<2x16xf32>
    %654 = arith.negf %653 : vector<2x16xf32>
    %655 = math.exp %654 : vector<2x16xf32>
    %cst_139 = arith.constant 1.000000e+00 : f32
    %656 = vector.broadcast %cst_139 : f32 to vector<2x16xf32>
    %657 = arith.addf %656, %655 : vector<2x16xf32>
    %658 = arith.divf %656, %657 : vector<2x16xf32>
    %659 = arith.mulf %650, %631 : vector<2x16xf32>
    %660 = arith.mulf %644, %652 : vector<2x16xf32>
    %661 = arith.addf %659, %660 : vector<2x16xf32>
    %662 = math.tanh %661 : vector<2x16xf32>
    %663 = arith.mulf %658, %662 : vector<2x16xf32>
    %664 = vector.extract_strided_slice %239 {offsets = [14, 0], sizes = [1, 64], strides = [1, 1]} : vector<16x64xf32> to vector<1x64xf32>
    %665 = vector.extract_strided_slice %240 {offsets = [14, 0], sizes = [1, 64], strides = [1, 1]} : vector<16x64xf32> to vector<1x64xf32>
    %666 = tpu.concatenate %664, %665 in 0 : vector<1x64xf32>, vector<1x64xf32> -> vector<2x64xf32>
    %cst_140 = arith.constant dense<0.000000e+00> : vector<2x64xf32>
    %667 = tpu.matmul %663, %241, %cst_140 {dimension_numbers = #tpu.dot_dimension_numbers<[1], [0], [0], [1], [0, 0, 1, 1], [], []>} : vector<2x16xf32>, vector<16x64xf32>, vector<2x64xf32> -> vector<2x64xf32>
    %668 = arith.addf %666, %667 : vector<2x64xf32>
    %669 = vector.extract_strided_slice %668 {offsets = [0, 0], sizes = [2, 16], strides = [1, 1]} : vector<2x64xf32> to vector<2x16xf32>
    %670 = arith.negf %669 : vector<2x16xf32>
    %671 = math.exp %670 : vector<2x16xf32>
    %cst_141 = arith.constant 1.000000e+00 : f32
    %672 = vector.broadcast %cst_141 : f32 to vector<2x16xf32>
    %673 = arith.addf %672, %671 : vector<2x16xf32>
    %674 = arith.divf %672, %673 : vector<2x16xf32>
    %675 = vector.extract_strided_slice %668 {offsets = [0, 16], sizes = [2, 16], strides = [1, 1]} : vector<2x64xf32> to vector<2x16xf32>
    %676 = arith.negf %675 : vector<2x16xf32>
    %677 = math.exp %676 : vector<2x16xf32>
    %cst_142 = arith.constant 1.000000e+00 : f32
    %678 = vector.broadcast %cst_142 : f32 to vector<2x16xf32>
    %679 = arith.addf %678, %677 : vector<2x16xf32>
    %680 = arith.divf %678, %679 : vector<2x16xf32>
    %681 = vector.extract_strided_slice %668 {offsets = [0, 32], sizes = [2, 16], strides = [1, 1]} : vector<2x64xf32> to vector<2x16xf32>
    %682 = math.tanh %681 : vector<2x16xf32>
    %683 = vector.extract_strided_slice %668 {offsets = [0, 48], sizes = [2, 16], strides = [1, 1]} : vector<2x64xf32> to vector<2x16xf32>
    %684 = arith.negf %683 : vector<2x16xf32>
    %685 = math.exp %684 : vector<2x16xf32>
    %cst_143 = arith.constant 1.000000e+00 : f32
    %686 = vector.broadcast %cst_143 : f32 to vector<2x16xf32>
    %687 = arith.addf %686, %685 : vector<2x16xf32>
    %688 = arith.divf %686, %687 : vector<2x16xf32>
    %689 = arith.mulf %680, %661 : vector<2x16xf32>
    %690 = arith.mulf %674, %682 : vector<2x16xf32>
    %691 = arith.addf %689, %690 : vector<2x16xf32>
    %692 = math.tanh %691 : vector<2x16xf32>
    %693 = arith.mulf %688, %692 : vector<2x16xf32>
    %694 = vector.extract_strided_slice %239 {offsets = [15, 0], sizes = [1, 64], strides = [1, 1]} : vector<16x64xf32> to vector<1x64xf32>
    %695 = vector.extract_strided_slice %240 {offsets = [15, 0], sizes = [1, 64], strides = [1, 1]} : vector<16x64xf32> to vector<1x64xf32>
    %696 = tpu.concatenate %694, %695 in 0 : vector<1x64xf32>, vector<1x64xf32> -> vector<2x64xf32>
    %cst_144 = arith.constant dense<0.000000e+00> : vector<2x64xf32>
    %697 = tpu.matmul %693, %241, %cst_144 {dimension_numbers = #tpu.dot_dimension_numbers<[1], [0], [0], [1], [0, 0, 1, 1], [], []>} : vector<2x16xf32>, vector<16x64xf32>, vector<2x64xf32> -> vector<2x64xf32>
    %698 = arith.addf %696, %697 : vector<2x64xf32>
    %699 = vector.extract_strided_slice %698 {offsets = [0, 0], sizes = [2, 16], strides = [1, 1]} : vector<2x64xf32> to vector<2x16xf32>
    %700 = arith.negf %699 : vector<2x16xf32>
    %701 = math.exp %700 : vector<2x16xf32>
    %cst_145 = arith.constant 1.000000e+00 : f32
    %702 = vector.broadcast %cst_145 : f32 to vector<2x16xf32>
    %703 = arith.addf %702, %701 : vector<2x16xf32>
    %704 = arith.divf %702, %703 : vector<2x16xf32>
    %705 = vector.extract_strided_slice %698 {offsets = [0, 16], sizes = [2, 16], strides = [1, 1]} : vector<2x64xf32> to vector<2x16xf32>
    %706 = arith.negf %705 : vector<2x16xf32>
    %707 = math.exp %706 : vector<2x16xf32>
    %cst_146 = arith.constant 1.000000e+00 : f32
    %708 = vector.broadcast %cst_146 : f32 to vector<2x16xf32>
    %709 = arith.addf %708, %707 : vector<2x16xf32>
    %710 = arith.divf %708, %709 : vector<2x16xf32>
    %711 = vector.extract_strided_slice %698 {offsets = [0, 32], sizes = [2, 16], strides = [1, 1]} : vector<2x64xf32> to vector<2x16xf32>
    %712 = math.tanh %711 : vector<2x16xf32>
    %713 = vector.extract_strided_slice %698 {offsets = [0, 48], sizes = [2, 16], strides = [1, 1]} : vector<2x64xf32> to vector<2x16xf32>
    %714 = arith.negf %713 : vector<2x16xf32>
    %715 = math.exp %714 : vector<2x16xf32>
    %cst_147 = arith.constant 1.000000e+00 : f32
    %716 = vector.broadcast %cst_147 : f32 to vector<2x16xf32>
    %717 = arith.addf %716, %715 : vector<2x16xf32>
    %718 = arith.divf %716, %717 : vector<2x16xf32>
    %719 = arith.mulf %710, %691 : vector<2x16xf32>
    %720 = arith.mulf %704, %712 : vector<2x16xf32>
    %721 = arith.addf %719, %720 : vector<2x16xf32>
    %722 = math.tanh %721 : vector<2x16xf32>
    %723 = arith.mulf %718, %722 : vector<2x16xf32>
    %724 = vector.extract_strided_slice %273 {offsets = [0, 0], sizes = [1, 16], strides = [1, 1]} : vector<2x16xf32> to vector<1x16xf32>
    %725 = vector.extract_strided_slice %303 {offsets = [0, 0], sizes = [1, 16], strides = [1, 1]} : vector<2x16xf32> to vector<1x16xf32>
    %726 = vector.extract_strided_slice %333 {offsets = [0, 0], sizes = [1, 16], strides = [1, 1]} : vector<2x16xf32> to vector<1x16xf32>
    %727 = vector.extract_strided_slice %363 {offsets = [0, 0], sizes = [1, 16], strides = [1, 1]} : vector<2x16xf32> to vector<1x16xf32>
    %728 = vector.extract_strided_slice %393 {offsets = [0, 0], sizes = [1, 16], strides = [1, 1]} : vector<2x16xf32> to vector<1x16xf32>
    %729 = vector.extract_strided_slice %423 {offsets = [0, 0], sizes = [1, 16], strides = [1, 1]} : vector<2x16xf32> to vector<1x16xf32>
    %730 = vector.extract_strided_slice %453 {offsets = [0, 0], sizes = [1, 16], strides = [1, 1]} : vector<2x16xf32> to vector<1x16xf32>
    %731 = vector.extract_strided_slice %483 {offsets = [0, 0], sizes = [1, 16], strides = [1, 1]} : vector<2x16xf32> to vector<1x16xf32>
    %732 = vector.extract_strided_slice %513 {offsets = [0, 0], sizes = [1, 16], strides = [1, 1]} : vector<2x16xf32> to vector<1x16xf32>
    %733 = vector.extract_strided_slice %543 {offsets = [0, 0], sizes = [1, 16], strides = [1, 1]} : vector<2x16xf32> to vector<1x16xf32>
    %734 = vector.extract_strided_slice %573 {offsets = [0, 0], sizes = [1, 16], strides = [1, 1]} : vector<2x16xf32> to vector<1x16xf32>
    %735 = vector.extract_strided_slice %603 {offsets = [0, 0], sizes = [1, 16], strides = [1, 1]} : vector<2x16xf32> to vector<1x16xf32>
    %736 = vector.extract_strided_slice %633 {offsets = [0, 0], sizes = [1, 16], strides = [1, 1]} : vector<2x16xf32> to vector<1x16xf32>
    %737 = vector.extract_strided_slice %663 {offsets = [0, 0], sizes = [1, 16], strides = [1, 1]} : vector<2x16xf32> to vector<1x16xf32>
    %738 = vector.extract_strided_slice %693 {offsets = [0, 0], sizes = [1, 16], strides = [1, 1]} : vector<2x16xf32> to vector<1x16xf32>
    %739 = vector.extract_strided_slice %723 {offsets = [0, 0], sizes = [1, 16], strides = [1, 1]} : vector<2x16xf32> to vector<1x16xf32>
    %740 = tpu.concatenate %724, %725, %726, %727, %728, %729, %730, %731, %732, %733, %734, %735, %736, %737, %738, %739 in 0 : vector<1x16xf32>, vector<1x16xf32>, vector<1x16xf32>, vector<1x16xf32>, vector<1x16xf32>, vector<1x16xf32>, vector<1x16xf32>, vector<1x16xf32>, vector<1x16xf32>, vector<1x16xf32>, vector<1x16xf32>, vector<1x16xf32>, vector<1x16xf32>, vector<1x16xf32>, vector<1x16xf32>, vector<1x16xf32> -> vector<16x16xf32>
    %c0_148 = arith.constant 0 : index
    %c0_149 = arith.constant 0 : index
    %c0_150 = arith.constant 0 : index
    %741 = vector.load %arg18[%c0_148, %c0_149, %c0_150] : memref<2x16x16xf32, #tpu.memory_space<vmem>>, vector<1x16x16xf32>
    %742 = vector.shape_cast %741 : vector<1x16x16xf32> to vector<16x16xf32>
    %743 = vector.shape_cast %740 : vector<16x16xf32> to vector<1x16x16xf32>
    tpu.vector_store %arg18[%c0_148, %c0_149, %c0_150], %743 {strides = array<i32>} : memref<2x16x16xf32, #tpu.memory_space<vmem>>, vector<1x16x16xf32>,
    %744 = vector.extract_strided_slice %273 {offsets = [1, 0], sizes = [1, 16], strides = [1, 1]} : vector<2x16xf32> to vector<1x16xf32>
    %745 = vector.extract_strided_slice %303 {offsets = [1, 0], sizes = [1, 16], strides = [1, 1]} : vector<2x16xf32> to vector<1x16xf32>
    %746 = vector.extract_strided_slice %333 {offsets = [1, 0], sizes = [1, 16], strides = [1, 1]} : vector<2x16xf32> to vector<1x16xf32>
    %747 = vector.extract_strided_slice %363 {offsets = [1, 0], sizes = [1, 16], strides = [1, 1]} : vector<2x16xf32> to vector<1x16xf32>
    %748 = vector.extract_strided_slice %393 {offsets = [1, 0], sizes = [1, 16], strides = [1, 1]} : vector<2x16xf32> to vector<1x16xf32>
    %749 = vector.extract_strided_slice %423 {offsets = [1, 0], sizes = [1, 16], strides = [1, 1]} : vector<2x16xf32> to vector<1x16xf32>
    %750 = vector.extract_strided_slice %453 {offsets = [1, 0], sizes = [1, 16], strides = [1, 1]} : vector<2x16xf32> to vector<1x16xf32>
    %751 = vector.extract_strided_slice %483 {offsets = [1, 0], sizes = [1, 16], strides = [1, 1]} : vector<2x16xf32> to vector<1x16xf32>
    %752 = vector.extract_strided_slice %513 {offsets = [1, 0], sizes = [1, 16], strides = [1, 1]} : vector<2x16xf32> to vector<1x16xf32>
    %753 = vector.extract_strided_slice %543 {offsets = [1, 0], sizes = [1, 16], strides = [1, 1]} : vector<2x16xf32> to vector<1x16xf32>
    %754 = vector.extract_strided_slice %573 {offsets = [1, 0], sizes = [1, 16], strides = [1, 1]} : vector<2x16xf32> to vector<1x16xf32>
    %755 = vector.extract_strided_slice %603 {offsets = [1, 0], sizes = [1, 16], strides = [1, 1]} : vector<2x16xf32> to vector<1x16xf32>
    %756 = vector.extract_strided_slice %633 {offsets = [1, 0], sizes = [1, 16], strides = [1, 1]} : vector<2x16xf32> to vector<1x16xf32>
    %757 = vector.extract_strided_slice %663 {offsets = [1, 0], sizes = [1, 16], strides = [1, 1]} : vector<2x16xf32> to vector<1x16xf32>
    %758 = vector.extract_strided_slice %693 {offsets = [1, 0], sizes = [1, 16], strides = [1, 1]} : vector<2x16xf32> to vector<1x16xf32>
    %759 = vector.extract_strided_slice %723 {offsets = [1, 0], sizes = [1, 16], strides = [1, 1]} : vector<2x16xf32> to vector<1x16xf32>
    %760 = tpu.concatenate %744, %745, %746, %747, %748, %749, %750, %751, %752, %753, %754, %755, %756, %757, %758, %759 in 0 : vector<1x16xf32>, vector<1x16xf32>, vector<1x16xf32>, vector<1x16xf32>, vector<1x16xf32>, vector<1x16xf32>, vector<1x16xf32>, vector<1x16xf32>, vector<1x16xf32>, vector<1x16xf32>, vector<1x16xf32>, vector<1x16xf32>, vector<1x16xf32>, vector<1x16xf32>, vector<1x16xf32>, vector<1x16xf32> -> vector<16x16xf32>
    %c1_151 = arith.constant 1 : index
    %c0_152 = arith.constant 0 : index
    %c0_153 = arith.constant 0 : index
    %761 = vector.load %arg18[%c1_151, %c0_152, %c0_153] : memref<2x16x16xf32, #tpu.memory_space<vmem>>, vector<1x16x16xf32>
    %762 = vector.shape_cast %761 : vector<1x16x16xf32> to vector<16x16xf32>
    %763 = vector.shape_cast %760 : vector<16x16xf32> to vector<1x16x16xf32>
    tpu.vector_store %arg18[%c1_151, %c0_152, %c0_153], %763 {strides = array<i32>} : memref<2x16x16xf32, #tpu.memory_space<vmem>>, vector<1x16x16xf32>,
    return
  }
}

</mosaic_0001>

<llo_original>
// kernel: tpu_custom_call.1
$region0: #{tpu_custom_call.1}
  #allocation0 [shape = 'u32[]', space=smem, size = 0x4, offset = 0x4, fixed_abs, tag = 'smem constant byte address 0x4 - core index']
  #allocation1 [shape = 'u32[144,128]{1,0:T(1,128)}', space=vmem, size = 0x12000, scoped, tag = 'internal scratch']
  %s0 = inlined_call_operand.vmem [shape: f32[2,16,12], index: 0, kind: input, shape index: {}]
  %s1 = inlined_call_operand.vmem [shape: f32[12,32], index: 1, kind: input, shape index: {}]
  %s2 = inlined_call_operand.vmem [shape: f32[1,32], index: 2, kind: input, shape index: {}]
  %s3 = inlined_call_operand.vmem [shape: f32[224,32], index: 3, kind: input, shape index: {}]
  %s4 = inlined_call_operand.vmem [shape: f32[1,32], index: 4, kind: input, shape index: {}]
  %s5 = inlined_call_operand.vmem [shape: f32[16,32], index: 5, kind: input, shape index: {}]
  %s6 = inlined_call_operand.vmem [shape: f32[16,32], index: 6, kind: input, shape index: {}]
  %s7 = inlined_call_operand.vmem [shape: f32[160,32], index: 7, kind: input, shape index: {}]
  %s8 = inlined_call_operand.vmem [shape: f32[1,32], index: 8, kind: input, shape index: {}]
  %s9 = inlined_call_operand.vmem [shape: f32[16,32], index: 9, kind: input, shape index: {}]
  %s10 = inlined_call_operand.vmem [shape: f32[16,32], index: 10, kind: input, shape index: {}]
  %s11 = inlined_call_operand.vmem [shape: f32[96,32], index: 11, kind: input, shape index: {}]
  %s12 = inlined_call_operand.vmem [shape: f32[1,32], index: 12, kind: input, shape index: {}]
  %s13 = inlined_call_operand.vmem [shape: f32[16,32], index: 13, kind: input, shape index: {}]
  %s14 = inlined_call_operand.vmem [shape: f32[16,32], index: 14, kind: input, shape index: {}]
  %s15 = inlined_call_operand.vmem [shape: f32[32,64], index: 15, kind: input, shape index: {}]
  %s16 = inlined_call_operand.vmem [shape: f32[16,64], index: 16, kind: input, shape index: {}]
  %s17 = inlined_call_operand.vmem [shape: f32[1,64], index: 17, kind: input, shape index: {}]
  %s18 = inlined_call_operand.hbm [shape: f32[2,16,16], index: 18, kind: output, shape index: {}]
  %s19 = sld [smem:[#allocation0]]
  $region82: #{tpu_custom_call.1} parent=0
    _
  %s21 = ssub.s32 1, %s19
  %s22 = scalar_select 0, %s21, %s19
  $region1: #{tpu_custom_call.1} parent=0
    #allocation2 [shape = 'u8[16384]{0}', space=vmem, size = 0x4000, scoped, tag = 'output window, operand 0, single buffered']
    #allocation3 [shape = 's32[1]{0}', space=sflag, size = 0x4, scoped, tag = 'scoped memory for tpu_custom_call.1']
    %23 = vsyncpa [#allocation3], 0
    // Predicated region
    $region2: #{tpu_custom_call.1} parent=1 // pred_check
      _
    $region3: #{tpu_custom_call.1} parent=1 // pred_check_branch
      %25 = sbr.rel (0) target = $region5
    $region4: #{tpu_custom_call.1} parent=1 // pred_region
      _
    $region5: #{tpu_custom_call.1} parent=1 // pred_fallthru
      _
    // Predicated region
    $region6: #{tpu_custom_call.1} parent=1 // pred_check
      _
    $region7: #{tpu_custom_call.1} parent=1 // pred_check_branch
      %27 = sbr.rel (0) target = $region9
    $region8: #{tpu_custom_call.1} parent=1 // pred_region
      _
    $region9: #{tpu_custom_call.1} parent=1 // pred_fallthru
      _
    // Predicated region
    $region10: #{tpu_custom_call.1} parent=1 // pred_check
      _
    $region11: #{tpu_custom_call.1} parent=1 // pred_check_branch
      %29 = sbr.rel (0) target = $region13
    $region12: #{tpu_custom_call.1} parent=1 // pred_region
      _
    $region13: #{tpu_custom_call.1} parent=1 // pred_fallthru
      _
    // Predicated region
    $region14: #{tpu_custom_call.1} parent=1 // pred_check
      _
    $region15: #{tpu_custom_call.1} parent=1 // pred_check_branch
      %31 = sbr.rel (0) target = $region17
    $region16: #{tpu_custom_call.1} parent=1 // pred_region
      _
    $region17: #{tpu_custom_call.1} parent=1 // pred_fallthru
      _
    // Predicated region
    $region18: #{tpu_custom_call.1} parent=1 // pred_check
      _
    $region19: #{tpu_custom_call.1} parent=1 // pred_check_branch
      %33 = sbr.rel (0) target = $region21
    $region20: #{tpu_custom_call.1} parent=1 // pred_region
      _
    $region21: #{tpu_custom_call.1} parent=1 // pred_fallthru
      _
    // Predicated region
    $region22: #{tpu_custom_call.1} parent=1 // pred_check
      _
    $region23: #{tpu_custom_call.1} parent=1 // pred_check_branch
      %35 = sbr.rel (0) target = $region25
    $region24: #{tpu_custom_call.1} parent=1 // pred_region
      _
    $region25: #{tpu_custom_call.1} parent=1 // pred_fallthru
      _
    // Predicated region
    $region26: #{tpu_custom_call.1} parent=1 // pred_check
      _
    $region27: #{tpu_custom_call.1} parent=1 // pred_check_branch
      %37 = sbr.rel (0) target = $region29
    $region28: #{tpu_custom_call.1} parent=1 // pred_region
      _
    $region29: #{tpu_custom_call.1} parent=1 // pred_fallthru
      _
    // Predicated region
    $region30: #{tpu_custom_call.1} parent=1 // pred_check
      _
    $region31: #{tpu_custom_call.1} parent=1 // pred_check_branch
      %39 = sbr.rel (0) target = $region33
    $region32: #{tpu_custom_call.1} parent=1 // pred_region
      _
    $region33: #{tpu_custom_call.1} parent=1 // pred_fallthru
      _
    // Predicated region
    $region34: #{tpu_custom_call.1} parent=1 // pred_check
      _
    $region35: #{tpu_custom_call.1} parent=1 // pred_check_branch
      %41 = sbr.rel (0) target = $region37
    $region36: #{tpu_custom_call.1} parent=1 // pred_region
      _
    $region37: #{tpu_custom_call.1} parent=1 // pred_fallthru
      _
    // Predicated region
    $region38: #{tpu_custom_call.1} parent=1 // pred_check
      _
    $region39: #{tpu_custom_call.1} parent=1 // pred_check_branch
      %43 = sbr.rel (0) target = $region41
    $region40: #{tpu_custom_call.1} parent=1 // pred_region
      _
    $region41: #{tpu_custom_call.1} parent=1 // pred_fallthru
      _
    // Predicated region
    $region42: #{tpu_custom_call.1} parent=1 // pred_check
      _
    $region43: #{tpu_custom_call.1} parent=1 // pred_check_branch
      %45 = sbr.rel (0) target = $region45
    $region44: #{tpu_custom_call.1} parent=1 // pred_region
      _
    $region45: #{tpu_custom_call.1} parent=1 // pred_fallthru
      _
    // Predicated region
    $region46: #{tpu_custom_call.1} parent=1 // pred_check
      _
    $region47: #{tpu_custom_call.1} parent=1 // pred_check_branch
      %47 = sbr.rel (0) target = $region49
    $region48: #{tpu_custom_call.1} parent=1 // pred_region
      _
    $region49: #{tpu_custom_call.1} parent=1 // pred_fallthru
      _
    // Predicated region
    $region50: #{tpu_custom_call.1} parent=1 // pred_check
      _
    $region51: #{tpu_custom_call.1} parent=1 // pred_check_branch
      %49 = sbr.rel (0) target = $region53
    $region52: #{tpu_custom_call.1} parent=1 // pred_region
      _
    $region53: #{tpu_custom_call.1} parent=1 // pred_fallthru
      _
    // Predicated region
    $region54: #{tpu_custom_call.1} parent=1 // pred_check
      _
    $region55: #{tpu_custom_call.1} parent=1 // pred_check_branch
      %51 = sbr.rel (0) target = $region57
    $region56: #{tpu_custom_call.1} parent=1 // pred_region
      _
    $region57: #{tpu_custom_call.1} parent=1 // pred_fallthru
      _
    // Predicated region
    $region58: #{tpu_custom_call.1} parent=1 // pred_check
      _
    $region59: #{tpu_custom_call.1} parent=1 // pred_check_branch
      %53 = sbr.rel (0) target = $region61
    $region60: #{tpu_custom_call.1} parent=1 // pred_region
      _
    $region61: #{tpu_custom_call.1} parent=1 // pred_fallthru
      _
    // Predicated region
    $region62: #{tpu_custom_call.1} parent=1 // pred_check
      _
    $region63: #{tpu_custom_call.1} parent=1 // pred_check_branch
      %55 = sbr.rel (0) target = $region65
    $region64: #{tpu_custom_call.1} parent=1 // pred_region
      _
    $region65: #{tpu_custom_call.1} parent=1 // pred_fallthru
      _
    // Predicated region
    $region66: #{tpu_custom_call.1} parent=1 // pred_check
      _
    $region67: #{tpu_custom_call.1} parent=1 // pred_check_branch
      %57 = sbr.rel (0) target = $region69
    $region68: #{tpu_custom_call.1} parent=1 // pred_region
      _
    $region69: #{tpu_custom_call.1} parent=1 // pred_fallthru
      _
    // Predicated region
    $region70: #{tpu_custom_call.1} parent=1 // pred_check
      _
    $region71: #{tpu_custom_call.1} parent=1 // pred_check_branch
      %59 = sbr.rel (0) target = $region73
    $region72: #{tpu_custom_call.1} parent=1 // pred_region
      _
    $region73: #{tpu_custom_call.1} parent=1 // pred_fallthru
      _
    %v60 = vld [vmem:[%s0] sm:$0xff]
    %v61 = vld [vmem:[%s0 + $0x8] sm:$0xff]
    %s62 = scalar_lea.vmem %s0, 16
    %v63 = vld [vmem:[%s62] sm:$0xff]
    %v64 = vld [vmem:[%s62 + $0x8] sm:$0xff]
    %v65 = vld [vmem:[%s1] sm:$0xff]
    %v66 = vld [vmem:[%s1 + $0x8] sm:$0xf]
    %v67 = vld [vmem:[%s2] sm:$0x1]
    %v69 = vlaneseq
    %v70 = vshrl.u32 %v69, 7
    %v71 = vsub.s32 0, %v70
    %v72 = vrot.slane %v67, %v71
    %vm74 = vcmask 97280
    %v76 = vsel %vm74, %v60, 0
    %v79 = vsel %vm74, %v61, 0
    %v82 = vsel %vm74, %v63, 0
    %v85 = vsel %vm74, %v64, 0
    %vm87 = vcmask 1043456
    %v89 = vsel %vm87, %v66, 0
    %91 = vmatprep.subr.mxu0 0.0
    %92 = vmatpush1.msra.mxu0 0.0
    %93 = vmatprep.subr.mxu0 0.0
    %94 = vmatpush1.msra.mxu0 0.0
    %95 = vmatprep.subr.mxu0 0.0
    %96 = vmatpush1.msra.mxu0 0.0
    %97 = vmatprep.subr.mxu0 0.0
    %98 = vmatpush1.msra.mxu0 0.0
    %99 = vmatprep.subr.mxu0 0.0
    %100 = vmatpush1.msra.mxu0 0.0
    %101 = vmatprep.subr.mxu0 0.0
    %102 = vmatpush1.msra.mxu0 0.0
    %103 = vmatprep.subr.mxu0 0.0
    %104 = vmatpush1.msra.mxu0 0.0
    %105 = vmatprep.subr.mxu0 0.0
    %106 = vmatpush1.msra.mxu0 0.0
    %107 = vmatprep.subr.mxu0 0.0
    %108 = vmatpush1.msra.mxu0 0.0
    %109 = vmatprep.subr.mxu0 0.0
    %110 = vmatpush1.msra.mxu0 0.0
    %111 = vmatprep.subr.mxu0 0.0
    %112 = vmatpush1.msra.mxu0 0.0
    %113 = vmatprep.subr.mxu0 0.0
    %114 = vmatpush1.msra.mxu0 0.0
    %115 = vmatprep.subr.mxu0 0.0
    %116 = vmatpush1.msra.mxu0 0.0
    %117 = vmatprep.subr.mxu0 0.0
    %118 = vmatpush1.msra.mxu0 0.0
    %119 = vmatprep.subr.mxu0 0.0
    %120 = vmatpush1.msra.mxu0 %v89
    %121 = vmatprep.subr.mxu0 0.0
    %122 = vmatpush1.msra.mxu0 %v65
    %123 = vmatprep.subr.mxu0 0.0
    %124 = vmatpush2.msra.mxu0 0.0
    %125 = vmatprep.subr.mxu0 0.0
    %126 = vmatpush2.msra.mxu0 0.0
    %127 = vmatprep.subr.mxu0 0.0
    %128 = vmatpush2.msra.mxu0 0.0
    %129 = vmatprep.subr.mxu0 0.0
    %130 = vmatpush2.msra.mxu0 0.0
    %131 = vmatprep.subr.mxu0 0.0
    %132 = vmatpush2.msra.mxu0 0.0
    %133 = vmatprep.subr.mxu0 0.0
    %134 = vmatpush2.msra.mxu0 0.0
    %135 = vmatprep.subr.mxu0 0.0
    %136 = vmatpush2.msra.mxu0 0.0
    %137 = vmatprep.subr.mxu0 0.0
    %138 = vmatpush2.msra.mxu0 0.0
    %139 = vmatprep.subr.mxu0 0.0
    %140 = vmatpush2.msra.mxu0 0.0
    %141 = vmatprep.subr.mxu0 0.0
    %142 = vmatpush2.msra.mxu0 0.0
    %143 = vmatprep.subr.mxu0 0.0
    %144 = vmatpush2.msra.mxu0 0.0
    %145 = vmatprep.subr.mxu0 0.0
    %146 = vmatpush2.msra.mxu0 0.0
    %147 = vmatprep.subr.mxu0 0.0
    %148 = vmatpush2.msra.mxu0 0.0
    %149 = vmatprep.subr.mxu0 0.0
    %150 = vmatpush2.msra.mxu0 0.0
    %151 = vmatprep.subr.mxu0 0.0
    %152 = vmatpush2.msra.mxu0 0.0
    %153 = vmatprep.subr.mxu0 0.0
    %154 = vmatpush2.msra.mxu0 0.0
    %155 = vmatprep.mubr.f32.mxu0 0.0
    %156 = vmatmul.mubr.f32.gmra.mxu0 %v76
    %v157 = vpop.f32.mrf.mxu0
    %v158 = vadd.f32 %v72, %v157
    %v159 = vpop.f32.mrf.mxu0
    %160 = vmatprep.mubr.f32.mxu0 0.0
    %161 = vmatmul.mubr.f32.gmra.mxu0 %v79
    %v162 = vpop.f32.mrf.mxu0
    %v163 = vadd.f32 %v72, %v162
    %v164 = vpop.f32.mrf.mxu0
    %165 = vmatprep.mubr.f32.mxu0 0.0
    %166 = vmatmul.mubr.f32.gmra.mxu0 %v82
    %v167 = vpop.f32.mrf.mxu0
    %v168 = vadd.f32 %v72, %v167
    %v169 = vpop.f32.mrf.mxu0
    %170 = vmatprep.mubr.f32.mxu0 0.0
    %171 = vmatmul.mubr.f32.gmra.mxu0 %v85
    %v172 = vpop.f32.mrf.mxu0
    %v173 = vadd.f32 %v72, %v172
    %v174 = vpop.f32.mrf.mxu0
    %175 = vdwg.mxu0
    %v176 = vmax.f32 %v158, 0.0
    %v177 = vmax.f32 %v163, 0.0
    %v178 = vmax.f32 %v168, 0.0
    %v179 = vmax.f32 %v173, 0.0
    %v180 = vld [vmem:[%s5] sm:$0xff]
    %v181 = vld [vmem:[%s5 + $0x8] sm:$0xff]
    %v182 = vld [vmem:[%s6] sm:$0xff]
    %v183 = vld [vmem:[%s6 + $0x8] sm:$0xff]
    %vm186 = vcmask 1042432
    %v187 = vrot.slane %v176, 5
    %v188 = vrot.slane %v177, 5
    %v189 = vsel %vm186, %v187, %v188
    %v193 = vsel %vm186, 0.0, %v187
    %v194 = vsel %vm186, %v188, 0.0
    %vm197 = vcmask 1046528
    %v198 = vrot.slane %v193, 1
    %v199 = vrot.slane %v189, 1
    %v200 = vsel %vm197, %v198, %v199
    %v201 = vrot.slane %v194, 1
    %v202 = vsel %vm197, %v199, %v201
    %203 = vrot.lane.b32.xlu0 %v200, 32
    %v204 = vpop.permute.xlu0 %203
    %205 = vrot.lane.b32.xlu0 %v202, 32
    %v206 = vpop.permute.xlu0 %205
    %vm209 = vcmask 1045504
    %v210 = vrot.slane %v193, 2
    %v211 = vrot.slane %v189, 2
    %v212 = vsel %vm209, %v210, %v211
    %v213 = vrot.slane %v194, 2
    %v214 = vsel %vm209, %v211, %v213
    %215 = vrot.lane.b32.xlu0 %v212, 64
    %v216 = vpop.permute.xlu0 %215
    %217 = vrot.lane.b32.xlu0 %v214, 64
    %v218 = vpop.permute.xlu0 %217
    %vm221 = vcmask 1044480
    %v222 = vrot.slane %v193, 3
    %v223 = vrot.slane %v189, 3
    %v224 = vsel %vm221, %v222, %v223
    %v225 = vrot.slane %v194, 3
    %v226 = vsel %vm221, %v223, %v225
    %227 = vrot.lane.b32.xlu0 %v224, 96
    %v228 = vpop.permute.xlu0 %227
    %229 = vrot.lane.b32.xlu0 %v226, 96
    %v230 = vpop.permute.xlu0 %229
    %v233 = vrot.slane %v193, 4
    %v234 = vrot.slane %v189, 4
    %v235 = vsel %vm87, %v233, %v234
    %v236 = vrot.slane %v194, 4
    %v237 = vsel %vm87, %v234, %v236
    %v240 = vrot.slane %v193, 5
    %v241 = vrot.slane %v189, 5
    %v242 = vsel %vm186, %v240, %v241
    %v243 = vrot.slane %v194, 5
    %v244 = vsel %vm186, %v241, %v243
    %245 = vrot.lane.b32.xlu0 %v242, 32
    %v246 = vpop.permute.xlu0 %245
    %247 = vrot.lane.b32.xlu0 %v244, 32
    %v248 = vpop.permute.xlu0 %247
    %vm251 = vcmask 1041408
    %v252 = vrot.slane %v193, 6
    %v253 = vrot.slane %v189, 6
    %v254 = vsel %vm251, %v252, %v253
    %v255 = vrot.slane %v194, 6
    %v256 = vsel %vm251, %v253, %v255
    %257 = vrot.lane.b32.xlu0 %v254, 64
    %v258 = vpop.permute.xlu0 %257
    %259 = vrot.lane.b32.xlu0 %v256, 64
    %v260 = vpop.permute.xlu0 %259
    %vm263 = vcmask 261120
    %v264 = vsel %vm263, %v193, %v204
    %v265 = vsel %vm263, %v189, %v206
    %vm266 = vcmask 523264
    %v267 = vsel %vm266, %v264, %v216
    %v268 = vsel %vm266, %v265, %v218
    %vm269 = vcmask 785408
    %v270 = vsel %vm269, %v267, %v228
    %v271 = vsel %vm269, %v268, %v230
    %v272 = vsel %vm263, %v235, %v246
    %v273 = vsel %vm263, %v237, %v248
    %v274 = vsel %vm266, %v272, %v258
    %v275 = vsel %vm266, %v273, %v260
    %v278 = vrot.slane %v178, 5
    %v279 = vrot.slane %v179, 5
    %v280 = vsel %vm186, %v278, %v279
    %v284 = vsel %vm186, 0.0, %v278
    %v285 = vsel %vm186, %v279, 0.0
    %v288 = vrot.slane %v284, 1
    %v289 = vrot.slane %v280, 1
    %v290 = vsel %vm197, %v288, %v289
    %v291 = vrot.slane %v285, 1
    %v292 = vsel %vm197, %v289, %v291
    %293 = vrot.lane.b32.xlu0 %v290, 32
    %v294 = vpop.permute.xlu0 %293
    %295 = vrot.lane.b32.xlu0 %v292, 32
    %v296 = vpop.permute.xlu0 %295
    %v299 = vrot.slane %v284, 2
    %v300 = vrot.slane %v280, 2
    %v301 = vsel %vm209, %v299, %v300
    %v302 = vrot.slane %v285, 2
    %v303 = vsel %vm209, %v300, %v302
    %304 = vrot.lane.b32.xlu0 %v301, 64
    %v305 = vpop.permute.xlu0 %304
    %306 = vrot.lane.b32.xlu0 %v303, 64
    %v307 = vpop.permute.xlu0 %306
    %v310 = vrot.slane %v284, 3
    %v311 = vrot.slane %v280, 3
    %v312 = vsel %vm221, %v310, %v311
    %v313 = vrot.slane %v285, 3
    %v314 = vsel %vm221, %v311, %v313
    %315 = vrot.lane.b32.xlu0 %v312, 96
    %v316 = vpop.permute.xlu0 %315
    %317 = vrot.lane.b32.xlu0 %v314, 96
    %v318 = vpop.permute.xlu0 %317
    %v321 = vrot.slane %v284, 4
    %v322 = vrot.slane %v280, 4
    %v323 = vsel %vm87, %v321, %v322
    %v324 = vrot.slane %v285, 4
    %v325 = vsel %vm87, %v322, %v324
    %v328 = vrot.slane %v284, 5
    %v329 = vrot.slane %v280, 5
    %v330 = vsel %vm186, %v328, %v329
    %v331 = vrot.slane %v285, 5
    %v332 = vsel %vm186, %v329, %v331
    %333 = vrot.lane.b32.xlu0 %v330, 32
    %v334 = vpop.permute.xlu0 %333
    %335 = vrot.lane.b32.xlu0 %v332, 32
    %v336 = vpop.permute.xlu0 %335
    %v339 = vrot.slane %v284, 6
    %v340 = vrot.slane %v280, 6
    %v341 = vsel %vm251, %v339, %v340
    %v342 = vrot.slane %v285, 6
    %v343 = vsel %vm251, %v340, %v342
    %344 = vrot.lane.b32.xlu0 %v341, 64
    %v345 = vpop.permute.xlu0 %344
    %346 = vrot.lane.b32.xlu0 %v343, 64
    %v347 = vpop.permute.xlu0 %346
    %v350 = vsel %vm263, %v284, %v294
    %v351 = vsel %vm263, %v280, %v296
    %v352 = vsel %vm266, %v350, %v305
    %v353 = vsel %vm266, %v351, %v307
    %v354 = vsel %vm269, %v352, %v316
    %v355 = vsel %vm269, %v353, %v318
    %v356 = vsel %vm263, %v323, %v334
    %v357 = vsel %vm263, %v325, %v336
    %v358 = vsel %vm266, %v356, %v345
    %v359 = vsel %vm266, %v357, %v347
    %v360 = vld [vmem:[%s3] sm:$0xff]
    %v361 = vld [vmem:[%s3 + $0x8] sm:$0xff]
    %v362 = vld [vmem:[%s3 + $0x10] sm:$0xff]
    %v363 = vld [vmem:[%s3 + $0x18] sm:$0xff]
    %v364 = vld [vmem:[%s3 + $0x20] sm:$0xff]
    %v365 = vld [vmem:[%s3 + $0x28] sm:$0xff]
    %v366 = vld [vmem:[%s3 + $0x30] sm:$0xff]
    %v367 = vld [vmem:[%s3 + $0x38] sm:$0xff]
    %v368 = vld [vmem:[%s3 + $0x40] sm:$0xff]
    %v369 = vld [vmem:[%s3 + $0x48] sm:$0xff]
    %v370 = vld [vmem:[%s3 + $0x50] sm:$0xff]
    %v371 = vld [vmem:[%s3 + $0x58] sm:$0xff]
    %v372 = vld [vmem:[%s3 + $0x60] sm:$0xff]
    %v373 = vld [vmem:[%s3 + $0x68] sm:$0xff]
    %v374 = vld [vmem:[%s3 + $0x70] sm:$0xff]
    %v375 = vld [vmem:[%s3 + $0x78] sm:$0xff]
    %v376 = vld [vmem:[%s3 + $0x80] sm:$0xff]
    %v377 = vld [vmem:[%s3 + $0x88] sm:$0xff]
    %v378 = vld [vmem:[%s3 + $0x90] sm:$0xff]
    %v379 = vld [vmem:[%s3 + $0x98] sm:$0xff]
    %v380 = vld [vmem:[%s3 + $0xa0] sm:$0xff]
    %v381 = vld [vmem:[%s3 + $0xa8] sm:$0xff]
    %v382 = vld [vmem:[%s3 + $0xb0] sm:$0xff]
    %v383 = vld [vmem:[%s3 + $0xb8] sm:$0xff]
    %v384 = vld [vmem:[%s3 + $0xc0] sm:$0xff]
    %v385 = vld [vmem:[%s3 + $0xc8] sm:$0xff]
    %v386 = vld [vmem:[%s3 + $0xd0] sm:$0xff]
    %v387 = vld [vmem:[%s3 + $0xd8] sm:$0xff]
    %v388 = vld [vmem:[%s4] sm:$0x1]
    %v390 = vlaneseq
    %v391 = vshrl.u32 %v390, 7
    %v392 = vsub.s32 0, %v391
    %v393 = vrot.slane %v388, %v392
    %v396 = vsel %vm269, %v274, 0
    %v399 = vsel %vm269, %v275, 0
    %v402 = vsel %vm269, %v358, 0
    %v405 = vsel %vm269, %v359, 0
    %407 = vmatprep.subr.mxu0 0.0
    %408 = vmatpush1.msra.mxu0 %v375
    %409 = vmatprep.subr.mxu0 0.0
    %410 = vmatpush1.msra.mxu0 %v374
    %411 = vmatprep.subr.mxu0 0.0
    %412 = vmatpush1.msra.mxu0 %v373
    %413 = vmatprep.subr.mxu0 0.0
    %414 = vmatpush1.msra.mxu0 %v372
    %415 = vmatprep.subr.mxu0 0.0
    %416 = vmatpush1.msra.mxu0 %v371
    %417 = vmatprep.subr.mxu0 0.0
    %418 = vmatpush1.msra.mxu0 %v370
    %419 = vmatprep.subr.mxu0 0.0
    %420 = vmatpush1.msra.mxu0 %v369
    %421 = vmatprep.subr.mxu0 0.0
    %422 = vmatpush1.msra.mxu0 %v368
    %423 = vmatprep.subr.mxu0 0.0
    %424 = vmatpush1.msra.mxu0 %v367
    %425 = vmatprep.subr.mxu0 0.0
    %426 = vmatpush1.msra.mxu0 %v366
    %427 = vmatprep.subr.mxu0 0.0
    %428 = vmatpush1.msra.mxu0 %v365
    %429 = vmatprep.subr.mxu0 0.0
    %430 = vmatpush1.msra.mxu0 %v364
    %431 = vmatprep.subr.mxu0 0.0
    %432 = vmatpush1.msra.mxu0 %v363
    %433 = vmatprep.subr.mxu0 0.0
    %434 = vmatpush1.msra.mxu0 %v362
    %435 = vmatprep.subr.mxu0 0.0
    %436 = vmatpush1.msra.mxu0 %v361
    %437 = vmatprep.subr.mxu0 0.0
    %438 = vmatpush1.msra.mxu0 %v360
    %439 = vmatprep.subr.mxu0 0.0
    %440 = vmatpush2.msra.mxu0 0.0
    %441 = vmatprep.subr.mxu0 0.0
    %442 = vmatpush2.msra.mxu0 0.0
    %443 = vmatprep.subr.mxu0 0.0
    %444 = vmatpush2.msra.mxu0 0.0
    %445 = vmatprep.subr.mxu0 0.0
    %446 = vmatpush2.msra.mxu0 0.0
    %447 = vmatprep.subr.mxu0 0.0
    %448 = vmatpush2.msra.mxu0 %v387
    %449 = vmatprep.subr.mxu0 0.0
    %450 = vmatpush2.msra.mxu0 %v386
    %451 = vmatprep.subr.mxu0 0.0
    %452 = vmatpush2.msra.mxu0 %v385
    %453 = vmatprep.subr.mxu0 0.0
    %454 = vmatpush2.msra.mxu0 %v384
    %455 = vmatprep.subr.mxu0 0.0
    %456 = vmatpush2.msra.mxu0 %v383
    %457 = vmatprep.subr.mxu0 0.0
    %458 = vmatpush2.msra.mxu0 %v382
    %459 = vmatprep.subr.mxu0 0.0
    %460 = vmatpush2.msra.mxu0 %v381
    %461 = vmatprep.subr.mxu0 0.0
    %462 = vmatpush2.msra.mxu0 %v380
    %463 = vmatprep.subr.mxu0 0.0
    %464 = vmatpush2.msra.mxu0 %v379
    %465 = vmatprep.subr.mxu0 0.0
    %466 = vmatpush2.msra.mxu0 %v378
    %467 = vmatprep.subr.mxu0 0.0
    %468 = vmatpush2.msra.mxu0 %v377
    %469 = vmatprep.subr.mxu0 0.0
    %470 = vmatpush2.msra.mxu0 %v376
    %471 = vmatprep.mubr.f32.mxu0 %v396
    %472 = vmatmul.mubr.f32.gmra.mxu0 %v270
    %v473 = vpop.f32.mrf.mxu0
    %v474 = vadd.f32 %v393, %v473
    %v475 = vpop.f32.mrf.mxu0
    %476 = vmatprep.mubr.f32.mxu0 %v399
    %477 = vmatmul.mubr.f32.gmra.mxu0 %v271
    %v478 = vpop.f32.mrf.mxu0
    %v479 = vadd.f32 %v393, %v478
    %v480 = vpop.f32.mrf.mxu0
    %481 = vmatprep.mubr.f32.mxu0 %v402
    %482 = vmatmul.mubr.f32.gmra.mxu0 %v354
    %v483 = vpop.f32.mrf.mxu0
    %v484 = vadd.f32 %v393, %v483
    %v485 = vpop.f32.mrf.mxu0
    %486 = vmatprep.mubr.f32.mxu0 %v405
    %487 = vmatmul.mubr.f32.gmra.mxu0 %v355
    %v488 = vpop.f32.mrf.mxu0
    %v489 = vadd.f32 %v393, %v488
    %v490 = vpop.f32.mrf.mxu0
    %491 = vdwg.mxu0
    %v492 = vmax.f32 %v474, 0.0
    %v493 = vmax.f32 %v479, 0.0
    %v494 = vmax.f32 %v484, 0.0
    %v495 = vmax.f32 %v489, 0.0
    %v496 = vsel %vm263, %v492, 0.0
    %v497 = vsel %vm263, %v493, 0.0
    %v498 = vadd.f32 %v496, %v497
    %499 = vadd.xlane.f32.xlu0 %v498
    %v500 = vpop.xlane.xlu0 %499
    %v501 = vrot.slane %v500, 4
    %v502 = vadd.f32 %v500, %v501
    %v503 = vrot.slane %v502, 2
    %v504 = vadd.f32 %v502, %v503
    %v505 = vrot.slane %v504, 1
    %v506 = vadd.f32 %v504, %v505
    %s507 = vtos %v506
    %v508 = vrcp.pop 512.0
    %s509 = vtos %v508
    %s510 = smul.f32 %s507, %s509
    %v511 = vstv %s510
    %v512 = vsub.f32 %v492, %v511
    %v513 = vsub.f32 %v493, %v511
    %v514 = vmul.f32 %v512, %v512
    %v515 = vmul.f32 %v513, %v513
    %v516 = vsel %vm263, %v514, 0.0
    %v517 = vsel %vm263, %v515, 0.0
    %v518 = vadd.f32 %v516, %v517
    %519 = vadd.xlane.f32.xlu0 %v518
    %v520 = vpop.xlane.xlu0 %519
    %v521 = vrot.slane %v520, 4
    %v522 = vadd.f32 %v520, %v521
    %v523 = vrot.slane %v522, 2
    %v524 = vadd.f32 %v522, %v523
    %v525 = vrot.slane %v524, 1
    %v526 = vadd.f32 %v524, %v525
    %s527 = vtos %v526
    %v528 = vrcp.pop 512.0
    %s529 = vtos %v528
    %s530 = smul.f32 %s527, %s529
    %s531 = sadd.f32 %s530, 1e-05
    %v532 = vstv %s531
    %v533 = vrsqrt.pop %v532
    %s534 = vtos %v533
    %v535 = vstv %s534
    %v536 = vmul.f32 %v512, %v535
    %v537 = vmul.f32 %v513, %v535
    %v538 = vmul.f32 %v536, %v180
    %v539 = vmul.f32 %v537, %v181
    %v540 = vadd.f32 %v538, %v182
    %v541 = vadd.f32 %v539, %v183
    %v542 = vsel %vm263, %v494, 0.0
    %v543 = vsel %vm263, %v495, 0.0
    %v544 = vadd.f32 %v542, %v543
    %545 = vadd.xlane.f32.xlu0 %v544
    %v546 = vpop.xlane.xlu0 %545
    %v547 = vrot.slane %v546, 4
    %v548 = vadd.f32 %v546, %v547
    %v549 = vrot.slane %v548, 2
    %v550 = vadd.f32 %v548, %v549
    %v551 = vrot.slane %v550, 1
    %v552 = vadd.f32 %v550, %v551
    %s553 = vtos %v552
    %v554 = vrcp.pop 512.0
    %s555 = vtos %v554
    %s556 = smul.f32 %s553, %s555
    %v557 = vstv %s556
    %v558 = vsub.f32 %v494, %v557
    %v559 = vsub.f32 %v495, %v557
    %v560 = vmul.f32 %v558, %v558
    %v561 = vmul.f32 %v559, %v559
    %v562 = vsel %vm263, %v560, 0.0
    %v563 = vsel %vm263, %v561, 0.0
    %v564 = vadd.f32 %v562, %v563
    %565 = vadd.xlane.f32.xlu0 %v564
    %v566 = vpop.xlane.xlu0 %565
    %v567 = vrot.slane %v566, 4
    %v568 = vadd.f32 %v566, %v567
    %v569 = vrot.slane %v568, 2
    %v570 = vadd.f32 %v568, %v569
    %v571 = vrot.slane %v570, 1
    %v572 = vadd.f32 %v570, %v571
    %s573 = vtos %v572
    %v574 = vrcp.pop 512.0
    %s575 = vtos %v574
    %s576 = smul.f32 %s573, %s575
    %s577 = sadd.f32 %s576, 1e-05
    %v578 = vstv %s577
    %v579 = vrsqrt.pop %v578
    %s580 = vtos %v579
    %v581 = vstv %s580
    %v582 = vmul.f32 %v558, %v581
    %v583 = vmul.f32 %v559, %v581
    %v584 = vmul.f32 %v582, %v180
    %v585 = vmul.f32 %v583, %v181
    %v586 = vadd.f32 %v584, %v182
    %v587 = vadd.f32 %v585, %v183
    %v588 = vadd.f32 %v540, %v176
    %v589 = vadd.f32 %v541, %v177
    %v590 = vadd.f32 %v586, %v178
    %v591 = vadd.f32 %v587, %v179
    %v592 = vld [vmem:[%s9] sm:$0xff]
    %v593 = vld [vmem:[%s9 + $0x8] sm:$0xff]
    %v594 = vld [vmem:[%s10] sm:$0xff]
    %v595 = vld [vmem:[%s10 + $0x8] sm:$0xff]
    %v598 = vrot.slane %v588, 6
    %v599 = vrot.slane %v589, 6
    %v600 = vsel %vm251, %v598, %v599
    %v604 = vsel %vm251, 0.0, %v598
    %v605 = vsel %vm251, %v599, 0.0
    %v608 = vrot.slane %v604, 1
    %v609 = vrot.slane %v600, 1
    %v610 = vsel %vm197, %v608, %v609
    %v611 = vrot.slane %v605, 1
    %v612 = vsel %vm197, %v609, %v611
    %613 = vrot.lane.b32.xlu0 %v610, 32
    %v614 = vpop.permute.xlu0 %613
    %615 = vrot.lane.b32.xlu0 %v612, 32
    %v616 = vpop.permute.xlu0 %615
    %v619 = vrot.slane %v604, 2
    %v620 = vrot.slane %v600, 2
    %v621 = vsel %vm209, %v619, %v620
    %v622 = vrot.slane %v605, 2
    %v623 = vsel %vm209, %v620, %v622
    %624 = vrot.lane.b32.xlu0 %v621, 64
    %v625 = vpop.permute.xlu0 %624
    %626 = vrot.lane.b32.xlu0 %v623, 64
    %v627 = vpop.permute.xlu0 %626
    %v630 = vrot.slane %v604, 3
    %v631 = vrot.slane %v600, 3
    %v632 = vsel %vm221, %v630, %v631
    %v633 = vrot.slane %v605, 3
    %v634 = vsel %vm221, %v631, %v633
    %635 = vrot.lane.b32.xlu0 %v632, 96
    %v636 = vpop.permute.xlu0 %635
    %637 = vrot.lane.b32.xlu0 %v634, 96
    %v638 = vpop.permute.xlu0 %637
    %v641 = vrot.slane %v604, 4
    %v642 = vrot.slane %v600, 4
    %v643 = vsel %vm87, %v641, %v642
    %v644 = vrot.slane %v605, 4
    %v645 = vsel %vm87, %v642, %v644
    %v646 = vsel %vm263, %v604, %v614
    %v647 = vsel %vm263, %v600, %v616
    %v648 = vsel %vm266, %v646, %v625
    %v649 = vsel %vm266, %v647, %v627
    %v650 = vsel %vm269, %v648, %v636
    %v651 = vsel %vm269, %v649, %v638
    %v654 = vrot.slane %v590, 6
    %v655 = vrot.slane %v591, 6
    %v656 = vsel %vm251, %v654, %v655
    %v660 = vsel %vm251, 0.0, %v654
    %v661 = vsel %vm251, %v655, 0.0
    %v664 = vrot.slane %v660, 1
    %v665 = vrot.slane %v656, 1
    %v666 = vsel %vm197, %v664, %v665
    %v667 = vrot.slane %v661, 1
    %v668 = vsel %vm197, %v665, %v667
    %669 = vrot.lane.b32.xlu0 %v666, 32
    %v670 = vpop.permute.xlu0 %669
    %671 = vrot.lane.b32.xlu0 %v668, 32
    %v672 = vpop.permute.xlu0 %671
    %v675 = vrot.slane %v660, 2
    %v676 = vrot.slane %v656, 2
    %v677 = vsel %vm209, %v675, %v676
    %v678 = vrot.slane %v661, 2
    %v679 = vsel %vm209, %v676, %v678
    %680 = vrot.lane.b32.xlu0 %v677, 64
    %v681 = vpop.permute.xlu0 %680
    %682 = vrot.lane.b32.xlu0 %v679, 64
    %v683 = vpop.permute.xlu0 %682
    %v686 = vrot.slane %v660, 3
    %v687 = vrot.slane %v656, 3
    %v688 = vsel %vm221, %v686, %v687
    %v689 = vrot.slane %v661, 3
    %v690 = vsel %vm221, %v687, %v689
    %691 = vrot.lane.b32.xlu0 %v688, 96
    %v692 = vpop.permute.xlu0 %691
    %693 = vrot.lane.b32.xlu0 %v690, 96
    %v694 = vpop.permute.xlu0 %693
    %v697 = vrot.slane %v660, 4
    %v698 = vrot.slane %v656, 4
    %v699 = vsel %vm87, %v697, %v698
    %v700 = vrot.slane %v661, 4
    %v701 = vsel %vm87, %v698, %v700
    %v702 = vsel %vm263, %v660, %v670
    %v703 = vsel %vm263, %v656, %v672
    %v704 = vsel %vm266, %v702, %v681
    %v705 = vsel %vm266, %v703, %v683
    %v706 = vsel %vm269, %v704, %v692
    %v707 = vsel %vm269, %v705, %v694
    %v708 = vld [vmem:[%s7] sm:$0xff]
    %v709 = vld [vmem:[%s7 + $0x8] sm:$0xff]
    %v710 = vld [vmem:[%s7 + $0x10] sm:$0xff]
    %v711 = vld [vmem:[%s7 + $0x18] sm:$0xff]
    %v712 = vld [vmem:[%s7 + $0x20] sm:$0xff]
    %v713 = vld [vmem:[%s7 + $0x28] sm:$0xff]
    %v714 = vld [vmem:[%s7 + $0x30] sm:$0xff]
    %v715 = vld [vmem:[%s7 + $0x38] sm:$0xff]
    %v716 = vld [vmem:[%s7 + $0x40] sm:$0xff]
    %v717 = vld [vmem:[%s7 + $0x48] sm:$0xff]
    %v718 = vld [vmem:[%s7 + $0x50] sm:$0xff]
    %v719 = vld [vmem:[%s7 + $0x58] sm:$0xff]
    %v720 = vld [vmem:[%s7 + $0x60] sm:$0xff]
    %v721 = vld [vmem:[%s7 + $0x68] sm:$0xff]
    %v722 = vld [vmem:[%s7 + $0x70] sm:$0xff]
    %v723 = vld [vmem:[%s7 + $0x78] sm:$0xff]
    %v724 = vld [vmem:[%s7 + $0x80] sm:$0xff]
    %v725 = vld [vmem:[%s7 + $0x88] sm:$0xff]
    %v726 = vld [vmem:[%s7 + $0x90] sm:$0xff]
    %v727 = vld [vmem:[%s7 + $0x98] sm:$0xff]
    %v728 = vld [vmem:[%s8] sm:$0x1]
    %v730 = vlaneseq
    %v731 = vshrl.u32 %v730, 7
    %v732 = vsub.s32 0, %v731
    %v733 = vrot.slane %v728, %v732
    %v735 = vsel %vm263, %v643, 0
    %v737 = vsel %vm263, %v645, 0
    %v739 = vsel %vm263, %v699, 0
    %v741 = vsel %vm263, %v701, 0
    %743 = vmatprep.subr.mxu0 0.0
    %744 = vmatpush1.msra.mxu0 %v723
    %745 = vmatprep.subr.mxu0 0.0
    %746 = vmatpush1.msra.mxu0 %v722
    %747 = vmatprep.subr.mxu0 0.0
    %748 = vmatpush1.msra.mxu0 %v721
    %749 = vmatprep.subr.mxu0 0.0
    %750 = vmatpush1.msra.mxu0 %v720
    %751 = vmatprep.subr.mxu0 0.0
    %752 = vmatpush1.msra.mxu0 %v719
    %753 = vmatprep.subr.mxu0 0.0
    %754 = vmatpush1.msra.mxu0 %v718
    %755 = vmatprep.subr.mxu0 0.0
    %756 = vmatpush1.msra.mxu0 %v717
    %757 = vmatprep.subr.mxu0 0.0
    %758 = vmatpush1.msra.mxu0 %v716
    %759 = vmatprep.subr.mxu0 0.0
    %760 = vmatpush1.msra.mxu0 %v715
    %761 = vmatprep.subr.mxu0 0.0
    %762 = vmatpush1.msra.mxu0 %v714
    %763 = vmatprep.subr.mxu0 0.0
    %764 = vmatpush1.msra.mxu0 %v713
    %765 = vmatprep.subr.mxu0 0.0
    %766 = vmatpush1.msra.mxu0 %v712
    %767 = vmatprep.subr.mxu0 0.0
    %768 = vmatpush1.msra.mxu0 %v711
    %769 = vmatprep.subr.mxu0 0.0
    %770 = vmatpush1.msra.mxu0 %v710
    %771 = vmatprep.subr.mxu0 0.0
    %772 = vmatpush1.msra.mxu0 %v709
    %773 = vmatprep.subr.mxu0 0.0
    %774 = vmatpush1.msra.mxu0 %v708
    %775 = vmatprep.subr.mxu0 0.0
    %776 = vmatpush2.msra.mxu0 0.0
    %777 = vmatprep.subr.mxu0 0.0
    %778 = vmatpush2.msra.mxu0 0.0
    %779 = vmatprep.subr.mxu0 0.0
    %780 = vmatpush2.msra.mxu0 0.0
    %781 = vmatprep.subr.mxu0 0.0
    %782 = vmatpush2.msra.mxu0 0.0
    %783 = vmatprep.subr.mxu0 0.0
    %784 = vmatpush2.msra.mxu0 0.0
    %785 = vmatprep.subr.mxu0 0.0
    %786 = vmatpush2.msra.mxu0 0.0
    %787 = vmatprep.subr.mxu0 0.0
    %788 = vmatpush2.msra.mxu0 0.0
    %789 = vmatprep.subr.mxu0 0.0
    %790 = vmatpush2.msra.mxu0 0.0
    %791 = vmatprep.subr.mxu0 0.0
    %792 = vmatpush2.msra.mxu0 0.0
    %793 = vmatprep.subr.mxu0 0.0
    %794 = vmatpush2.msra.mxu0 0.0
    %795 = vmatprep.subr.mxu0 0.0
    %796 = vmatpush2.msra.mxu0 0.0
    %797 = vmatprep.subr.mxu0 0.0
    %798 = vmatpush2.msra.mxu0 0.0
    %799 = vmatprep.subr.mxu0 0.0
    %800 = vmatpush2.msra.mxu0 %v727
    %801 = vmatprep.subr.mxu0 0.0
    %802 = vmatpush2.msra.mxu0 %v726
    %803 = vmatprep.subr.mxu0 0.0
    %804 = vmatpush2.msra.mxu0 %v725
    %805 = vmatprep.subr.mxu0 0.0
    %806 = vmatpush2.msra.mxu0 %v724
    %807 = vmatprep.mubr.f32.mxu0 %v735
    %808 = vmatmul.mubr.f32.gmra.mxu0 %v650
    %v809 = vpop.f32.mrf.mxu0
    %v810 = vadd.f32 %v733, %v809
    %v811 = vpop.f32.mrf.mxu0
    %812 = vmatprep.mubr.f32.mxu0 %v737
    %813 = vmatmul.mubr.f32.gmra.mxu0 %v651
    %v814 = vpop.f32.mrf.mxu0
    %v815 = vadd.f32 %v733, %v814
    %v816 = vpop.f32.mrf.mxu0
    %817 = vmatprep.mubr.f32.mxu0 %v739
    %818 = vmatmul.mubr.f32.gmra.mxu0 %v706
    %v819 = vpop.f32.mrf.mxu0
    %v820 = vadd.f32 %v733, %v819
    %v821 = vpop.f32.mrf.mxu0
    %822 = vmatprep.mubr.f32.mxu0 %v741
    %823 = vmatmul.mubr.f32.gmra.mxu0 %v707
    %v824 = vpop.f32.mrf.mxu0
    %v825 = vadd.f32 %v733, %v824
    %v826 = vpop.f32.mrf.mxu0
    %827 = vdwg.mxu0
    %v828 = vmax.f32 %v810, 0.0
    %v829 = vmax.f32 %v815, 0.0
    %v830 = vmax.f32 %v820, 0.0
    %v831 = vmax.f32 %v825, 0.0
    %v832 = vsel %vm263, %v828, 0.0
    %v833 = vsel %vm263, %v829, 0.0
    %v834 = vadd.f32 %v832, %v833
    %835 = vadd.xlane.f32.xlu0 %v834
    %v836 = vpop.xlane.xlu0 %835
    %v837 = vrot.slane %v836, 4
    %v838 = vadd.f32 %v836, %v837
    %v839 = vrot.slane %v838, 2
    %v840 = vadd.f32 %v838, %v839
    %v841 = vrot.slane %v840, 1
    %v842 = vadd.f32 %v840, %v841
    %s843 = vtos %v842
    %v844 = vrcp.pop 512.0
    %s845 = vtos %v844
    %s846 = smul.f32 %s843, %s845
    %v847 = vstv %s846
    %v848 = vsub.f32 %v828, %v847
    %v849 = vsub.f32 %v829, %v847
    %v850 = vmul.f32 %v848, %v848
    %v851 = vmul.f32 %v849, %v849
    %v852 = vsel %vm263, %v850, 0.0
    %v853 = vsel %vm263, %v851, 0.0
    %v854 = vadd.f32 %v852, %v853
    %855 = vadd.xlane.f32.xlu0 %v854
    %v856 = vpop.xlane.xlu0 %855
    %v857 = vrot.slane %v856, 4
    %v858 = vadd.f32 %v856, %v857
    %v859 = vrot.slane %v858, 2
    %v860 = vadd.f32 %v858, %v859
    %v861 = vrot.slane %v860, 1
    %v862 = vadd.f32 %v860, %v861
    %s863 = vtos %v862
    %v864 = vrcp.pop 512.0
    %s865 = vtos %v864
    %s866 = smul.f32 %s863, %s865
    %s867 = sadd.f32 %s866, 1e-05
    %v868 = vstv %s867
    %v869 = vrsqrt.pop %v868
    %s870 = vtos %v869
    %v871 = vstv %s870
    %v872 = vmul.f32 %v848, %v871
    %v873 = vmul.f32 %v849, %v871
    %v874 = vmul.f32 %v872, %v592
    %v875 = vmul.f32 %v873, %v593
    %v876 = vadd.f32 %v874, %v594
    %v877 = vadd.f32 %v875, %v595
    %v878 = vsel %vm263, %v830, 0.0
    %v879 = vsel %vm263, %v831, 0.0
    %v880 = vadd.f32 %v878, %v879
    %881 = vadd.xlane.f32.xlu0 %v880
    %v882 = vpop.xlane.xlu0 %881
    %v883 = vrot.slane %v882, 4
    %v884 = vadd.f32 %v882, %v883
    %v885 = vrot.slane %v884, 2
    %v886 = vadd.f32 %v884, %v885
    %v887 = vrot.slane %v886, 1
    %v888 = vadd.f32 %v886, %v887
    %s889 = vtos %v888
    %v890 = vrcp.pop 512.0
    %s891 = vtos %v890
    %s892 = smul.f32 %s889, %s891
    %v893 = vstv %s892
    %v894 = vsub.f32 %v830, %v893
    %v895 = vsub.f32 %v831, %v893
    %v896 = vmul.f32 %v894, %v894
    %v897 = vmul.f32 %v895, %v895
    %v898 = vsel %vm263, %v896, 0.0
    %v899 = vsel %vm263, %v897, 0.0
    %v900 = vadd.f32 %v898, %v899
    %901 = vadd.xlane.f32.xlu0 %v900
    %v902 = vpop.xlane.xlu0 %901
    %v903 = vrot.slane %v902, 4
    %v904 = vadd.f32 %v902, %v903
    %v905 = vrot.slane %v904, 2
    %v906 = vadd.f32 %v904, %v905
    %v907 = vrot.slane %v906, 1
    %v908 = vadd.f32 %v906, %v907
    %s909 = vtos %v908
    %v910 = vrcp.pop 512.0
    %s911 = vtos %v910
    %s912 = smul.f32 %s909, %s911
    %s913 = sadd.f32 %s912, 1e-05
    %v914 = vstv %s913
    %v915 = vrsqrt.pop %v914
    %s916 = vtos %v915
    %v917 = vstv %s916
    %v918 = vmul.f32 %v894, %v917
    %v919 = vmul.f32 %v895, %v917
    %v920 = vmul.f32 %v918, %v592
    %v921 = vmul.f32 %v919, %v593
    %v922 = vadd.f32 %v920, %v594
    %v923 = vadd.f32 %v921, %v595
    %v924 = vadd.f32 %v876, %v588
    %v925 = vadd.f32 %v877, %v589
    %v926 = vadd.f32 %v922, %v590
    %v927 = vadd.f32 %v923, %v591
    %v928 = vld [vmem:[%s13] sm:$0xff]
    %v929 = vld [vmem:[%s13 + $0x8] sm:$0xff]
    %v930 = vld [vmem:[%s14] sm:$0xff]
    %v931 = vld [vmem:[%s14 + $0x8] sm:$0xff]
    %vm934 = vcmask 1040384
    %v935 = vrot.slane %v924, 7
    %v936 = vrot.slane %v925, 7
    %v937 = vsel %vm934, %v935, %v936
    %v941 = vsel %vm934, 0.0, %v935
    %v942 = vsel %vm934, %v936, 0.0
    %v945 = vrot.slane %v941, 1
    %v946 = vrot.slane %v937, 1
    %v947 = vsel %vm197, %v945, %v946
    %v948 = vrot.slane %v942, 1
    %v949 = vsel %vm197, %v946, %v948
    %950 = vrot.lane.b32.xlu0 %v947, 32
    %v951 = vpop.permute.xlu0 %950
    %952 = vrot.lane.b32.xlu0 %v949, 32
    %v953 = vpop.permute.xlu0 %952
    %v956 = vrot.slane %v941, 2
    %v957 = vrot.slane %v937, 2
    %v958 = vsel %vm209, %v956, %v957
    %v959 = vrot.slane %v942, 2
    %v960 = vsel %vm209, %v957, %v959
    %961 = vrot.lane.b32.xlu0 %v958, 64
    %v962 = vpop.permute.xlu0 %961
    %963 = vrot.lane.b32.xlu0 %v960, 64
    %v964 = vpop.permute.xlu0 %963
    %v967 = vsel %vm263, %v941, %v951
    %v968 = vsel %vm263, %v937, %v953
    %v969 = vsel %vm266, %v967, %v962
    %v970 = vsel %vm266, %v968, %v964
    %v973 = vrot.slane %v926, 7
    %v974 = vrot.slane %v927, 7
    %v975 = vsel %vm934, %v973, %v974
    %v979 = vsel %vm934, 0.0, %v973
    %v980 = vsel %vm934, %v974, 0.0
    %v983 = vrot.slane %v979, 1
    %v984 = vrot.slane %v975, 1
    %v985 = vsel %vm197, %v983, %v984
    %v986 = vrot.slane %v980, 1
    %v987 = vsel %vm197, %v984, %v986
    %988 = vrot.lane.b32.xlu0 %v985, 32
    %v989 = vpop.permute.xlu0 %988
    %990 = vrot.lane.b32.xlu0 %v987, 32
    %v991 = vpop.permute.xlu0 %990
    %v994 = vrot.slane %v979, 2
    %v995 = vrot.slane %v975, 2
    %v996 = vsel %vm209, %v994, %v995
    %v997 = vrot.slane %v980, 2
    %v998 = vsel %vm209, %v995, %v997
    %999 = vrot.lane.b32.xlu0 %v996, 64
    %v1000 = vpop.permute.xlu0 %999
    %1001 = vrot.lane.b32.xlu0 %v998, 64
    %v1002 = vpop.permute.xlu0 %1001
    %v1005 = vsel %vm263, %v979, %v989
    %v1006 = vsel %vm263, %v975, %v991
    %v1007 = vsel %vm266, %v1005, %v1000
    %v1008 = vsel %vm266, %v1006, %v1002
    %v1009 = vld [vmem:[%s11] sm:$0xff]
    %v1010 = vld [vmem:[%s11 + $0x8] sm:$0xff]
    %v1011 = vld [vmem:[%s11 + $0x10] sm:$0xff]
    %v1012 = vld [vmem:[%s11 + $0x18] sm:$0xff]
    %v1013 = vld [vmem:[%s11 + $0x20] sm:$0xff]
    %v1014 = vld [vmem:[%s11 + $0x28] sm:$0xff]
    %v1015 = vld [vmem:[%s11 + $0x30] sm:$0xff]
    %v1016 = vld [vmem:[%s11 + $0x38] sm:$0xff]
    %v1017 = vld [vmem:[%s11 + $0x40] sm:$0xff]
    %v1018 = vld [vmem:[%s11 + $0x48] sm:$0xff]
    %v1019 = vld [vmem:[%s11 + $0x50] sm:$0xff]
    %v1020 = vld [vmem:[%s11 + $0x58] sm:$0xff]
    %v1021 = vld [vmem:[%s12] sm:$0x1]
    %v1023 = vlaneseq
    %v1024 = vshrl.u32 %v1023, 7
    %v1025 = vsub.s32 0, %v1024
    %v1026 = vrot.slane %v1021, %v1025
    %v1029 = vsel %vm269, %v969, 0
    %v1032 = vsel %vm269, %v970, 0
    %v1035 = vsel %vm269, %v1007, 0
    %v1038 = vsel %vm269, %v1008, 0
    %1040 = vmatprep.subr.mxu0 0.0
    %1041 = vmatpush1.msra.mxu0 0.0
    %1042 = vmatprep.subr.mxu0 0.0
    %1043 = vmatpush1.msra.mxu0 0.0
    %1044 = vmatprep.subr.mxu0 0.0
    %1045 = vmatpush1.msra.mxu0 0.0
    %1046 = vmatprep.subr.mxu0 0.0
    %1047 = vmatpush1.msra.mxu0 0.0
    %1048 = vmatprep.subr.mxu0 0.0
    %1049 = vmatpush1.msra.mxu0 %v1020
    %1050 = vmatprep.subr.mxu0 0.0
    %1051 = vmatpush1.msra.mxu0 %v1019
    %1052 = vmatprep.subr.mxu0 0.0
    %1053 = vmatpush1.msra.mxu0 %v1018
    %1054 = vmatprep.subr.mxu0 0.0
    %1055 = vmatpush1.msra.mxu0 %v1017
    %1056 = vmatprep.subr.mxu0 0.0
    %1057 = vmatpush1.msra.mxu0 %v1016
    %1058 = vmatprep.subr.mxu0 0.0
    %1059 = vmatpush1.msra.mxu0 %v1015
    %1060 = vmatprep.subr.mxu0 0.0
    %1061 = vmatpush1.msra.mxu0 %v1014
    %1062 = vmatprep.subr.mxu0 0.0
    %1063 = vmatpush1.msra.mxu0 %v1013
    %1064 = vmatprep.subr.mxu0 0.0
    %1065 = vmatpush1.msra.mxu0 %v1012
    %1066 = vmatprep.subr.mxu0 0.0
    %1067 = vmatpush1.msra.mxu0 %v1011
    %1068 = vmatprep.subr.mxu0 0.0
    %1069 = vmatpush1.msra.mxu0 %v1010
    %1070 = vmatprep.subr.mxu0 0.0
    %1071 = vmatpush1.msra.mxu0 %v1009
    %1072 = vmatprep.subr.mxu0 0.0
    %1073 = vmatpush2.msra.mxu0 0.0
    %1074 = vmatprep.subr.mxu0 0.0
    %1075 = vmatpush2.msra.mxu0 0.0
    %1076 = vmatprep.subr.mxu0 0.0
    %1077 = vmatpush2.msra.mxu0 0.0
    %1078 = vmatprep.subr.mxu0 0.0
    %1079 = vmatpush2.msra.mxu0 0.0
    %1080 = vmatprep.subr.mxu0 0.0
    %1081 = vmatpush2.msra.mxu0 0.0
    %1082 = vmatprep.subr.mxu0 0.0
    %1083 = vmatpush2.msra.mxu0 0.0
    %1084 = vmatprep.subr.mxu0 0.0
    %1085 = vmatpush2.msra.mxu0 0.0
    %1086 = vmatprep.subr.mxu0 0.0
    %1087 = vmatpush2.msra.mxu0 0.0
    %1088 = vmatprep.subr.mxu0 0.0
    %1089 = vmatpush2.msra.mxu0 0.0
    %1090 = vmatprep.subr.mxu0 0.0
    %1091 = vmatpush2.msra.mxu0 0.0
    %1092 = vmatprep.subr.mxu0 0.0
    %1093 = vmatpush2.msra.mxu0 0.0
    %1094 = vmatprep.subr.mxu0 0.0
    %1095 = vmatpush2.msra.mxu0 0.0
    %1096 = vmatprep.subr.mxu0 0.0
    %1097 = vmatpush2.msra.mxu0 0.0
    %1098 = vmatprep.subr.mxu0 0.0
    %1099 = vmatpush2.msra.mxu0 0.0
    %1100 = vmatprep.subr.mxu0 0.0
    %1101 = vmatpush2.msra.mxu0 0.0
    %1102 = vmatprep.subr.mxu0 0.0
    %1103 = vmatpush2.msra.mxu0 0.0
    %1104 = vmatprep.mubr.f32.mxu0 0.0
    %1105 = vmatmul.mubr.f32.gmra.mxu0 %v1029
    %v1106 = vpop.f32.mrf.mxu0
    %v1107 = vadd.f32 %v1026, %v1106
    %v1108 = vpop.f32.mrf.mxu0
    %1109 = vmatprep.mubr.f32.mxu0 0.0
    %1110 = vmatmul.mubr.f32.gmra.mxu0 %v1032
    %v1111 = vpop.f32.mrf.mxu0
    %v1112 = vadd.f32 %v1026, %v1111
    %v1113 = vpop.f32.mrf.mxu0
    %1114 = vmatprep.mubr.f32.mxu0 0.0
    %1115 = vmatmul.mubr.f32.gmra.mxu0 %v1035
    %v1116 = vpop.f32.mrf.mxu0
    %v1117 = vadd.f32 %v1026, %v1116
    %v1118 = vpop.f32.mrf.mxu0
    %1119 = vmatprep.mubr.f32.mxu0 0.0
    %1120 = vmatmul.mubr.f32.gmra.mxu0 %v1038
    %v1121 = vpop.f32.mrf.mxu0
    %v1122 = vadd.f32 %v1026, %v1121
    %v1123 = vpop.f32.mrf.mxu0
    %1124 = vdwg.mxu0
    %v1125 = vmax.f32 %v1107, 0.0
    %v1126 = vmax.f32 %v1112, 0.0
    %v1127 = vmax.f32 %v1117, 0.0
    %v1128 = vmax.f32 %v1122, 0.0
    %v1129 = vsel %vm263, %v1125, 0.0
    %v1130 = vsel %vm263, %v1126, 0.0
    %v1131 = vadd.f32 %v1129, %v1130
    %1132 = vadd.xlane.f32.xlu0 %v1131
    %v1133 = vpop.xlane.xlu0 %1132
    %v1134 = vrot.slane %v1133, 4
    %v1135 = vadd.f32 %v1133, %v1134
    %v1136 = vrot.slane %v1135, 2
    %v1137 = vadd.f32 %v1135, %v1136
    %v1138 = vrot.slane %v1137, 1
    %v1139 = vadd.f32 %v1137, %v1138
    %s1140 = vtos %v1139
    %v1141 = vrcp.pop 512.0
    %s1142 = vtos %v1141
    %s1143 = smul.f32 %s1140, %s1142
    %v1144 = vstv %s1143
    %v1145 = vsub.f32 %v1125, %v1144
    %v1146 = vsub.f32 %v1126, %v1144
    %v1147 = vmul.f32 %v1145, %v1145
    %v1148 = vmul.f32 %v1146, %v1146
    %v1149 = vsel %vm263, %v1147, 0.0
    %v1150 = vsel %vm263, %v1148, 0.0
    %v1151 = vadd.f32 %v1149, %v1150
    %1152 = vadd.xlane.f32.xlu0 %v1151
    %v1153 = vpop.xlane.xlu0 %1152
    %v1154 = vrot.slane %v1153, 4
    %v1155 = vadd.f32 %v1153, %v1154
    %v1156 = vrot.slane %v1155, 2
    %v1157 = vadd.f32 %v1155, %v1156
    %v1158 = vrot.slane %v1157, 1
    %v1159 = vadd.f32 %v1157, %v1158
    %s1160 = vtos %v1159
    %v1161 = vrcp.pop 512.0
    %s1162 = vtos %v1161
    %s1163 = smul.f32 %s1160, %s1162
    %s1164 = sadd.f32 %s1163, 1e-05
    %v1165 = vstv %s1164
    %v1166 = vrsqrt.pop %v1165
    %s1167 = vtos %v1166
    %v1168 = vstv %s1167
    %v1169 = vmul.f32 %v1145, %v1168
    %v1170 = vmul.f32 %v1146, %v1168
    %v1171 = vmul.f32 %v1169, %v928
    %v1172 = vmul.f32 %v1170, %v929
    %v1173 = vadd.f32 %v1171, %v930
    %v1174 = vadd.f32 %v1172, %v931
    %v1175 = vsel %vm263, %v1127, 0.0
    %v1176 = vsel %vm263, %v1128, 0.0
    %v1177 = vadd.f32 %v1175, %v1176
    %1178 = vadd.xlane.f32.xlu0 %v1177
    %v1179 = vpop.xlane.xlu0 %1178
    %v1180 = vrot.slane %v1179, 4
    %v1181 = vadd.f32 %v1179, %v1180
    %v1182 = vrot.slane %v1181, 2
    %v1183 = vadd.f32 %v1181, %v1182
    %v1184 = vrot.slane %v1183, 1
    %v1185 = vadd.f32 %v1183, %v1184
    %s1186 = vtos %v1185
    %v1187 = vrcp.pop 512.0
    %s1188 = vtos %v1187
    %s1189 = smul.f32 %s1186, %s1188
    %v1190 = vstv %s1189
    %v1191 = vsub.f32 %v1127, %v1190
    %v1192 = vsub.f32 %v1128, %v1190
    %v1193 = vmul.f32 %v1191, %v1191
    %v1194 = vmul.f32 %v1192, %v1192
    %v1195 = vsel %vm263, %v1193, 0.0
    %v1196 = vsel %vm263, %v1194, 0.0
    %v1197 = vadd.f32 %v1195, %v1196
    %1198 = vadd.xlane.f32.xlu0 %v1197
    %v1199 = vpop.xlane.xlu0 %1198
    %v1200 = vrot.slane %v1199, 4
    %v1201 = vadd.f32 %v1199, %v1200
    %v1202 = vrot.slane %v1201, 2
    %v1203 = vadd.f32 %v1201, %v1202
    %v1204 = vrot.slane %v1203, 1
    %v1205 = vadd.f32 %v1203, %v1204
    %s1206 = vtos %v1205
    %v1207 = vrcp.pop 512.0
    %s1208 = vtos %v1207
    %s1209 = smul.f32 %s1206, %s1208
    %s1210 = sadd.f32 %s1209, 1e-05
    %v1211 = vstv %s1210
    %v1212 = vrsqrt.pop %v1211
    %s1213 = vtos %v1212
    %v1214 = vstv %s1213
    %v1215 = vmul.f32 %v1191, %v1214
    %v1216 = vmul.f32 %v1192, %v1214
    %v1217 = vmul.f32 %v1215, %v928
    %v1218 = vmul.f32 %v1216, %v929
    %v1219 = vadd.f32 %v1217, %v930
    %v1220 = vadd.f32 %v1218, %v931
    %v1221 = vadd.f32 %v1173, %v924
    %v1222 = vadd.f32 %v1174, %v925
    %v1223 = vadd.f32 %v1219, %v926
    %v1224 = vadd.f32 %v1220, %v927
    %v1225 = vld [vmem:[%s15] sm:$0xff]
    %v1226 = vld [vmem:[%s15 + $0x8] sm:$0xff]
    %v1227 = vld [vmem:[%s15 + $0x10] sm:$0xff]
    %v1228 = vld [vmem:[%s15 + $0x18] sm:$0xff]
    %v1229 = vld [vmem:[%s17] sm:$0x1]
    %v1231 = vlaneseq
    %v1232 = vshrl.u32 %v1231, 7
    %v1233 = vsub.s32 0, %v1232
    %v1234 = vrot.slane %v1229, %v1233
    %v1237 = vsel %vm263, %v1221, 0
    %v1240 = vsel %vm263, %v1222, 0
    %v1243 = vsel %vm263, %v1223, 0
    %v1246 = vsel %vm263, %v1224, 0
    %1248 = vmatprep.subr.mxu0 0.0
    %1249 = vmatpush1.msra.mxu0 0.0
    %1250 = vmatprep.subr.mxu0 0.0
    %1251 = vmatpush1.msra.mxu0 0.0
    %1252 = vmatprep.subr.mxu0 0.0
    %1253 = vmatpush1.msra.mxu0 0.0
    %1254 = vmatprep.subr.mxu0 0.0
    %1255 = vmatpush1.msra.mxu0 0.0
    %1256 = vmatprep.subr.mxu0 0.0
    %1257 = vmatpush1.msra.mxu0 0.0
    %1258 = vmatprep.subr.mxu0 0.0
    %1259 = vmatpush1.msra.mxu0 0.0
    %1260 = vmatprep.subr.mxu0 0.0
    %1261 = vmatpush1.msra.mxu0 0.0
    %1262 = vmatprep.subr.mxu0 0.0
    %1263 = vmatpush1.msra.mxu0 0.0
    %1264 = vmatprep.subr.mxu0 0.0
    %1265 = vmatpush1.msra.mxu0 0.0
    %1266 = vmatprep.subr.mxu0 0.0
    %1267 = vmatpush1.msra.mxu0 0.0
    %1268 = vmatprep.subr.mxu0 0.0
    %1269 = vmatpush1.msra.mxu0 0.0
    %1270 = vmatprep.subr.mxu0 0.0
    %1271 = vmatpush1.msra.mxu0 0.0
    %1272 = vmatprep.subr.mxu0 0.0
    %1273 = vmatpush1.msra.mxu0 %v1228
    %1274 = vmatprep.subr.mxu0 0.0
    %1275 = vmatpush1.msra.mxu0 %v1227
    %1276 = vmatprep.subr.mxu0 0.0
    %1277 = vmatpush1.msra.mxu0 %v1226
    %1278 = vmatprep.subr.mxu0 0.0
    %1279 = vmatpush1.msra.mxu0 %v1225
    %1280 = vmatprep.subr.mxu0 0.0
    %1281 = vmatpush2.msra.mxu0 0.0
    %1282 = vmatprep.subr.mxu0 0.0
    %1283 = vmatpush2.msra.mxu0 0.0
    %1284 = vmatprep.subr.mxu0 0.0
    %1285 = vmatpush2.msra.mxu0 0.0
    %1286 = vmatprep.subr.mxu0 0.0
    %1287 = vmatpush2.msra.mxu0 0.0
    %1288 = vmatprep.subr.mxu0 0.0
    %1289 = vmatpush2.msra.mxu0 0.0
    %1290 = vmatprep.subr.mxu0 0.0
    %1291 = vmatpush2.msra.mxu0 0.0
    %1292 = vmatprep.subr.mxu0 0.0
    %1293 = vmatpush2.msra.mxu0 0.0
    %1294 = vmatprep.subr.mxu0 0.0
    %1295 = vmatpush2.msra.mxu0 0.0
    %1296 = vmatprep.subr.mxu0 0.0
    %1297 = vmatpush2.msra.mxu0 0.0
    %1298 = vmatprep.subr.mxu0 0.0
    %1299 = vmatpush2.msra.mxu0 0.0
    %1300 = vmatprep.subr.mxu0 0.0
    %1301 = vmatpush2.msra.mxu0 0.0
    %1302 = vmatprep.subr.mxu0 0.0
    %1303 = vmatpush2.msra.mxu0 0.0
    %1304 = vmatprep.subr.mxu0 0.0
    %1305 = vmatpush2.msra.mxu0 0.0
    %1306 = vmatprep.subr.mxu0 0.0
    %1307 = vmatpush2.msra.mxu0 0.0
    %1308 = vmatprep.subr.mxu0 0.0
    %1309 = vmatpush2.msra.mxu0 0.0
    %1310 = vmatprep.subr.mxu0 0.0
    %1311 = vmatpush2.msra.mxu0 0.0
    %1312 = vmatprep.mubr.f32.mxu0 0.0
    %1313 = vmatmul.mubr.f32.gmra.mxu0 %v1237
    %v1314 = vpop.f32.mrf.mxu0
    %v1315 = vadd.f32 %v1234, %v1314
    %v1316 = vpop.f32.mrf.mxu0
    %1317 = vmatprep.mubr.f32.mxu0 0.0
    %1318 = vmatmul.mubr.f32.gmra.mxu0 %v1240
    %v1319 = vpop.f32.mrf.mxu0
    %v1320 = vadd.f32 %v1234, %v1319
    %v1321 = vpop.f32.mrf.mxu0
    %1322 = vmatprep.mubr.f32.mxu0 0.0
    %1323 = vmatmul.mubr.f32.gmra.mxu0 %v1243
    %v1324 = vpop.f32.mrf.mxu0
    %v1325 = vadd.f32 %v1234, %v1324
    %v1326 = vpop.f32.mrf.mxu0
    %1327 = vmatprep.mubr.f32.mxu0 0.0
    %1328 = vmatmul.mubr.f32.gmra.mxu0 %v1246
    %v1329 = vpop.f32.mrf.mxu0
    %v1330 = vadd.f32 %v1234, %v1329
    %v1331 = vpop.f32.mrf.mxu0
    %1332 = vdwg.mxu0
    %v1333 = vld [vmem:[%s16] sm:$0xff]
    %v1334 = vld [vmem:[%s16 + $0x8] sm:$0xff]
    %v1336 = vrot.slane %v1325, 7
    %v1338 = vsel %vm934, %v1315, %v1336
    %vm1339 = vcmask 130048
    %v1341 = vsel %vm1339, 0.0, 0
    %1343 = vmatprep.subr.mxu0 0.0
    %1344 = vmatpush1.msra.mxu0 0.0
    %1345 = vmatprep.subr.mxu0 0.0
    %1346 = vmatpush1.msra.mxu0 0.0
    %1347 = vmatprep.subr.mxu0 0.0
    %1348 = vmatpush1.msra.mxu0 0.0
    %1349 = vmatprep.subr.mxu0 0.0
    %1350 = vmatpush1.msra.mxu0 0.0
    %1351 = vmatprep.subr.mxu0 0.0
    %1352 = vmatpush1.msra.mxu0 0.0
    %1353 = vmatprep.subr.mxu0 0.0
    %1354 = vmatpush1.msra.mxu0 0.0
    %1355 = vmatprep.subr.mxu0 0.0
    %1356 = vmatpush1.msra.mxu0 0.0
    %1357 = vmatprep.subr.mxu0 0.0
    %1358 = vmatpush1.msra.mxu0 0.0
    %1359 = vmatprep.subr.mxu0 0.0
    %1360 = vmatpush1.msra.mxu0 0.0
    %1361 = vmatprep.subr.mxu0 0.0
    %1362 = vmatpush1.msra.mxu0 0.0
    %1363 = vmatprep.subr.mxu0 0.0
    %1364 = vmatpush1.msra.mxu0 0.0
    %1365 = vmatprep.subr.mxu0 0.0
    %1366 = vmatpush1.msra.mxu0 0.0
    %1367 = vmatprep.subr.mxu0 0.0
    %1368 = vmatpush1.msra.mxu0 0.0
    %1369 = vmatprep.subr.mxu0 0.0
    %1370 = vmatpush1.msra.mxu0 0.0
    %1371 = vmatprep.subr.mxu0 0.0
    %1372 = vmatpush1.msra.mxu0 %v1334
    %1373 = vmatprep.subr.mxu0 0.0
    %1374 = vmatpush1.msra.mxu0 %v1333
    %1375 = vmatprep.subr.mxu0 0.0
    %1376 = vmatpush2.msra.mxu0 0.0
    %1377 = vmatprep.subr.mxu0 0.0
    %1378 = vmatpush2.msra.mxu0 0.0
    %1379 = vmatprep.subr.mxu0 0.0
    %1380 = vmatpush2.msra.mxu0 0.0
    %1381 = vmatprep.subr.mxu0 0.0
    %1382 = vmatpush2.msra.mxu0 0.0
    %1383 = vmatprep.subr.mxu0 0.0
    %1384 = vmatpush2.msra.mxu0 0.0
    %1385 = vmatprep.subr.mxu0 0.0
    %1386 = vmatpush2.msra.mxu0 0.0
    %1387 = vmatprep.subr.mxu0 0.0
    %1388 = vmatpush2.msra.mxu0 0.0
    %1389 = vmatprep.subr.mxu0 0.0
    %1390 = vmatpush2.msra.mxu0 0.0
    %1391 = vmatprep.subr.mxu0 0.0
    %1392 = vmatpush2.msra.mxu0 0.0
    %1393 = vmatprep.subr.mxu0 0.0
    %1394 = vmatpush2.msra.mxu0 0.0
    %1395 = vmatprep.subr.mxu0 0.0
    %1396 = vmatpush2.msra.mxu0 0.0
    %1397 = vmatprep.subr.mxu0 0.0
    %1398 = vmatpush2.msra.mxu0 0.0
    %1399 = vmatprep.subr.mxu0 0.0
    %1400 = vmatpush2.msra.mxu0 0.0
    %1401 = vmatprep.subr.mxu0 0.0
    %1402 = vmatpush2.msra.mxu0 0.0
    %1403 = vmatprep.subr.mxu0 0.0
    %1404 = vmatpush2.msra.mxu0 0.0
    %1405 = vmatprep.subr.mxu0 0.0
    %1406 = vmatpush2.msra.mxu0 0.0
    %1407 = vmatprep.mubr.f32.mxu0 0.0
    %1408 = vmatmul.mubr.f32.gmra.mxu0 %v1341
    %v1409 = vpop.f32.mrf.mxu0
    %v1410 = vadd.f32 0.0, %v1409
    %v1411 = vpop.f32.mrf.mxu0
    %1412 = vdwg.mxu0
    %v1413 = vadd.f32 %v1338, %v1410
    %v1414 = vxor.u32 %v1413, 2147483648
    %v1415 = vmul.f32 %v1414, 1.442695
    %v1416 = vpow.pop %v1415
    %v1417 = vadd.f32 %v1416, 1.0
    %v1418 = vrcp.pop %v1417
    %v1419 = vmul.f32 1.0, %v1418
    %v1420 = vtanh.pop %v1413
    %v1421 = vmul.f32 %v1419, 0.0
    %1423 = vrot.lane.b32.xlu0 %v1420, 96
    %v1424 = vpop.permute.xlu0 %1423
    %v1426 = vmul.f32 %v1419, %v1424
    %1428 = vrot.lane.b32.xlu0 %v1426, 16
    %v1429 = vpop.permute.xlu0 %1428
    %v1431 = vadd.f32 %v1421, %v1429
    %v1432 = vtanh.pop %v1431
    %1434 = vrot.lane.b32.xlu0 %v1432, 32
    %v1435 = vpop.permute.xlu0 %1434
    %v1437 = vmul.f32 %v1419, %v1435
    %v1439 = vrot.slane %v1315, 1
    %v1441 = vsel %vm934, %v1439, %v1325
    %1443 = vrot.lane.b32.xlu0 %v1437, 80
    %v1444 = vpop.permute.xlu0 %1443
    %v1445 = vsel %vm1339, %v1444, 0
    %1447 = vmatprep.subr.mxu0 0.0
    %1448 = vmatpush1.msra.mxu0 0.0
    %1449 = vmatprep.subr.mxu0 0.0
    %1450 = vmatpush1.msra.mxu0 0.0
    %1451 = vmatprep.subr.mxu0 0.0
    %1452 = vmatpush1.msra.mxu0 0.0
    %1453 = vmatprep.subr.mxu0 0.0
    %1454 = vmatpush1.msra.mxu0 0.0
    %1455 = vmatprep.subr.mxu0 0.0
    %1456 = vmatpush1.msra.mxu0 0.0
    %1457 = vmatprep.subr.mxu0 0.0
    %1458 = vmatpush1.msra.mxu0 0.0
    %1459 = vmatprep.subr.mxu0 0.0
    %1460 = vmatpush1.msra.mxu0 0.0
    %1461 = vmatprep.subr.mxu0 0.0
    %1462 = vmatpush1.msra.mxu0 0.0
    %1463 = vmatprep.subr.mxu0 0.0
    %1464 = vmatpush1.msra.mxu0 0.0
    %1465 = vmatprep.subr.mxu0 0.0
    %1466 = vmatpush1.msra.mxu0 0.0
    %1467 = vmatprep.subr.mxu0 0.0
    %1468 = vmatpush1.msra.mxu0 0.0
    %1469 = vmatprep.subr.mxu0 0.0
    %1470 = vmatpush1.msra.mxu0 0.0
    %1471 = vmatprep.subr.mxu0 0.0
    %1472 = vmatpush1.msra.mxu0 0.0
    %1473 = vmatprep.subr.mxu0 0.0
    %1474 = vmatpush1.msra.mxu0 0.0
    %1475 = vmatprep.subr.mxu0 0.0
    %1476 = vmatpush1.msra.mxu0 %v1334
    %1477 = vmatprep.subr.mxu0 0.0
    %1478 = vmatpush1.msra.mxu0 %v1333
    %1479 = vmatprep.subr.mxu0 0.0
    %1480 = vmatpush2.msra.mxu0 0.0
    %1481 = vmatprep.subr.mxu0 0.0
    %1482 = vmatpush2.msra.mxu0 0.0
    %1483 = vmatprep.subr.mxu0 0.0
    %1484 = vmatpush2.msra.mxu0 0.0
    %1485 = vmatprep.subr.mxu0 0.0
    %1486 = vmatpush2.msra.mxu0 0.0
    %1487 = vmatprep.subr.mxu0 0.0
    %1488 = vmatpush2.msra.mxu0 0.0
    %1489 = vmatprep.subr.mxu0 0.0
    %1490 = vmatpush2.msra.mxu0 0.0
    %1491 = vmatprep.subr.mxu0 0.0
    %1492 = vmatpush2.msra.mxu0 0.0
    %1493 = vmatprep.subr.mxu0 0.0
    %1494 = vmatpush2.msra.mxu0 0.0
    %1495 = vmatprep.subr.mxu0 0.0
    %1496 = vmatpush2.msra.mxu0 0.0
    %1497 = vmatprep.subr.mxu0 0.0
    %1498 = vmatpush2.msra.mxu0 0.0
    %1499 = vmatprep.subr.mxu0 0.0
    %1500 = vmatpush2.msra.mxu0 0.0
    %1501 = vmatprep.subr.mxu0 0.0
    %1502 = vmatpush2.msra.mxu0 0.0
    %1503 = vmatprep.subr.mxu0 0.0
    %1504 = vmatpush2.msra.mxu0 0.0
    %1505 = vmatprep.subr.mxu0 0.0
    %1506 = vmatpush2.msra.mxu0 0.0
    %1507 = vmatprep.subr.mxu0 0.0
    %1508 = vmatpush2.msra.mxu0 0.0
    %1509 = vmatprep.subr.mxu0 0.0
    %1510 = vmatpush2.msra.mxu0 0.0
    %1511 = vmatprep.mubr.f32.mxu0 0.0
    %1512 = vmatmul.mubr.f32.gmra.mxu0 %v1445
    %v1513 = vpop.f32.mrf.mxu0
    %v1514 = vadd.f32 0.0, %v1513
    %v1515 = vpop.f32.mrf.mxu0
    %1516 = vdwg.mxu0
    %v1517 = vadd.f32 %v1441, %v1514
    %v1518 = vxor.u32 %v1517, 2147483648
    %v1519 = vmul.f32 %v1518, 1.442695
    %v1520 = vpow.pop %v1519
    %v1521 = vadd.f32 %v1520, 1.0
    %v1522 = vrcp.pop %v1521
    %v1523 = vmul.f32 1.0, %v1522
    %v1524 = vtanh.pop %v1517
    %v1525 = vmul.f32 %v1523, %v1431
    %1527 = vrot.lane.b32.xlu0 %v1524, 96
    %v1528 = vpop.permute.xlu0 %1527
    %v1530 = vmul.f32 %v1523, %v1528
    %1532 = vrot.lane.b32.xlu0 %v1530, 16
    %v1533 = vpop.permute.xlu0 %1532
    %v1535 = vadd.f32 %v1525, %v1533
    %v1536 = vtanh.pop %v1535
    %1538 = vrot.lane.b32.xlu0 %v1536, 32
    %v1539 = vpop.permute.xlu0 %1538
    %v1541 = vmul.f32 %v1523, %v1539
    %v1542 = vrot.slane %v1315, 2
    %v1544 = vrot.slane %v1325, 1
    %v1546 = vsel %vm934, %v1542, %v1544
    %1548 = vrot.lane.b32.xlu0 %v1541, 80
    %v1549 = vpop.permute.xlu0 %1548
    %v1550 = vsel %vm1339, %v1549, 0
    %1552 = vmatprep.subr.mxu0 0.0
    %1553 = vmatpush1.msra.mxu0 0.0
    %1554 = vmatprep.subr.mxu0 0.0
    %1555 = vmatpush1.msra.mxu0 0.0
    %1556 = vmatprep.subr.mxu0 0.0
    %1557 = vmatpush1.msra.mxu0 0.0
    %1558 = vmatprep.subr.mxu0 0.0
    %1559 = vmatpush1.msra.mxu0 0.0
    %1560 = vmatprep.subr.mxu0 0.0
    %1561 = vmatpush1.msra.mxu0 0.0
    %1562 = vmatprep.subr.mxu0 0.0
    %1563 = vmatpush1.msra.mxu0 0.0
    %1564 = vmatprep.subr.mxu0 0.0
    %1565 = vmatpush1.msra.mxu0 0.0
    %1566 = vmatprep.subr.mxu0 0.0
    %1567 = vmatpush1.msra.mxu0 0.0
    %1568 = vmatprep.subr.mxu0 0.0
    %1569 = vmatpush1.msra.mxu0 0.0
    %1570 = vmatprep.subr.mxu0 0.0
    %1571 = vmatpush1.msra.mxu0 0.0
    %1572 = vmatprep.subr.mxu0 0.0
    %1573 = vmatpush1.msra.mxu0 0.0
    %1574 = vmatprep.subr.mxu0 0.0
    %1575 = vmatpush1.msra.mxu0 0.0
    %1576 = vmatprep.subr.mxu0 0.0
    %1577 = vmatpush1.msra.mxu0 0.0
    %1578 = vmatprep.subr.mxu0 0.0
    %1579 = vmatpush1.msra.mxu0 0.0
    %1580 = vmatprep.subr.mxu0 0.0
    %1581 = vmatpush1.msra.mxu0 %v1334
    %1582 = vmatprep.subr.mxu0 0.0
    %1583 = vmatpush1.msra.mxu0 %v1333
    %1584 = vmatprep.subr.mxu0 0.0
    %1585 = vmatpush2.msra.mxu0 0.0
    %1586 = vmatprep.subr.mxu0 0.0
    %1587 = vmatpush2.msra.mxu0 0.0
    %1588 = vmatprep.subr.mxu0 0.0
    %1589 = vmatpush2.msra.mxu0 0.0
    %1590 = vmatprep.subr.mxu0 0.0
    %1591 = vmatpush2.msra.mxu0 0.0
    %1592 = vmatprep.subr.mxu0 0.0
    %1593 = vmatpush2.msra.mxu0 0.0
    %1594 = vmatprep.subr.mxu0 0.0
    %1595 = vmatpush2.msra.mxu0 0.0
    %1596 = vmatprep.subr.mxu0 0.0
    %1597 = vmatpush2.msra.mxu0 0.0
    %1598 = vmatprep.subr.mxu0 0.0
    %1599 = vmatpush2.msra.mxu0 0.0
    %1600 = vmatprep.subr.mxu0 0.0
    %1601 = vmatpush2.msra.mxu0 0.0
    %1602 = vmatprep.subr.mxu0 0.0
    %1603 = vmatpush2.msra.mxu0 0.0
    %1604 = vmatprep.subr.mxu0 0.0
    %1605 = vmatpush2.msra.mxu0 0.0
    %1606 = vmatprep.subr.mxu0 0.0
    %1607 = vmatpush2.msra.mxu0 0.0
    %1608 = vmatprep.subr.mxu0 0.0
    %1609 = vmatpush2.msra.mxu0 0.0
    %1610 = vmatprep.subr.mxu0 0.0
    %1611 = vmatpush2.msra.mxu0 0.0
    %1612 = vmatprep.subr.mxu0 0.0
    %1613 = vmatpush2.msra.mxu0 0.0
    %1614 = vmatprep.subr.mxu0 0.0
    %1615 = vmatpush2.msra.mxu0 0.0
    %1616 = vmatprep.mubr.f32.mxu0 0.0
    %1617 = vmatmul.mubr.f32.gmra.mxu0 %v1550
    %v1618 = vpop.f32.mrf.mxu0
    %v1619 = vadd.f32 0.0, %v1618
    %v1620 = vpop.f32.mrf.mxu0
    %1621 = vdwg.mxu0
    %v1622 = vadd.f32 %v1546, %v1619
    %v1623 = vxor.u32 %v1622, 2147483648
    %v1624 = vmul.f32 %v1623, 1.442695
    %v1625 = vpow.pop %v1624
    %v1626 = vadd.f32 %v1625, 1.0
    %v1627 = vrcp.pop %v1626
    %v1628 = vmul.f32 1.0, %v1627
    %v1629 = vtanh.pop %v1622
    %v1630 = vmul.f32 %v1628, %v1535
    %1632 = vrot.lane.b32.xlu0 %v1629, 96
    %v1633 = vpop.permute.xlu0 %1632
    %v1635 = vmul.f32 %v1628, %v1633
    %1637 = vrot.lane.b32.xlu0 %v1635, 16
    %v1638 = vpop.permute.xlu0 %1637
    %v1640 = vadd.f32 %v1630, %v1638
    %v1641 = vtanh.pop %v1640
    %1643 = vrot.lane.b32.xlu0 %v1641, 32
    %v1644 = vpop.permute.xlu0 %1643
    %v1646 = vmul.f32 %v1628, %v1644
    %v1647 = vrot.slane %v1315, 3
    %v1649 = vrot.slane %v1325, 2
    %v1651 = vsel %vm934, %v1647, %v1649
    %1653 = vrot.lane.b32.xlu0 %v1646, 80
    %v1654 = vpop.permute.xlu0 %1653
    %v1655 = vsel %vm1339, %v1654, 0
    %1657 = vmatprep.subr.mxu0 0.0
    %1658 = vmatpush1.msra.mxu0 0.0
    %1659 = vmatprep.subr.mxu0 0.0
    %1660 = vmatpush1.msra.mxu0 0.0
    %1661 = vmatprep.subr.mxu0 0.0
    %1662 = vmatpush1.msra.mxu0 0.0
    %1663 = vmatprep.subr.mxu0 0.0
    %1664 = vmatpush1.msra.mxu0 0.0
    %1665 = vmatprep.subr.mxu0 0.0
    %1666 = vmatpush1.msra.mxu0 0.0
    %1667 = vmatprep.subr.mxu0 0.0
    %1668 = vmatpush1.msra.mxu0 0.0
    %1669 = vmatprep.subr.mxu0 0.0
    %1670 = vmatpush1.msra.mxu0 0.0
    %1671 = vmatprep.subr.mxu0 0.0
    %1672 = vmatpush1.msra.mxu0 0.0
    %1673 = vmatprep.subr.mxu0 0.0
    %1674 = vmatpush1.msra.mxu0 0.0
    %1675 = vmatprep.subr.mxu0 0.0
    %1676 = vmatpush1.msra.mxu0 0.0
    %1677 = vmatprep.subr.mxu0 0.0
    %1678 = vmatpush1.msra.mxu0 0.0
    %1679 = vmatprep.subr.mxu0 0.0
    %1680 = vmatpush1.msra.mxu0 0.0
    %1681 = vmatprep.subr.mxu0 0.0
    %1682 = vmatpush1.msra.mxu0 0.0
    %1683 = vmatprep.subr.mxu0 0.0
    %1684 = vmatpush1.msra.mxu0 0.0
    %1685 = vmatprep.subr.mxu0 0.0
    %1686 = vmatpush1.msra.mxu0 %v1334
    %1687 = vmatprep.subr.mxu0 0.0
    %1688 = vmatpush1.msra.mxu0 %v1333
    %1689 = vmatprep.subr.mxu0 0.0
    %1690 = vmatpush2.msra.mxu0 0.0
    %1691 = vmatprep.subr.mxu0 0.0
    %1692 = vmatpush2.msra.mxu0 0.0
    %1693 = vmatprep.subr.mxu0 0.0
    %1694 = vmatpush2.msra.mxu0 0.0
    %1695 = vmatprep.subr.mxu0 0.0
    %1696 = vmatpush2.msra.mxu0 0.0
    %1697 = vmatprep.subr.mxu0 0.0
    %1698 = vmatpush2.msra.mxu0 0.0
    %1699 = vmatprep.subr.mxu0 0.0
    %1700 = vmatpush2.msra.mxu0 0.0
    %1701 = vmatprep.subr.mxu0 0.0
    %1702 = vmatpush2.msra.mxu0 0.0
    %1703 = vmatprep.subr.mxu0 0.0
    %1704 = vmatpush2.msra.mxu0 0.0
    %1705 = vmatprep.subr.mxu0 0.0
    %1706 = vmatpush2.msra.mxu0 0.0
    %1707 = vmatprep.subr.mxu0 0.0
    %1708 = vmatpush2.msra.mxu0 0.0
    %1709 = vmatprep.subr.mxu0 0.0
    %1710 = vmatpush2.msra.mxu0 0.0
    %1711 = vmatprep.subr.mxu0 0.0
    %1712 = vmatpush2.msra.mxu0 0.0
    %1713 = vmatprep.subr.mxu0 0.0
    %1714 = vmatpush2.msra.mxu0 0.0
    %1715 = vmatprep.subr.mxu0 0.0
    %1716 = vmatpush2.msra.mxu0 0.0
    %1717 = vmatprep.subr.mxu0 0.0
    %1718 = vmatpush2.msra.mxu0 0.0
    %1719 = vmatprep.subr.mxu0 0.0
    %1720 = vmatpush2.msra.mxu0 0.0
    %1721 = vmatprep.mubr.f32.mxu0 0.0
    %1722 = vmatmul.mubr.f32.gmra.mxu0 %v1655
    %v1723 = vpop.f32.mrf.mxu0
    %v1724 = vadd.f32 0.0, %v1723
    %v1725 = vpop.f32.mrf.mxu0
    %1726 = vdwg.mxu0
    %v1727 = vadd.f32 %v1651, %v1724
    %v1728 = vxor.u32 %v1727, 2147483648
    %v1729 = vmul.f32 %v1728, 1.442695
    %v1730 = vpow.pop %v1729
    %v1731 = vadd.f32 %v1730, 1.0
    %v1732 = vrcp.pop %v1731
    %v1733 = vmul.f32 1.0, %v1732
    %v1734 = vtanh.pop %v1727
    %v1735 = vmul.f32 %v1733, %v1640
    %1737 = vrot.lane.b32.xlu0 %v1734, 96
    %v1738 = vpop.permute.xlu0 %1737
    %v1740 = vmul.f32 %v1733, %v1738
    %1742 = vrot.lane.b32.xlu0 %v1740, 16
    %v1743 = vpop.permute.xlu0 %1742
    %v1745 = vadd.f32 %v1735, %v1743
    %v1746 = vtanh.pop %v1745
    %1748 = vrot.lane.b32.xlu0 %v1746, 32
    %v1749 = vpop.permute.xlu0 %1748
    %v1751 = vmul.f32 %v1733, %v1749
    %v1752 = vrot.slane %v1315, 4
    %v1754 = vrot.slane %v1325, 3
    %v1756 = vsel %vm934, %v1752, %v1754
    %1758 = vrot.lane.b32.xlu0 %v1751, 80
    %v1759 = vpop.permute.xlu0 %1758
    %v1760 = vsel %vm1339, %v1759, 0
    %1762 = vmatprep.subr.mxu0 0.0
    %1763 = vmatpush1.msra.mxu0 0.0
    %1764 = vmatprep.subr.mxu0 0.0
    %1765 = vmatpush1.msra.mxu0 0.0
    %1766 = vmatprep.subr.mxu0 0.0
    %1767 = vmatpush1.msra.mxu0 0.0
    %1768 = vmatprep.subr.mxu0 0.0
    %1769 = vmatpush1.msra.mxu0 0.0
    %1770 = vmatprep.subr.mxu0 0.0
    %1771 = vmatpush1.msra.mxu0 0.0
    %1772 = vmatprep.subr.mxu0 0.0
    %1773 = vmatpush1.msra.mxu0 0.0
    %1774 = vmatprep.subr.mxu0 0.0
    %1775 = vmatpush1.msra.mxu0 0.0
    %1776 = vmatprep.subr.mxu0 0.0
    %1777 = vmatpush1.msra.mxu0 0.0
    %1778 = vmatprep.subr.mxu0 0.0
    %1779 = vmatpush1.msra.mxu0 0.0
    %1780 = vmatprep.subr.mxu0 0.0
    %1781 = vmatpush1.msra.mxu0 0.0
    %1782 = vmatprep.subr.mxu0 0.0
    %1783 = vmatpush1.msra.mxu0 0.0
    %1784 = vmatprep.subr.mxu0 0.0
    %1785 = vmatpush1.msra.mxu0 0.0
    %1786 = vmatprep.subr.mxu0 0.0
    %1787 = vmatpush1.msra.mxu0 0.0
    %1788 = vmatprep.subr.mxu0 0.0
    %1789 = vmatpush1.msra.mxu0 0.0
    %1790 = vmatprep.subr.mxu0 0.0
    %1791 = vmatpush1.msra.mxu0 %v1334
    %1792 = vmatprep.subr.mxu0 0.0
    %1793 = vmatpush1.msra.mxu0 %v1333
    %1794 = vmatprep.subr.mxu0 0.0
    %1795 = vmatpush2.msra.mxu0 0.0
    %1796 = vmatprep.subr.mxu0 0.0
    %1797 = vmatpush2.msra.mxu0 0.0
    %1798 = vmatprep.subr.mxu0 0.0
    %1799 = vmatpush2.msra.mxu0 0.0
    %1800 = vmatprep.subr.mxu0 0.0
    %1801 = vmatpush2.msra.mxu0 0.0
    %1802 = vmatprep.subr.mxu0 0.0
    %1803 = vmatpush2.msra.mxu0 0.0
    %1804 = vmatprep.subr.mxu0 0.0
    %1805 = vmatpush2.msra.mxu0 0.0
    %1806 = vmatprep.subr.mxu0 0.0
    %1807 = vmatpush2.msra.mxu0 0.0
    %1808 = vmatprep.subr.mxu0 0.0
    %1809 = vmatpush2.msra.mxu0 0.0
    %1810 = vmatprep.subr.mxu0 0.0
    %1811 = vmatpush2.msra.mxu0 0.0
    %1812 = vmatprep.subr.mxu0 0.0
    %1813 = vmatpush2.msra.mxu0 0.0
    %1814 = vmatprep.subr.mxu0 0.0
    %1815 = vmatpush2.msra.mxu0 0.0
    %1816 = vmatprep.subr.mxu0 0.0
    %1817 = vmatpush2.msra.mxu0 0.0
    %1818 = vmatprep.subr.mxu0 0.0
    %1819 = vmatpush2.msra.mxu0 0.0
    %1820 = vmatprep.subr.mxu0 0.0
    %1821 = vmatpush2.msra.mxu0 0.0
    %1822 = vmatprep.subr.mxu0 0.0
    %1823 = vmatpush2.msra.mxu0 0.0
    %1824 = vmatprep.subr.mxu0 0.0
    %1825 = vmatpush2.msra.mxu0 0.0
    %1826 = vmatprep.mubr.f32.mxu0 0.0
    %1827 = vmatmul.mubr.f32.gmra.mxu0 %v1760
    %v1828 = vpop.f32.mrf.mxu0
    %v1829 = vadd.f32 0.0, %v1828
    %v1830 = vpop.f32.mrf.mxu0
    %1831 = vdwg.mxu0
    %v1832 = vadd.f32 %v1756, %v1829
    %v1833 = vxor.u32 %v1832, 2147483648
    %v1834 = vmul.f32 %v1833, 1.442695
    %v1835 = vpow.pop %v1834
    %v1836 = vadd.f32 %v1835, 1.0
    %v1837 = vrcp.pop %v1836
    %v1838 = vmul.f32 1.0, %v1837
    %v1839 = vtanh.pop %v1832
    %v1840 = vmul.f32 %v1838, %v1745
    %1842 = vrot.lane.b32.xlu0 %v1839, 96
    %v1843 = vpop.permute.xlu0 %1842
    %v1845 = vmul.f32 %v1838, %v1843
    %1847 = vrot.lane.b32.xlu0 %v1845, 16
    %v1848 = vpop.permute.xlu0 %1847
    %v1850 = vadd.f32 %v1840, %v1848
    %v1851 = vtanh.pop %v1850
    %1853 = vrot.lane.b32.xlu0 %v1851, 32
    %v1854 = vpop.permute.xlu0 %1853
    %v1856 = vmul.f32 %v1838, %v1854
    %v1857 = vrot.slane %v1315, 5
    %v1859 = vrot.slane %v1325, 4
    %v1861 = vsel %vm934, %v1857, %v1859
    %1863 = vrot.lane.b32.xlu0 %v1856, 80
    %v1864 = vpop.permute.xlu0 %1863
    %v1865 = vsel %vm1339, %v1864, 0
    %1867 = vmatprep.subr.mxu0 0.0
    %1868 = vmatpush1.msra.mxu0 0.0
    %1869 = vmatprep.subr.mxu0 0.0
    %1870 = vmatpush1.msra.mxu0 0.0
    %1871 = vmatprep.subr.mxu0 0.0
    %1872 = vmatpush1.msra.mxu0 0.0
    %1873 = vmatprep.subr.mxu0 0.0
    %1874 = vmatpush1.msra.mxu0 0.0
    %1875 = vmatprep.subr.mxu0 0.0
    %1876 = vmatpush1.msra.mxu0 0.0
    %1877 = vmatprep.subr.mxu0 0.0
    %1878 = vmatpush1.msra.mxu0 0.0
    %1879 = vmatprep.subr.mxu0 0.0
    %1880 = vmatpush1.msra.mxu0 0.0
    %1881 = vmatprep.subr.mxu0 0.0
    %1882 = vmatpush1.msra.mxu0 0.0
    %1883 = vmatprep.subr.mxu0 0.0
    %1884 = vmatpush1.msra.mxu0 0.0
    %1885 = vmatprep.subr.mxu0 0.0
    %1886 = vmatpush1.msra.mxu0 0.0
    %1887 = vmatprep.subr.mxu0 0.0
    %1888 = vmatpush1.msra.mxu0 0.0
    %1889 = vmatprep.subr.mxu0 0.0
    %1890 = vmatpush1.msra.mxu0 0.0
    %1891 = vmatprep.subr.mxu0 0.0
    %1892 = vmatpush1.msra.mxu0 0.0
    %1893 = vmatprep.subr.mxu0 0.0
    %1894 = vmatpush1.msra.mxu0 0.0
    %1895 = vmatprep.subr.mxu0 0.0
    %1896 = vmatpush1.msra.mxu0 %v1334
    %1897 = vmatprep.subr.mxu0 0.0
    %1898 = vmatpush1.msra.mxu0 %v1333
    %1899 = vmatprep.subr.mxu0 0.0
    %1900 = vmatpush2.msra.mxu0 0.0
    %1901 = vmatprep.subr.mxu0 0.0
    %1902 = vmatpush2.msra.mxu0 0.0
    %1903 = vmatprep.subr.mxu0 0.0
    %1904 = vmatpush2.msra.mxu0 0.0
    %1905 = vmatprep.subr.mxu0 0.0
    %1906 = vmatpush2.msra.mxu0 0.0
    %1907 = vmatprep.subr.mxu0 0.0
    %1908 = vmatpush2.msra.mxu0 0.0
    %1909 = vmatprep.subr.mxu0 0.0
    %1910 = vmatpush2.msra.mxu0 0.0
    %1911 = vmatprep.subr.mxu0 0.0
    %1912 = vmatpush2.msra.mxu0 0.0
    %1913 = vmatprep.subr.mxu0 0.0
    %1914 = vmatpush2.msra.mxu0 0.0
    %1915 = vmatprep.subr.mxu0 0.0
    %1916 = vmatpush2.msra.mxu0 0.0
    %1917 = vmatprep.subr.mxu0 0.0
    %1918 = vmatpush2.msra.mxu0 0.0
    %1919 = vmatprep.subr.mxu0 0.0
    %1920 = vmatpush2.msra.mxu0 0.0
    %1921 = vmatprep.subr.mxu0 0.0
    %1922 = vmatpush2.msra.mxu0 0.0
    %1923 = vmatprep.subr.mxu0 0.0
    %1924 = vmatpush2.msra.mxu0 0.0
    %1925 = vmatprep.subr.mxu0 0.0
    %1926 = vmatpush2.msra.mxu0 0.0
    %1927 = vmatprep.subr.mxu0 0.0
    %1928 = vmatpush2.msra.mxu0 0.0
    %1929 = vmatprep.subr.mxu0 0.0
    %1930 = vmatpush2.msra.mxu0 0.0
    %1931 = vmatprep.mubr.f32.mxu0 0.0
    %1932 = vmatmul.mubr.f32.gmra.mxu0 %v1865
    %v1933 = vpop.f32.mrf.mxu0
    %v1934 = vadd.f32 0.0, %v1933
    %v1935 = vpop.f32.mrf.mxu0
    %1936 = vdwg.mxu0
    %v1937 = vadd.f32 %v1861, %v1934
    %v1938 = vxor.u32 %v1937, 2147483648
    %v1939 = vmul.f32 %v1938, 1.442695
    %v1940 = vpow.pop %v1939
    %v1941 = vadd.f32 %v1940, 1.0
    %v1942 = vrcp.pop %v1941
    %v1943 = vmul.f32 1.0, %v1942
    %v1944 = vtanh.pop %v1937
    %v1945 = vmul.f32 %v1943, %v1850
    %1947 = vrot.lane.b32.xlu0 %v1944, 96
    %v1948 = vpop.permute.xlu0 %1947
    %v1950 = vmul.f32 %v1943, %v1948
    %1952 = vrot.lane.b32.xlu0 %v1950, 16
    %v1953 = vpop.permute.xlu0 %1952
    %v1955 = vadd.f32 %v1945, %v1953
    %v1956 = vtanh.pop %v1955
    %1958 = vrot.lane.b32.xlu0 %v1956, 32
    %v1959 = vpop.permute.xlu0 %1958
    %v1961 = vmul.f32 %v1943, %v1959
    %v1962 = vrot.slane %v1315, 6
    %v1964 = vrot.slane %v1325, 5
    %v1966 = vsel %vm934, %v1962, %v1964
    %1968 = vrot.lane.b32.xlu0 %v1961, 80
    %v1969 = vpop.permute.xlu0 %1968
    %v1970 = vsel %vm1339, %v1969, 0
    %1972 = vmatprep.subr.mxu0 0.0
    %1973 = vmatpush1.msra.mxu0 0.0
    %1974 = vmatprep.subr.mxu0 0.0
    %1975 = vmatpush1.msra.mxu0 0.0
    %1976 = vmatprep.subr.mxu0 0.0
    %1977 = vmatpush1.msra.mxu0 0.0
    %1978 = vmatprep.subr.mxu0 0.0
    %1979 = vmatpush1.msra.mxu0 0.0
    %1980 = vmatprep.subr.mxu0 0.0
    %1981 = vmatpush1.msra.mxu0 0.0
    %1982 = vmatprep.subr.mxu0 0.0
    %1983 = vmatpush1.msra.mxu0 0.0
    %1984 = vmatprep.subr.mxu0 0.0
    %1985 = vmatpush1.msra.mxu0 0.0
    %1986 = vmatprep.subr.mxu0 0.0
    %1987 = vmatpush1.msra.mxu0 0.0
    %1988 = vmatprep.subr.mxu0 0.0
    %1989 = vmatpush1.msra.mxu0 0.0
    %1990 = vmatprep.subr.mxu0 0.0
    %1991 = vmatpush1.msra.mxu0 0.0
    %1992 = vmatprep.subr.mxu0 0.0
    %1993 = vmatpush1.msra.mxu0 0.0
    %1994 = vmatprep.subr.mxu0 0.0
    %1995 = vmatpush1.msra.mxu0 0.0
    %1996 = vmatprep.subr.mxu0 0.0
    %1997 = vmatpush1.msra.mxu0 0.0
    %1998 = vmatprep.subr.mxu0 0.0
    %1999 = vmatpush1.msra.mxu0 0.0
    %2000 = vmatprep.subr.mxu0 0.0
    %2001 = vmatpush1.msra.mxu0 %v1334
    %2002 = vmatprep.subr.mxu0 0.0
    %2003 = vmatpush1.msra.mxu0 %v1333
    %2004 = vmatprep.subr.mxu0 0.0
    %2005 = vmatpush2.msra.mxu0 0.0
    %2006 = vmatprep.subr.mxu0 0.0
    %2007 = vmatpush2.msra.mxu0 0.0
    %2008 = vmatprep.subr.mxu0 0.0
    %2009 = vmatpush2.msra.mxu0 0.0
    %2010 = vmatprep.subr.mxu0 0.0
    %2011 = vmatpush2.msra.mxu0 0.0
    %2012 = vmatprep.subr.mxu0 0.0
    %2013 = vmatpush2.msra.mxu0 0.0
    %2014 = vmatprep.subr.mxu0 0.0
    %2015 = vmatpush2.msra.mxu0 0.0
    %2016 = vmatprep.subr.mxu0 0.0
    %2017 = vmatpush2.msra.mxu0 0.0
    %2018 = vmatprep.subr.mxu0 0.0
    %2019 = vmatpush2.msra.mxu0 0.0
    %2020 = vmatprep.subr.mxu0 0.0
    %2021 = vmatpush2.msra.mxu0 0.0
    %2022 = vmatprep.subr.mxu0 0.0
    %2023 = vmatpush2.msra.mxu0 0.0
    %2024 = vmatprep.subr.mxu0 0.0
    %2025 = vmatpush2.msra.mxu0 0.0
    %2026 = vmatprep.subr.mxu0 0.0
    %2027 = vmatpush2.msra.mxu0 0.0
    %2028 = vmatprep.subr.mxu0 0.0
    %2029 = vmatpush2.msra.mxu0 0.0
    %2030 = vmatprep.subr.mxu0 0.0
    %2031 = vmatpush2.msra.mxu0 0.0
    %2032 = vmatprep.subr.mxu0 0.0
    %2033 = vmatpush2.msra.mxu0 0.0
    %2034 = vmatprep.subr.mxu0 0.0
    %2035 = vmatpush2.msra.mxu0 0.0
    %2036 = vmatprep.mubr.f32.mxu0 0.0
    %2037 = vmatmul.mubr.f32.gmra.mxu0 %v1970
    %v2038 = vpop.f32.mrf.mxu0
    %v2039 = vadd.f32 0.0, %v2038
    %v2040 = vpop.f32.mrf.mxu0
    %2041 = vdwg.mxu0
    %v2042 = vadd.f32 %v1966, %v2039
    %v2043 = vxor.u32 %v2042, 2147483648
    %v2044 = vmul.f32 %v2043, 1.442695
    %v2045 = vpow.pop %v2044
    %v2046 = vadd.f32 %v2045, 1.0
    %v2047 = vrcp.pop %v2046
    %v2048 = vmul.f32 1.0, %v2047
    %v2049 = vtanh.pop %v2042
    %v2050 = vmul.f32 %v2048, %v1955
    %2052 = vrot.lane.b32.xlu0 %v2049, 96
    %v2053 = vpop.permute.xlu0 %2052
    %v2055 = vmul.f32 %v2048, %v2053
    %2057 = vrot.lane.b32.xlu0 %v2055, 16
    %v2058 = vpop.permute.xlu0 %2057
    %v2060 = vadd.f32 %v2050, %v2058
    %v2061 = vtanh.pop %v2060
    %2063 = vrot.lane.b32.xlu0 %v2061, 32
    %v2064 = vpop.permute.xlu0 %2063
    %v2066 = vmul.f32 %v2048, %v2064
    %v2067 = vrot.slane %v1315, 7
    %v2069 = vrot.slane %v1325, 6
    %v2071 = vsel %vm934, %v2067, %v2069
    %2073 = vrot.lane.b32.xlu0 %v2066, 80
    %v2074 = vpop.permute.xlu0 %2073
    %v2075 = vsel %vm1339, %v2074, 0
    %2077 = vmatprep.subr.mxu0 0.0
    %2078 = vmatpush1.msra.mxu0 0.0
    %2079 = vmatprep.subr.mxu0 0.0
    %2080 = vmatpush1.msra.mxu0 0.0
    %2081 = vmatprep.subr.mxu0 0.0
    %2082 = vmatpush1.msra.mxu0 0.0
    %2083 = vmatprep.subr.mxu0 0.0
    %2084 = vmatpush1.msra.mxu0 0.0
    %2085 = vmatprep.subr.mxu0 0.0
    %2086 = vmatpush1.msra.mxu0 0.0
    %2087 = vmatprep.subr.mxu0 0.0
    %2088 = vmatpush1.msra.mxu0 0.0
    %2089 = vmatprep.subr.mxu0 0.0
    %2090 = vmatpush1.msra.mxu0 0.0
    %2091 = vmatprep.subr.mxu0 0.0
    %2092 = vmatpush1.msra.mxu0 0.0
    %2093 = vmatprep.subr.mxu0 0.0
    %2094 = vmatpush1.msra.mxu0 0.0
    %2095 = vmatprep.subr.mxu0 0.0
    %2096 = vmatpush1.msra.mxu0 0.0
    %2097 = vmatprep.subr.mxu0 0.0
    %2098 = vmatpush1.msra.mxu0 0.0
    %2099 = vmatprep.subr.mxu0 0.0
    %2100 = vmatpush1.msra.mxu0 0.0
    %2101 = vmatprep.subr.mxu0 0.0
    %2102 = vmatpush1.msra.mxu0 0.0
    %2103 = vmatprep.subr.mxu0 0.0
    %2104 = vmatpush1.msra.mxu0 0.0
    %2105 = vmatprep.subr.mxu0 0.0
    %2106 = vmatpush1.msra.mxu0 %v1334
    %2107 = vmatprep.subr.mxu0 0.0
    %2108 = vmatpush1.msra.mxu0 %v1333
    %2109 = vmatprep.subr.mxu0 0.0
    %2110 = vmatpush2.msra.mxu0 0.0
    %2111 = vmatprep.subr.mxu0 0.0
    %2112 = vmatpush2.msra.mxu0 0.0
    %2113 = vmatprep.subr.mxu0 0.0
    %2114 = vmatpush2.msra.mxu0 0.0
    %2115 = vmatprep.subr.mxu0 0.0
    %2116 = vmatpush2.msra.mxu0 0.0
    %2117 = vmatprep.subr.mxu0 0.0
    %2118 = vmatpush2.msra.mxu0 0.0
    %2119 = vmatprep.subr.mxu0 0.0
    %2120 = vmatpush2.msra.mxu0 0.0
    %2121 = vmatprep.subr.mxu0 0.0
    %2122 = vmatpush2.msra.mxu0 0.0
    %2123 = vmatprep.subr.mxu0 0.0
    %2124 = vmatpush2.msra.mxu0 0.0
    %2125 = vmatprep.subr.mxu0 0.0
    %2126 = vmatpush2.msra.mxu0 0.0
    %2127 = vmatprep.subr.mxu0 0.0
    %2128 = vmatpush2.msra.mxu0 0.0
    %2129 = vmatprep.subr.mxu0 0.0
    %2130 = vmatpush2.msra.mxu0 0.0
    %2131 = vmatprep.subr.mxu0 0.0
    %2132 = vmatpush2.msra.mxu0 0.0
    %2133 = vmatprep.subr.mxu0 0.0
    %2134 = vmatpush2.msra.mxu0 0.0
    %2135 = vmatprep.subr.mxu0 0.0
    %2136 = vmatpush2.msra.mxu0 0.0
    %2137 = vmatprep.subr.mxu0 0.0
    %2138 = vmatpush2.msra.mxu0 0.0
    %2139 = vmatprep.subr.mxu0 0.0
    %2140 = vmatpush2.msra.mxu0 0.0
    %2141 = vmatprep.mubr.f32.mxu0 0.0
    %2142 = vmatmul.mubr.f32.gmra.mxu0 %v2075
    %v2143 = vpop.f32.mrf.mxu0
    %v2144 = vadd.f32 0.0, %v2143
    %v2145 = vpop.f32.mrf.mxu0
    %2146 = vdwg.mxu0
    %v2147 = vadd.f32 %v2071, %v2144
    %v2148 = vxor.u32 %v2147, 2147483648
    %v2149 = vmul.f32 %v2148, 1.442695
    %v2150 = vpow.pop %v2149
    %v2151 = vadd.f32 %v2150, 1.0
    %v2152 = vrcp.pop %v2151
    %v2153 = vmul.f32 1.0, %v2152
    %v2154 = vtanh.pop %v2147
    %v2155 = vmul.f32 %v2153, %v2060
    %2157 = vrot.lane.b32.xlu0 %v2154, 96
    %v2158 = vpop.permute.xlu0 %2157
    %v2160 = vmul.f32 %v2153, %v2158
    %2162 = vrot.lane.b32.xlu0 %v2160, 16
    %v2163 = vpop.permute.xlu0 %2162
    %v2165 = vadd.f32 %v2155, %v2163
    %v2166 = vtanh.pop %v2165
    %2168 = vrot.lane.b32.xlu0 %v2166, 32
    %v2169 = vpop.permute.xlu0 %2168
    %v2171 = vmul.f32 %v2153, %v2169
    %v2173 = vrot.slane %v1330, 7
    %v2175 = vsel %vm934, %v1320, %v2173
    %2177 = vrot.lane.b32.xlu0 %v2171, 80
    %v2178 = vpop.permute.xlu0 %2177
    %v2179 = vsel %vm1339, %v2178, 0
    %2181 = vmatprep.subr.mxu0 0.0
    %2182 = vmatpush1.msra.mxu0 0.0
    %2183 = vmatprep.subr.mxu0 0.0
    %2184 = vmatpush1.msra.mxu0 0.0
    %2185 = vmatprep.subr.mxu0 0.0
    %2186 = vmatpush1.msra.mxu0 0.0
    %2187 = vmatprep.subr.mxu0 0.0
    %2188 = vmatpush1.msra.mxu0 0.0
    %2189 = vmatprep.subr.mxu0 0.0
    %2190 = vmatpush1.msra.mxu0 0.0
    %2191 = vmatprep.subr.mxu0 0.0
    %2192 = vmatpush1.msra.mxu0 0.0
    %2193 = vmatprep.subr.mxu0 0.0
    %2194 = vmatpush1.msra.mxu0 0.0
    %2195 = vmatprep.subr.mxu0 0.0
    %2196 = vmatpush1.msra.mxu0 0.0
    %2197 = vmatprep.subr.mxu0 0.0
    %2198 = vmatpush1.msra.mxu0 0.0
    %2199 = vmatprep.subr.mxu0 0.0
    %2200 = vmatpush1.msra.mxu0 0.0
    %2201 = vmatprep.subr.mxu0 0.0
    %2202 = vmatpush1.msra.mxu0 0.0
    %2203 = vmatprep.subr.mxu0 0.0
    %2204 = vmatpush1.msra.mxu0 0.0
    %2205 = vmatprep.subr.mxu0 0.0
    %2206 = vmatpush1.msra.mxu0 0.0
    %2207 = vmatprep.subr.mxu0 0.0
    %2208 = vmatpush1.msra.mxu0 0.0
    %2209 = vmatprep.subr.mxu0 0.0
    %2210 = vmatpush1.msra.mxu0 %v1334
    %2211 = vmatprep.subr.mxu0 0.0
    %2212 = vmatpush1.msra.mxu0 %v1333
    %2213 = vmatprep.subr.mxu0 0.0
    %2214 = vmatpush2.msra.mxu0 0.0
    %2215 = vmatprep.subr.mxu0 0.0
    %2216 = vmatpush2.msra.mxu0 0.0
    %2217 = vmatprep.subr.mxu0 0.0
    %2218 = vmatpush2.msra.mxu0 0.0
    %2219 = vmatprep.subr.mxu0 0.0
    %2220 = vmatpush2.msra.mxu0 0.0
    %2221 = vmatprep.subr.mxu0 0.0
    %2222 = vmatpush2.msra.mxu0 0.0
    %2223 = vmatprep.subr.mxu0 0.0
    %2224 = vmatpush2.msra.mxu0 0.0
    %2225 = vmatprep.subr.mxu0 0.0
    %2226 = vmatpush2.msra.mxu0 0.0
    %2227 = vmatprep.subr.mxu0 0.0
    %2228 = vmatpush2.msra.mxu0 0.0
    %2229 = vmatprep.subr.mxu0 0.0
    %2230 = vmatpush2.msra.mxu0 0.0
    %2231 = vmatprep.subr.mxu0 0.0
    %2232 = vmatpush2.msra.mxu0 0.0
    %2233 = vmatprep.subr.mxu0 0.0
    %2234 = vmatpush2.msra.mxu0 0.0
    %2235 = vmatprep.subr.mxu0 0.0
    %2236 = vmatpush2.msra.mxu0 0.0
    %2237 = vmatprep.subr.mxu0 0.0
    %2238 = vmatpush2.msra.mxu0 0.0
    %2239 = vmatprep.subr.mxu0 0.0
    %2240 = vmatpush2.msra.mxu0 0.0
    %2241 = vmatprep.subr.mxu0 0.0
    %2242 = vmatpush2.msra.mxu0 0.0
    %2243 = vmatprep.subr.mxu0 0.0
    %2244 = vmatpush2.msra.mxu0 0.0
    %2245 = vmatprep.mubr.f32.mxu0 0.0
    %2246 = vmatmul.mubr.f32.gmra.mxu0 %v2179
    %v2247 = vpop.f32.mrf.mxu0
    %v2248 = vadd.f32 0.0, %v2247
    %v2249 = vpop.f32.mrf.mxu0
    %2250 = vdwg.mxu0
    %v2251 = vadd.f32 %v2175, %v2248
    %v2252 = vxor.u32 %v2251, 2147483648
    %v2253 = vmul.f32 %v2252, 1.442695
    %v2254 = vpow.pop %v2253
    %v2255 = vadd.f32 %v2254, 1.0
    %v2256 = vrcp.pop %v2255
    %v2257 = vmul.f32 1.0, %v2256
    %v2258 = vtanh.pop %v2251
    %v2259 = vmul.f32 %v2257, %v2165
    %2261 = vrot.lane.b32.xlu0 %v2258, 96
    %v2262 = vpop.permute.xlu0 %2261
    %v2264 = vmul.f32 %v2257, %v2262
    %2266 = vrot.lane.b32.xlu0 %v2264, 16
    %v2267 = vpop.permute.xlu0 %2266
    %v2269 = vadd.f32 %v2259, %v2267
    %v2270 = vtanh.pop %v2269
    %2272 = vrot.lane.b32.xlu0 %v2270, 32
    %v2273 = vpop.permute.xlu0 %2272
    %v2275 = vmul.f32 %v2257, %v2273
    %v2277 = vrot.slane %v1320, 1
    %v2279 = vsel %vm934, %v2277, %v1330
    %2281 = vrot.lane.b32.xlu0 %v2275, 80
    %v2282 = vpop.permute.xlu0 %2281
    %v2283 = vsel %vm1339, %v2282, 0
    %2285 = vmatprep.subr.mxu0 0.0
    %2286 = vmatpush1.msra.mxu0 0.0
    %2287 = vmatprep.subr.mxu0 0.0
    %2288 = vmatpush1.msra.mxu0 0.0
    %2289 = vmatprep.subr.mxu0 0.0
    %2290 = vmatpush1.msra.mxu0 0.0
    %2291 = vmatprep.subr.mxu0 0.0
    %2292 = vmatpush1.msra.mxu0 0.0
    %2293 = vmatprep.subr.mxu0 0.0
    %2294 = vmatpush1.msra.mxu0 0.0
    %2295 = vmatprep.subr.mxu0 0.0
    %2296 = vmatpush1.msra.mxu0 0.0
    %2297 = vmatprep.subr.mxu0 0.0
    %2298 = vmatpush1.msra.mxu0 0.0
    %2299 = vmatprep.subr.mxu0 0.0
    %2300 = vmatpush1.msra.mxu0 0.0
    %2301 = vmatprep.subr.mxu0 0.0
    %2302 = vmatpush1.msra.mxu0 0.0
    %2303 = vmatprep.subr.mxu0 0.0
    %2304 = vmatpush1.msra.mxu0 0.0
    %2305 = vmatprep.subr.mxu0 0.0
    %2306 = vmatpush1.msra.mxu0 0.0
    %2307 = vmatprep.subr.mxu0 0.0
    %2308 = vmatpush1.msra.mxu0 0.0
    %2309 = vmatprep.subr.mxu0 0.0
    %2310 = vmatpush1.msra.mxu0 0.0
    %2311 = vmatprep.subr.mxu0 0.0
    %2312 = vmatpush1.msra.mxu0 0.0
    %2313 = vmatprep.subr.mxu0 0.0
    %2314 = vmatpush1.msra.mxu0 %v1334
    %2315 = vmatprep.subr.mxu0 0.0
    %2316 = vmatpush1.msra.mxu0 %v1333
    %2317 = vmatprep.subr.mxu0 0.0
    %2318 = vmatpush2.msra.mxu0 0.0
    %2319 = vmatprep.subr.mxu0 0.0
    %2320 = vmatpush2.msra.mxu0 0.0
    %2321 = vmatprep.subr.mxu0 0.0
    %2322 = vmatpush2.msra.mxu0 0.0
    %2323 = vmatprep.subr.mxu0 0.0
    %2324 = vmatpush2.msra.mxu0 0.0
    %2325 = vmatprep.subr.mxu0 0.0
    %2326 = vmatpush2.msra.mxu0 0.0
    %2327 = vmatprep.subr.mxu0 0.0
    %2328 = vmatpush2.msra.mxu0 0.0
    %2329 = vmatprep.subr.mxu0 0.0
    %2330 = vmatpush2.msra.mxu0 0.0
    %2331 = vmatprep.subr.mxu0 0.0
    %2332 = vmatpush2.msra.mxu0 0.0
    %2333 = vmatprep.subr.mxu0 0.0
    %2334 = vmatpush2.msra.mxu0 0.0
    %2335 = vmatprep.subr.mxu0 0.0
    %2336 = vmatpush2.msra.mxu0 0.0
    %2337 = vmatprep.subr.mxu0 0.0
    %2338 = vmatpush2.msra.mxu0 0.0
    %2339 = vmatprep.subr.mxu0 0.0
    %2340 = vmatpush2.msra.mxu0 0.0
    %2341 = vmatprep.subr.mxu0 0.0
    %2342 = vmatpush2.msra.mxu0 0.0
    %2343 = vmatprep.subr.mxu0 0.0
    %2344 = vmatpush2.msra.mxu0 0.0
    %2345 = vmatprep.subr.mxu0 0.0
    %2346 = vmatpush2.msra.mxu0 0.0
    %2347 = vmatprep.subr.mxu0 0.0
    %2348 = vmatpush2.msra.mxu0 0.0
    %2349 = vmatprep.mubr.f32.mxu0 0.0
    %2350 = vmatmul.mubr.f32.gmra.mxu0 %v2283
    %v2351 = vpop.f32.mrf.mxu0
    %v2352 = vadd.f32 0.0, %v2351
    %v2353 = vpop.f32.mrf.mxu0
    %2354 = vdwg.mxu0
    %v2355 = vadd.f32 %v2279, %v2352
    %v2356 = vxor.u32 %v2355, 2147483648
    %v2357 = vmul.f32 %v2356, 1.442695
    %v2358 = vpow.pop %v2357
    %v2359 = vadd.f32 %v2358, 1.0
    %v2360 = vrcp.pop %v2359
    %v2361 = vmul.f32 1.0, %v2360
    %v2362 = vtanh.pop %v2355
    %v2363 = vmul.f32 %v2361, %v2269
    %2365 = vrot.lane.b32.xlu0 %v2362, 96
    %v2366 = vpop.permute.xlu0 %2365
    %v2368 = vmul.f32 %v2361, %v2366
    %2370 = vrot.lane.b32.xlu0 %v2368, 16
    %v2371 = vpop.permute.xlu0 %2370
    %v2373 = vadd.f32 %v2363, %v2371
    %v2374 = vtanh.pop %v2373
    %2376 = vrot.lane.b32.xlu0 %v2374, 32
    %v2377 = vpop.permute.xlu0 %2376
    %v2379 = vmul.f32 %v2361, %v2377
    %v2380 = vrot.slane %v1320, 2
    %v2382 = vrot.slane %v1330, 1
    %v2384 = vsel %vm934, %v2380, %v2382
    %2386 = vrot.lane.b32.xlu0 %v2379, 80
    %v2387 = vpop.permute.xlu0 %2386
    %v2388 = vsel %vm1339, %v2387, 0
    %2390 = vmatprep.subr.mxu0 0.0
    %2391 = vmatpush1.msra.mxu0 0.0
    %2392 = vmatprep.subr.mxu0 0.0
    %2393 = vmatpush1.msra.mxu0 0.0
    %2394 = vmatprep.subr.mxu0 0.0
    %2395 = vmatpush1.msra.mxu0 0.0
    %2396 = vmatprep.subr.mxu0 0.0
    %2397 = vmatpush1.msra.mxu0 0.0
    %2398 = vmatprep.subr.mxu0 0.0
    %2399 = vmatpush1.msra.mxu0 0.0
    %2400 = vmatprep.subr.mxu0 0.0
    %2401 = vmatpush1.msra.mxu0 0.0
    %2402 = vmatprep.subr.mxu0 0.0
    %2403 = vmatpush1.msra.mxu0 0.0
    %2404 = vmatprep.subr.mxu0 0.0
    %2405 = vmatpush1.msra.mxu0 0.0
    %2406 = vmatprep.subr.mxu0 0.0
    %2407 = vmatpush1.msra.mxu0 0.0
    %2408 = vmatprep.subr.mxu0 0.0
    %2409 = vmatpush1.msra.mxu0 0.0
    %2410 = vmatprep.subr.mxu0 0.0
    %2411 = vmatpush1.msra.mxu0 0.0
    %2412 = vmatprep.subr.mxu0 0.0
    %2413 = vmatpush1.msra.mxu0 0.0
    %2414 = vmatprep.subr.mxu0 0.0
    %2415 = vmatpush1.msra.mxu0 0.0
    %2416 = vmatprep.subr.mxu0 0.0
    %2417 = vmatpush1.msra.mxu0 0.0
    %2418 = vmatprep.subr.mxu0 0.0
    %2419 = vmatpush1.msra.mxu0 %v1334
    %2420 = vmatprep.subr.mxu0 0.0
    %2421 = vmatpush1.msra.mxu0 %v1333
    %2422 = vmatprep.subr.mxu0 0.0
    %2423 = vmatpush2.msra.mxu0 0.0
    %2424 = vmatprep.subr.mxu0 0.0
    %2425 = vmatpush2.msra.mxu0 0.0
    %2426 = vmatprep.subr.mxu0 0.0
    %2427 = vmatpush2.msra.mxu0 0.0
    %2428 = vmatprep.subr.mxu0 0.0
    %2429 = vmatpush2.msra.mxu0 0.0
    %2430 = vmatprep.subr.mxu0 0.0
    %2431 = vmatpush2.msra.mxu0 0.0
    %2432 = vmatprep.subr.mxu0 0.0
    %2433 = vmatpush2.msra.mxu0 0.0
    %2434 = vmatprep.subr.mxu0 0.0
    %2435 = vmatpush2.msra.mxu0 0.0
    %2436 = vmatprep.subr.mxu0 0.0
    %2437 = vmatpush2.msra.mxu0 0.0
    %2438 = vmatprep.subr.mxu0 0.0
    %2439 = vmatpush2.msra.mxu0 0.0
    %2440 = vmatprep.subr.mxu0 0.0
    %2441 = vmatpush2.msra.mxu0 0.0
    %2442 = vmatprep.subr.mxu0 0.0
    %2443 = vmatpush2.msra.mxu0 0.0
    %2444 = vmatprep.subr.mxu0 0.0
    %2445 = vmatpush2.msra.mxu0 0.0
    %2446 = vmatprep.subr.mxu0 0.0
    %2447 = vmatpush2.msra.mxu0 0.0
    %2448 = vmatprep.subr.mxu0 0.0
    %2449 = vmatpush2.msra.mxu0 0.0
    %2450 = vmatprep.subr.mxu0 0.0
    %2451 = vmatpush2.msra.mxu0 0.0
    %2452 = vmatprep.subr.mxu0 0.0
    %2453 = vmatpush2.msra.mxu0 0.0
    %2454 = vmatprep.mubr.f32.mxu0 0.0
    %2455 = vmatmul.mubr.f32.gmra.mxu0 %v2388
    %v2456 = vpop.f32.mrf.mxu0
    %v2457 = vadd.f32 0.0, %v2456
    %v2458 = vpop.f32.mrf.mxu0
    %2459 = vdwg.mxu0
    %v2460 = vadd.f32 %v2384, %v2457
    %v2461 = vxor.u32 %v2460, 2147483648
    %v2462 = vmul.f32 %v2461, 1.442695
    %v2463 = vpow.pop %v2462
    %v2464 = vadd.f32 %v2463, 1.0
    %v2465 = vrcp.pop %v2464
    %v2466 = vmul.f32 1.0, %v2465
    %v2467 = vtanh.pop %v2460
    %v2468 = vmul.f32 %v2466, %v2373
    %2470 = vrot.lane.b32.xlu0 %v2467, 96
    %v2471 = vpop.permute.xlu0 %2470
    %v2473 = vmul.f32 %v2466, %v2471
    %2475 = vrot.lane.b32.xlu0 %v2473, 16
    %v2476 = vpop.permute.xlu0 %2475
    %v2478 = vadd.f32 %v2468, %v2476
    %v2479 = vtanh.pop %v2478
    %2481 = vrot.lane.b32.xlu0 %v2479, 32
    %v2482 = vpop.permute.xlu0 %2481
    %v2484 = vmul.f32 %v2466, %v2482
    %v2485 = vrot.slane %v1320, 3
    %v2487 = vrot.slane %v1330, 2
    %v2489 = vsel %vm934, %v2485, %v2487
    %2491 = vrot.lane.b32.xlu0 %v2484, 80
    %v2492 = vpop.permute.xlu0 %2491
    %v2493 = vsel %vm1339, %v2492, 0
    %2495 = vmatprep.subr.mxu0 0.0
    %2496 = vmatpush1.msra.mxu0 0.0
    %2497 = vmatprep.subr.mxu0 0.0
    %2498 = vmatpush1.msra.mxu0 0.0
    %2499 = vmatprep.subr.mxu0 0.0
    %2500 = vmatpush1.msra.mxu0 0.0
    %2501 = vmatprep.subr.mxu0 0.0
    %2502 = vmatpush1.msra.mxu0 0.0
    %2503 = vmatprep.subr.mxu0 0.0
    %2504 = vmatpush1.msra.mxu0 0.0
    %2505 = vmatprep.subr.mxu0 0.0
    %2506 = vmatpush1.msra.mxu0 0.0
    %2507 = vmatprep.subr.mxu0 0.0
    %2508 = vmatpush1.msra.mxu0 0.0
    %2509 = vmatprep.subr.mxu0 0.0
    %2510 = vmatpush1.msra.mxu0 0.0
    %2511 = vmatprep.subr.mxu0 0.0
    %2512 = vmatpush1.msra.mxu0 0.0
    %2513 = vmatprep.subr.mxu0 0.0
    %2514 = vmatpush1.msra.mxu0 0.0
    %2515 = vmatprep.subr.mxu0 0.0
    %2516 = vmatpush1.msra.mxu0 0.0
    %2517 = vmatprep.subr.mxu0 0.0
    %2518 = vmatpush1.msra.mxu0 0.0
    %2519 = vmatprep.subr.mxu0 0.0
    %2520 = vmatpush1.msra.mxu0 0.0
    %2521 = vmatprep.subr.mxu0 0.0
    %2522 = vmatpush1.msra.mxu0 0.0
    %2523 = vmatprep.subr.mxu0 0.0
    %2524 = vmatpush1.msra.mxu0 %v1334
    %2525 = vmatprep.subr.mxu0 0.0
    %2526 = vmatpush1.msra.mxu0 %v1333
    %2527 = vmatprep.subr.mxu0 0.0
    %2528 = vmatpush2.msra.mxu0 0.0
    %2529 = vmatprep.subr.mxu0 0.0
    %2530 = vmatpush2.msra.mxu0 0.0
    %2531 = vmatprep.subr.mxu0 0.0
    %2532 = vmatpush2.msra.mxu0 0.0
    %2533 = vmatprep.subr.mxu0 0.0
    %2534 = vmatpush2.msra.mxu0 0.0
    %2535 = vmatprep.subr.mxu0 0.0
    %2536 = vmatpush2.msra.mxu0 0.0
    %2537 = vmatprep.subr.mxu0 0.0
    %2538 = vmatpush2.msra.mxu0 0.0
    %2539 = vmatprep.subr.mxu0 0.0
    %2540 = vmatpush2.msra.mxu0 0.0
    %2541 = vmatprep.subr.mxu0 0.0
    %2542 = vmatpush2.msra.mxu0 0.0
    %2543 = vmatprep.subr.mxu0 0.0
    %2544 = vmatpush2.msra.mxu0 0.0
    %2545 = vmatprep.subr.mxu0 0.0
    %2546 = vmatpush2.msra.mxu0 0.0
    %2547 = vmatprep.subr.mxu0 0.0
    %2548 = vmatpush2.msra.mxu0 0.0
    %2549 = vmatprep.subr.mxu0 0.0
    %2550 = vmatpush2.msra.mxu0 0.0
    %2551 = vmatprep.subr.mxu0 0.0
    %2552 = vmatpush2.msra.mxu0 0.0
    %2553 = vmatprep.subr.mxu0 0.0
    %2554 = vmatpush2.msra.mxu0 0.0
    %2555 = vmatprep.subr.mxu0 0.0
    %2556 = vmatpush2.msra.mxu0 0.0
    %2557 = vmatprep.subr.mxu0 0.0
    %2558 = vmatpush2.msra.mxu0 0.0
    %2559 = vmatprep.mubr.f32.mxu0 0.0
    %2560 = vmatmul.mubr.f32.gmra.mxu0 %v2493
    %v2561 = vpop.f32.mrf.mxu0
    %v2562 = vadd.f32 0.0, %v2561
    %v2563 = vpop.f32.mrf.mxu0
    %2564 = vdwg.mxu0
    %v2565 = vadd.f32 %v2489, %v2562
    %v2566 = vxor.u32 %v2565, 2147483648
    %v2567 = vmul.f32 %v2566, 1.442695
    %v2568 = vpow.pop %v2567
    %v2569 = vadd.f32 %v2568, 1.0
    %v2570 = vrcp.pop %v2569
    %v2571 = vmul.f32 1.0, %v2570
    %v2572 = vtanh.pop %v2565
    %v2573 = vmul.f32 %v2571, %v2478
    %2575 = vrot.lane.b32.xlu0 %v2572, 96
    %v2576 = vpop.permute.xlu0 %2575
    %v2578 = vmul.f32 %v2571, %v2576
    %2580 = vrot.lane.b32.xlu0 %v2578, 16
    %v2581 = vpop.permute.xlu0 %2580
    %v2583 = vadd.f32 %v2573, %v2581
    %v2584 = vtanh.pop %v2583
    %2586 = vrot.lane.b32.xlu0 %v2584, 32
    %v2587 = vpop.permute.xlu0 %2586
    %v2589 = vmul.f32 %v2571, %v2587
    %v2590 = vrot.slane %v1320, 4
    %v2592 = vrot.slane %v1330, 3
    %v2594 = vsel %vm934, %v2590, %v2592
    %2596 = vrot.lane.b32.xlu0 %v2589, 80
    %v2597 = vpop.permute.xlu0 %2596
    %v2598 = vsel %vm1339, %v2597, 0
    %2600 = vmatprep.subr.mxu0 0.0
    %2601 = vmatpush1.msra.mxu0 0.0
    %2602 = vmatprep.subr.mxu0 0.0
    %2603 = vmatpush1.msra.mxu0 0.0
    %2604 = vmatprep.subr.mxu0 0.0
    %2605 = vmatpush1.msra.mxu0 0.0
    %2606 = vmatprep.subr.mxu0 0.0
    %2607 = vmatpush1.msra.mxu0 0.0
    %2608 = vmatprep.subr.mxu0 0.0
    %2609 = vmatpush1.msra.mxu0 0.0
    %2610 = vmatprep.subr.mxu0 0.0
    %2611 = vmatpush1.msra.mxu0 0.0
    %2612 = vmatprep.subr.mxu0 0.0
    %2613 = vmatpush1.msra.mxu0 0.0
    %2614 = vmatprep.subr.mxu0 0.0
    %2615 = vmatpush1.msra.mxu0 0.0
    %2616 = vmatprep.subr.mxu0 0.0
    %2617 = vmatpush1.msra.mxu0 0.0
    %2618 = vmatprep.subr.mxu0 0.0
    %2619 = vmatpush1.msra.mxu0 0.0
    %2620 = vmatprep.subr.mxu0 0.0
    %2621 = vmatpush1.msra.mxu0 0.0
    %2622 = vmatprep.subr.mxu0 0.0
    %2623 = vmatpush1.msra.mxu0 0.0
    %2624 = vmatprep.subr.mxu0 0.0
    %2625 = vmatpush1.msra.mxu0 0.0
    %2626 = vmatprep.subr.mxu0 0.0
    %2627 = vmatpush1.msra.mxu0 0.0
    %2628 = vmatprep.subr.mxu0 0.0
    %2629 = vmatpush1.msra.mxu0 %v1334
    %2630 = vmatprep.subr.mxu0 0.0
    %2631 = vmatpush1.msra.mxu0 %v1333
    %2632 = vmatprep.subr.mxu0 0.0
    %2633 = vmatpush2.msra.mxu0 0.0
    %2634 = vmatprep.subr.mxu0 0.0
    %2635 = vmatpush2.msra.mxu0 0.0
    %2636 = vmatprep.subr.mxu0 0.0
    %2637 = vmatpush2.msra.mxu0 0.0
    %2638 = vmatprep.subr.mxu0 0.0
    %2639 = vmatpush2.msra.mxu0 0.0
    %2640 = vmatprep.subr.mxu0 0.0
    %2641 = vmatpush2.msra.mxu0 0.0
    %2642 = vmatprep.subr.mxu0 0.0
    %2643 = vmatpush2.msra.mxu0 0.0
    %2644 = vmatprep.subr.mxu0 0.0
    %2645 = vmatpush2.msra.mxu0 0.0
    %2646 = vmatprep.subr.mxu0 0.0
    %2647 = vmatpush2.msra.mxu0 0.0
    %2648 = vmatprep.subr.mxu0 0.0
    %2649 = vmatpush2.msra.mxu0 0.0
    %2650 = vmatprep.subr.mxu0 0.0
    %2651 = vmatpush2.msra.mxu0 0.0
    %2652 = vmatprep.subr.mxu0 0.0
    %2653 = vmatpush2.msra.mxu0 0.0
    %2654 = vmatprep.subr.mxu0 0.0
    %2655 = vmatpush2.msra.mxu0 0.0
    %2656 = vmatprep.subr.mxu0 0.0
    %2657 = vmatpush2.msra.mxu0 0.0
    %2658 = vmatprep.subr.mxu0 0.0
    %2659 = vmatpush2.msra.mxu0 0.0
    %2660 = vmatprep.subr.mxu0 0.0
    %2661 = vmatpush2.msra.mxu0 0.0
    %2662 = vmatprep.subr.mxu0 0.0
    %2663 = vmatpush2.msra.mxu0 0.0
    %2664 = vmatprep.mubr.f32.mxu0 0.0
    %2665 = vmatmul.mubr.f32.gmra.mxu0 %v2598
    %v2666 = vpop.f32.mrf.mxu0
    %v2667 = vadd.f32 0.0, %v2666
    %v2668 = vpop.f32.mrf.mxu0
    %2669 = vdwg.mxu0
    %v2670 = vadd.f32 %v2594, %v2667
    %v2671 = vxor.u32 %v2670, 2147483648
    %v2672 = vmul.f32 %v2671, 1.442695
    %v2673 = vpow.pop %v2672
    %v2674 = vadd.f32 %v2673, 1.0
    %v2675 = vrcp.pop %v2674
    %v2676 = vmul.f32 1.0, %v2675
    %v2677 = vtanh.pop %v2670
    %v2678 = vmul.f32 %v2676, %v2583
    %2680 = vrot.lane.b32.xlu0 %v2677, 96
    %v2681 = vpop.permute.xlu0 %2680
    %v2683 = vmul.f32 %v2676, %v2681
    %2685 = vrot.lane.b32.xlu0 %v2683, 16
    %v2686 = vpop.permute.xlu0 %2685
    %v2688 = vadd.f32 %v2678, %v2686
    %v2689 = vtanh.pop %v2688
    %2691 = vrot.lane.b32.xlu0 %v2689, 32
    %v2692 = vpop.permute.xlu0 %2691
    %v2694 = vmul.f32 %v2676, %v2692
    %v2695 = vrot.slane %v1320, 5
    %v2697 = vrot.slane %v1330, 4
    %v2699 = vsel %vm934, %v2695, %v2697
    %2701 = vrot.lane.b32.xlu0 %v2694, 80
    %v2702 = vpop.permute.xlu0 %2701
    %v2703 = vsel %vm1339, %v2702, 0
    %2705 = vmatprep.subr.mxu0 0.0
    %2706 = vmatpush1.msra.mxu0 0.0
    %2707 = vmatprep.subr.mxu0 0.0
    %2708 = vmatpush1.msra.mxu0 0.0
    %2709 = vmatprep.subr.mxu0 0.0
    %2710 = vmatpush1.msra.mxu0 0.0
    %2711 = vmatprep.subr.mxu0 0.0
    %2712 = vmatpush1.msra.mxu0 0.0
    %2713 = vmatprep.subr.mxu0 0.0
    %2714 = vmatpush1.msra.mxu0 0.0
    %2715 = vmatprep.subr.mxu0 0.0
    %2716 = vmatpush1.msra.mxu0 0.0
    %2717 = vmatprep.subr.mxu0 0.0
    %2718 = vmatpush1.msra.mxu0 0.0
    %2719 = vmatprep.subr.mxu0 0.0
    %2720 = vmatpush1.msra.mxu0 0.0
    %2721 = vmatprep.subr.mxu0 0.0
    %2722 = vmatpush1.msra.mxu0 0.0
    %2723 = vmatprep.subr.mxu0 0.0
    %2724 = vmatpush1.msra.mxu0 0.0
    %2725 = vmatprep.subr.mxu0 0.0
    %2726 = vmatpush1.msra.mxu0 0.0
    %2727 = vmatprep.subr.mxu0 0.0
    %2728 = vmatpush1.msra.mxu0 0.0
    %2729 = vmatprep.subr.mxu0 0.0
    %2730 = vmatpush1.msra.mxu0 0.0
    %2731 = vmatprep.subr.mxu0 0.0
    %2732 = vmatpush1.msra.mxu0 0.0
    %2733 = vmatprep.subr.mxu0 0.0
    %2734 = vmatpush1.msra.mxu0 %v1334
    %2735 = vmatprep.subr.mxu0 0.0
    %2736 = vmatpush1.msra.mxu0 %v1333
    %2737 = vmatprep.subr.mxu0 0.0
    %2738 = vmatpush2.msra.mxu0 0.0
    %2739 = vmatprep.subr.mxu0 0.0
    %2740 = vmatpush2.msra.mxu0 0.0
    %2741 = vmatprep.subr.mxu0 0.0
    %2742 = vmatpush2.msra.mxu0 0.0
    %2743 = vmatprep.subr.mxu0 0.0
    %2744 = vmatpush2.msra.mxu0 0.0
    %2745 = vmatprep.subr.mxu0 0.0
    %2746 = vmatpush2.msra.mxu0 0.0
    %2747 = vmatprep.subr.mxu0 0.0
    %2748 = vmatpush2.msra.mxu0 0.0
    %2749 = vmatprep.subr.mxu0 0.0
    %2750 = vmatpush2.msra.mxu0 0.0
    %2751 = vmatprep.subr.mxu0 0.0
    %2752 = vmatpush2.msra.mxu0 0.0
    %2753 = vmatprep.subr.mxu0 0.0
    %2754 = vmatpush2.msra.mxu0 0.0
    %2755 = vmatprep.subr.mxu0 0.0
    %2756 = vmatpush2.msra.mxu0 0.0
    %2757 = vmatprep.subr.mxu0 0.0
    %2758 = vmatpush2.msra.mxu0 0.0
    %2759 = vmatprep.subr.mxu0 0.0
    %2760 = vmatpush2.msra.mxu0 0.0
    %2761 = vmatprep.subr.mxu0 0.0
    %2762 = vmatpush2.msra.mxu0 0.0
    %2763 = vmatprep.subr.mxu0 0.0
    %2764 = vmatpush2.msra.mxu0 0.0
    %2765 = vmatprep.subr.mxu0 0.0
    %2766 = vmatpush2.msra.mxu0 0.0
    %2767 = vmatprep.subr.mxu0 0.0
    %2768 = vmatpush2.msra.mxu0 0.0
    %2769 = vmatprep.mubr.f32.mxu0 0.0
    %2770 = vmatmul.mubr.f32.gmra.mxu0 %v2703
    %v2771 = vpop.f32.mrf.mxu0
    %v2772 = vadd.f32 0.0, %v2771
    %v2773 = vpop.f32.mrf.mxu0
    %2774 = vdwg.mxu0
    %v2775 = vadd.f32 %v2699, %v2772
    %v2776 = vxor.u32 %v2775, 2147483648
    %v2777 = vmul.f32 %v2776, 1.442695
    %v2778 = vpow.pop %v2777
    %v2779 = vadd.f32 %v2778, 1.0
    %v2780 = vrcp.pop %v2779
    %v2781 = vmul.f32 1.0, %v2780
    %v2782 = vtanh.pop %v2775
    %v2783 = vmul.f32 %v2781, %v2688
    %2785 = vrot.lane.b32.xlu0 %v2782, 96
    %v2786 = vpop.permute.xlu0 %2785
    %v2788 = vmul.f32 %v2781, %v2786
    %2790 = vrot.lane.b32.xlu0 %v2788, 16
    %v2791 = vpop.permute.xlu0 %2790
    %v2793 = vadd.f32 %v2783, %v2791
    %v2794 = vtanh.pop %v2793
    %2796 = vrot.lane.b32.xlu0 %v2794, 32
    %v2797 = vpop.permute.xlu0 %2796
    %v2799 = vmul.f32 %v2781, %v2797
    %v2800 = vrot.slane %v1320, 6
    %v2802 = vrot.slane %v1330, 5
    %v2804 = vsel %vm934, %v2800, %v2802
    %2806 = vrot.lane.b32.xlu0 %v2799, 80
    %v2807 = vpop.permute.xlu0 %2806
    %v2808 = vsel %vm1339, %v2807, 0
    %2810 = vmatprep.subr.mxu0 0.0
    %2811 = vmatpush1.msra.mxu0 0.0
    %2812 = vmatprep.subr.mxu0 0.0
    %2813 = vmatpush1.msra.mxu0 0.0
    %2814 = vmatprep.subr.mxu0 0.0
    %2815 = vmatpush1.msra.mxu0 0.0
    %2816 = vmatprep.subr.mxu0 0.0
    %2817 = vmatpush1.msra.mxu0 0.0
    %2818 = vmatprep.subr.mxu0 0.0
    %2819 = vmatpush1.msra.mxu0 0.0
    %2820 = vmatprep.subr.mxu0 0.0
    %2821 = vmatpush1.msra.mxu0 0.0
    %2822 = vmatprep.subr.mxu0 0.0
    %2823 = vmatpush1.msra.mxu0 0.0
    %2824 = vmatprep.subr.mxu0 0.0
    %2825 = vmatpush1.msra.mxu0 0.0
    %2826 = vmatprep.subr.mxu0 0.0
    %2827 = vmatpush1.msra.mxu0 0.0
    %2828 = vmatprep.subr.mxu0 0.0
    %2829 = vmatpush1.msra.mxu0 0.0
    %2830 = vmatprep.subr.mxu0 0.0
    %2831 = vmatpush1.msra.mxu0 0.0
    %2832 = vmatprep.subr.mxu0 0.0
    %2833 = vmatpush1.msra.mxu0 0.0
    %2834 = vmatprep.subr.mxu0 0.0
    %2835 = vmatpush1.msra.mxu0 0.0
    %2836 = vmatprep.subr.mxu0 0.0
    %2837 = vmatpush1.msra.mxu0 0.0
    %2838 = vmatprep.subr.mxu0 0.0
    %2839 = vmatpush1.msra.mxu0 %v1334
    %2840 = vmatprep.subr.mxu0 0.0
    %2841 = vmatpush1.msra.mxu0 %v1333
    %2842 = vmatprep.subr.mxu0 0.0
    %2843 = vmatpush2.msra.mxu0 0.0
    %2844 = vmatprep.subr.mxu0 0.0
    %2845 = vmatpush2.msra.mxu0 0.0
    %2846 = vmatprep.subr.mxu0 0.0
    %2847 = vmatpush2.msra.mxu0 0.0
    %2848 = vmatprep.subr.mxu0 0.0
    %2849 = vmatpush2.msra.mxu0 0.0
    %2850 = vmatprep.subr.mxu0 0.0
    %2851 = vmatpush2.msra.mxu0 0.0
    %2852 = vmatprep.subr.mxu0 0.0
    %2853 = vmatpush2.msra.mxu0 0.0
    %2854 = vmatprep.subr.mxu0 0.0
    %2855 = vmatpush2.msra.mxu0 0.0
    %2856 = vmatprep.subr.mxu0 0.0
    %2857 = vmatpush2.msra.mxu0 0.0
    %2858 = vmatprep.subr.mxu0 0.0
    %2859 = vmatpush2.msra.mxu0 0.0
    %2860 = vmatprep.subr.mxu0 0.0
    %2861 = vmatpush2.msra.mxu0 0.0
    %2862 = vmatprep.subr.mxu0 0.0
    %2863 = vmatpush2.msra.mxu0 0.0
    %2864 = vmatprep.subr.mxu0 0.0
    %2865 = vmatpush2.msra.mxu0 0.0
    %2866 = vmatprep.subr.mxu0 0.0
    %2867 = vmatpush2.msra.mxu0 0.0
    %2868 = vmatprep.subr.mxu0 0.0
    %2869 = vmatpush2.msra.mxu0 0.0
    %2870 = vmatprep.subr.mxu0 0.0
    %2871 = vmatpush2.msra.mxu0 0.0
    %2872 = vmatprep.subr.mxu0 0.0
    %2873 = vmatpush2.msra.mxu0 0.0
    %2874 = vmatprep.mubr.f32.mxu0 0.0
    %2875 = vmatmul.mubr.f32.gmra.mxu0 %v2808
    %v2876 = vpop.f32.mrf.mxu0
    %v2877 = vadd.f32 0.0, %v2876
    %v2878 = vpop.f32.mrf.mxu0
    %2879 = vdwg.mxu0
    %v2880 = vadd.f32 %v2804, %v2877
    %v2881 = vxor.u32 %v2880, 2147483648
    %v2882 = vmul.f32 %v2881, 1.442695
    %v2883 = vpow.pop %v2882
    %v2884 = vadd.f32 %v2883, 1.0
    %v2885 = vrcp.pop %v2884
    %v2886 = vmul.f32 1.0, %v2885
    %v2887 = vtanh.pop %v2880
    %v2888 = vmul.f32 %v2886, %v2793
    %2890 = vrot.lane.b32.xlu0 %v2887, 96
    %v2891 = vpop.permute.xlu0 %2890
    %v2893 = vmul.f32 %v2886, %v2891
    %2895 = vrot.lane.b32.xlu0 %v2893, 16
    %v2896 = vpop.permute.xlu0 %2895
    %v2898 = vadd.f32 %v2888, %v2896
    %v2899 = vtanh.pop %v2898
    %2901 = vrot.lane.b32.xlu0 %v2899, 32
    %v2902 = vpop.permute.xlu0 %2901
    %v2904 = vmul.f32 %v2886, %v2902
    %v2905 = vrot.slane %v1320, 7
    %v2907 = vrot.slane %v1330, 6
    %v2909 = vsel %vm934, %v2905, %v2907
    %2911 = vrot.lane.b32.xlu0 %v2904, 80
    %v2912 = vpop.permute.xlu0 %2911
    %v2913 = vsel %vm1339, %v2912, 0
    %2915 = vmatprep.subr.mxu0 0.0
    %2916 = vmatpush1.msra.mxu0 0.0
    %2917 = vmatprep.subr.mxu0 0.0
    %2918 = vmatpush1.msra.mxu0 0.0
    %2919 = vmatprep.subr.mxu0 0.0
    %2920 = vmatpush1.msra.mxu0 0.0
    %2921 = vmatprep.subr.mxu0 0.0
    %2922 = vmatpush1.msra.mxu0 0.0
    %2923 = vmatprep.subr.mxu0 0.0
    %2924 = vmatpush1.msra.mxu0 0.0
    %2925 = vmatprep.subr.mxu0 0.0
    %2926 = vmatpush1.msra.mxu0 0.0
    %2927 = vmatprep.subr.mxu0 0.0
    %2928 = vmatpush1.msra.mxu0 0.0
    %2929 = vmatprep.subr.mxu0 0.0
    %2930 = vmatpush1.msra.mxu0 0.0
    %2931 = vmatprep.subr.mxu0 0.0
    %2932 = vmatpush1.msra.mxu0 0.0
    %2933 = vmatprep.subr.mxu0 0.0
    %2934 = vmatpush1.msra.mxu0 0.0
    %2935 = vmatprep.subr.mxu0 0.0
    %2936 = vmatpush1.msra.mxu0 0.0
    %2937 = vmatprep.subr.mxu0 0.0
    %2938 = vmatpush1.msra.mxu0 0.0
    %2939 = vmatprep.subr.mxu0 0.0
    %2940 = vmatpush1.msra.mxu0 0.0
    %2941 = vmatprep.subr.mxu0 0.0
    %2942 = vmatpush1.msra.mxu0 0.0
    %2943 = vmatprep.subr.mxu0 0.0
    %2944 = vmatpush1.msra.mxu0 %v1334
    %2945 = vmatprep.subr.mxu0 0.0
    %2946 = vmatpush1.msra.mxu0 %v1333
    %2947 = vmatprep.subr.mxu0 0.0
    %2948 = vmatpush2.msra.mxu0 0.0
    %2949 = vmatprep.subr.mxu0 0.0
    %2950 = vmatpush2.msra.mxu0 0.0
    %2951 = vmatprep.subr.mxu0 0.0
    %2952 = vmatpush2.msra.mxu0 0.0
    %2953 = vmatprep.subr.mxu0 0.0
    %2954 = vmatpush2.msra.mxu0 0.0
    %2955 = vmatprep.subr.mxu0 0.0
    %2956 = vmatpush2.msra.mxu0 0.0
    %2957 = vmatprep.subr.mxu0 0.0
    %2958 = vmatpush2.msra.mxu0 0.0
    %2959 = vmatprep.subr.mxu0 0.0
    %2960 = vmatpush2.msra.mxu0 0.0
    %2961 = vmatprep.subr.mxu0 0.0
    %2962 = vmatpush2.msra.mxu0 0.0
    %2963 = vmatprep.subr.mxu0 0.0
    %2964 = vmatpush2.msra.mxu0 0.0
    %2965 = vmatprep.subr.mxu0 0.0
    %2966 = vmatpush2.msra.mxu0 0.0
    %2967 = vmatprep.subr.mxu0 0.0
    %2968 = vmatpush2.msra.mxu0 0.0
    %2969 = vmatprep.subr.mxu0 0.0
    %2970 = vmatpush2.msra.mxu0 0.0
    %2971 = vmatprep.subr.mxu0 0.0
    %2972 = vmatpush2.msra.mxu0 0.0
    %2973 = vmatprep.subr.mxu0 0.0
    %2974 = vmatpush2.msra.mxu0 0.0
    %2975 = vmatprep.subr.mxu0 0.0
    %2976 = vmatpush2.msra.mxu0 0.0
    %2977 = vmatprep.subr.mxu0 0.0
    %2978 = vmatpush2.msra.mxu0 0.0
    %2979 = vmatprep.mubr.f32.mxu0 0.0
    %2980 = vmatmul.mubr.f32.gmra.mxu0 %v2913
    %v2981 = vpop.f32.mrf.mxu0
    %v2982 = vadd.f32 0.0, %v2981
    %v2983 = vpop.f32.mrf.mxu0
    %2984 = vdwg.mxu0
    %v2985 = vadd.f32 %v2909, %v2982
    %v2986 = vxor.u32 %v2985, 2147483648
    %v2987 = vmul.f32 %v2986, 1.442695
    %v2988 = vpow.pop %v2987
    %v2989 = vadd.f32 %v2988, 1.0
    %v2990 = vrcp.pop %v2989
    %v2991 = vmul.f32 1.0, %v2990
    %v2992 = vtanh.pop %v2985
    %v2993 = vmul.f32 %v2991, %v2898
    %2995 = vrot.lane.b32.xlu0 %v2992, 96
    %v2996 = vpop.permute.xlu0 %2995
    %v2998 = vmul.f32 %v2991, %v2996
    %3000 = vrot.lane.b32.xlu0 %v2998, 16
    %v3001 = vpop.permute.xlu0 %3000
    %v3003 = vadd.f32 %v2993, %v3001
    %v3004 = vtanh.pop %v3003
    %3006 = vrot.lane.b32.xlu0 %v3004, 32
    %v3007 = vpop.permute.xlu0 %3006
    %v3009 = vmul.f32 %v2991, %v3007
    %v3010 = vrot.slane %v1541, 7
    %v3012 = vrot.slane %v1646, 6
    %v3014 = vrot.slane %v1751, 5
    %v3016 = vrot.slane %v1856, 4
    %v3018 = vrot.slane %v1961, 3
    %v3020 = vrot.slane %v2066, 2
    %v3022 = vrot.slane %v2171, 1
    %v3024 = vrot.slane %v2379, 7
    %v3026 = vrot.slane %v2484, 6
    %v3028 = vrot.slane %v2589, 5
    %v3030 = vrot.slane %v2694, 4
    %v3032 = vrot.slane %v2799, 3
    %v3034 = vrot.slane %v2904, 2
    %v3037 = vrot.slane %v3009, 1
    %v3039 = vsel %vm934, %v1437, %v3010
    %v3040 = vsel %vm251, %v3039, %v3012
    %v3041 = vsel %vm186, %v3040, %v3014
    %v3042 = vsel %vm87, %v3041, %v3016
    %v3043 = vsel %vm221, %v3042, %v3018
    %v3044 = vsel %vm209, %v3043, %v3020
    %v3045 = vsel %vm197, %v3044, %v3022
    %v3046 = vsel %vm934, %v2275, %v3024
    %v3047 = vsel %vm251, %v3046, %v3026
    %v3048 = vsel %vm186, %v3047, %v3028
    %v3049 = vsel %vm87, %v3048, %v3030
    %v3050 = vsel %vm221, %v3049, %v3032
    %v3051 = vsel %vm209, %v3050, %v3034
    %v3052 = vsel %vm197, %v3051, %v3037
    %3055 = vrot.lane.b32.xlu0 %v3045, 80
    %v3056 = vpop.permute.xlu0 %3055
    %3057 = vrot.lane.b32.xlu0 %v3052, 80
    %v3058 = vpop.permute.xlu0 %3057
    %3061 = vst.msk [vmem:[#allocation2] sm:$0xff] %vm1339, %v3056
    %3062 = vst.msk [vmem:[#allocation2 + $0x8] sm:$0xff] %vm1339, %v3058
    %v3063 = vrot.slane %v1437, 1
    %v3065 = vrot.slane %v1646, 7
    %v3067 = vrot.slane %v1751, 6
    %v3069 = vrot.slane %v1856, 5
    %v3071 = vrot.slane %v1961, 4
    %v3073 = vrot.slane %v2066, 3
    %v3075 = vrot.slane %v2171, 2
    %v3077 = vrot.slane %v2275, 1
    %v3079 = vrot.slane %v2484, 7
    %v3081 = vrot.slane %v2589, 6
    %v3083 = vrot.slane %v2694, 5
    %v3085 = vrot.slane %v2799, 4
    %v3087 = vrot.slane %v2904, 3
    %v3089 = vrot.slane %v3009, 2
    %v3091 = vsel %vm934, %v3063, %v1541
    %v3092 = vsel %vm251, %v3091, %v3065
    %v3093 = vsel %vm186, %v3092, %v3067
    %v3094 = vsel %vm87, %v3093, %v3069
    %v3095 = vsel %vm221, %v3094, %v3071
    %v3096 = vsel %vm209, %v3095, %v3073
    %v3097 = vsel %vm197, %v3096, %v3075
    %v3098 = vsel %vm934, %v3077, %v2379
    %v3099 = vsel %vm251, %v3098, %v3079
    %v3100 = vsel %vm186, %v3099, %v3081
    %v3101 = vsel %vm87, %v3100, %v3083
    %v3102 = vsel %vm221, %v3101, %v3085
    %v3103 = vsel %vm209, %v3102, %v3087
    %v3104 = vsel %vm197, %v3103, %v3089
    %3107 = vrot.lane.b32.xlu0 %v3097, 80
    %v3108 = vpop.permute.xlu0 %3107
    %3109 = vrot.lane.b32.xlu0 %v3104, 80
    %v3110 = vpop.permute.xlu0 %3109
    %s3113 = scalar_lea.vmem [#allocation2], 16
    %3114 = vst.msk [vmem:[%s3113] sm:$0xff] %vm1339, %v3108
    %3115 = vst.msk [vmem:[%s3113 + $0x8] sm:$0xff] %vm1339, %v3110
    // Predicated region
    $region74: #{tpu_custom_call.1} parent=1 // pred_check
      _
    $region75: #{tpu_custom_call.1} parent=1 // pred_check_branch
      %3117 = sbr.rel (0) target = $region77
    $region76: #{tpu_custom_call.1} parent=1 // pred_region
      %s3119 = ssub.s32 512, 512
      %3120 = vsyncadd [#allocation3], %s3119
      %s3121 = sshll.u32 [#allocation2], 4
      %s3122 = int_to_ptr.vmem [resolvable:$true] %s3121
      %3127 = dma.vmem_to_hbm [thread:$0]  %s3122, 512, %s18, [#allocation3], 128, 128, 8
    $region77: #{tpu_custom_call.1} parent=1 // pred_fallthru
      _
    // Predicated region
    $region78: #{tpu_custom_call.1} parent=1 // pred_check
      _
    $region79: #{tpu_custom_call.1} parent=1 // pred_check_branch
      %3129 = sbr.rel (0) target = $region81
    $region80: #{tpu_custom_call.1} parent=1 // pred_region
      %3130 = dma.done [#allocation3], 512
    $region81: #{tpu_custom_call.1} parent=1 // pred_fallthru
      _
    %3131 = vsyncpa [#allocation3], 1

</llo_original>
